<compile_context>
chip_gen: v5e
topology: v5e:2x2
jax: 0.10.0
libtpu: 0.0.40
codegen_flags: <defaults>
</compile_context>

<pallas_src>
import functools

import jax
import jax.numpy as jnp
from jax.experimental import pallas as pl
from jax.experimental.pallas import tpu as pltpu


# ----------------------------------------------------------------------------
# helpers
# ----------------------------------------------------------------------------
def _largest_divisor_leq(n, target):
    c = min(n, target)
    while n % c:
        c -= 1
    return c


def _row_block(n, target=512):
    """Row-tile size for the projection / head GEMMs (prefer 256-multiples)."""
    if n <= target:
        return n
    for step in (256, 128, 8):
        c = (target // step) * step
        while c >= step:
            if n % c == 0:
                return c
            c -= step
    return _largest_divisor_leq(n, target)


def _gate_col_block(g, target=4096):
    """Column tile over the 3H gate dim of the projection (v7x VMEM relief)."""
    if g <= target:
        return g
    c = (target // 128) * 128
    while c >= 128:
        if g % c == 0:
            return c
        c -= 128
    return _largest_divisor_leq(g, target)


@functools.lru_cache(maxsize=None)
def _vmem_limit_bytes():
    # Explicit scoped-VMEM budget: the defaults (16 MiB v5e / 32 MiB v6e,v7x) would
    # force tiny tiles at production shapes.  Use ~3/4 of physical VMEM, <= 100 MiB.
    try:
        cap = int(pltpu.get_tpu_info().vmem_capacity_bytes)  # 128 MiB v5e/v6e, 64 MiB v7x
    except Exception:
        cap = 128 * 1024 * 1024
    return min(cap * 3 // 4, 100 * 1024 * 1024)


# ----------------------------------------------------------------------------
# 1) Hoisted input projection: Gx[d] = x @ Wih[d] + b_gate[d]   (both directions)
# ----------------------------------------------------------------------------
def proj_kernel(x_ref, w_ref, b_ref, o_ref):
    # bf16 operands on the MXU, f32 accumulate, bias add in f32, store bf16.
    o_ref[...] = (
        jnp.dot(x_ref[...].astype(w_ref.dtype), w_ref[...],
                preferred_element_type=jnp.float32)
        + b_ref[...]
    ).astype(o_ref.dtype)


def input_projection(x_flat, wih_t, b_gate):
    """x_flat: (N, D) f32, wih_t: (2, D, 3H) bf16, b_gate: (2, 1, 3H) f32 -> (2, N, 3H) bf16."""
    N, D = x_flat.shape
    G = wih_t.shape[-1]  # 3H
    rb = _row_block(N)
    gb = _gate_col_block(G)
    return pl.pallas_call(
        proj_kernel,
        out_shape=jax.ShapeDtypeStruct((2, N, G), wih_t.dtype),
        grid_spec=pltpu.PrefetchScalarGridSpec(
            num_scalar_prefetch=0,
            # rows innermost so the (D, gb) weight column-block stays resident while
            # all row tiles stream past it.
            grid=(2, G // gb, N // rb),
            in_specs=[
                pl.BlockSpec((rb, D), lambda d, c, r: (r, 0)),
                pl.BlockSpec((None, D, gb), lambda d, c, r: (d, 0, c),
                             pipeline_mode=pl.Buffered(1)),
                pl.BlockSpec((None, 1, gb), lambda d, c, r: (d, 0, c),
                             pipeline_mode=pl.Buffered(1)),
            ],
            out_specs=pl.BlockSpec((None, rb, gb), lambda d, c, r: (d, r, c)),
        ),
        compiler_params=pltpu.CompilerParams(
            dimension_semantics=("parallel", "parallel", "parallel"),
            vmem_limit_bytes=_vmem_limit_bytes(),
        ),
    )(x_flat, wih_t, b_gate)


# ----------------------------------------------------------------------------
# 2) GRU recurrence: only the fused hidden-gate matmul remains in the serial loop
# ----------------------------------------------------------------------------
def gru_kernel(gx_ref, whh_ref, bhn_ref, out_ref, h_ref, *, chunk, hidden):
    d = pl.program_id(0)  # 0 = forward, 1 = backward

    @pl.when(pl.program_id(1) == 0)
    def _():
        h_ref[...] = jnp.zeros_like(h_ref)  # PyTorch default h0 = 0

    whh = whh_ref[...]  # (H, 3H) bf16 — loop-invariant, loaded once
    bhn = bhn_ref[...]  # (1, H)  f32
    h2 = 2 * hidden

    def cell(gx, h):
        # gx: (B, 3H) bf16 precomputed input gates, h: (B, H) f32 carry.
        gh = jnp.dot(h.astype(whh.dtype), whh, preferred_element_type=jnp.float32)
        rz = jax.nn.sigmoid(gx[:, :h2].astype(jnp.float32) + gh[:, :h2])
        r = rz[:, :hidden]
        z = rz[:, hidden:]
        n = jnp.tanh(gx[:, h2:].astype(jnp.float32) + r * (gh[:, h2:] + bhn))
        return (1.0 - z) * n + z * h

    def run(order):
        h = h_ref[...]
        for s in order:  # static Python indices -> zero-cost ref views
            h = cell(gx_ref[s], h)
            out_ref[s] = h.astype(out_ref.dtype)
        h_ref[...] = h

    # Direction-specialised static walk (no dynamic in-chunk index arithmetic
    # on the serial critical path).
    @pl.when(d == 0)
    def _():
        run(range(chunk))

    @pl.when(d == 1)
    def _():
        run(range(chunk - 1, -1, -1))


def gru_recurrence(gx, whh_t, bhn):
    """gx: (2, T, B, 3H) bf16 time-major gate pre-activations -> h: (2, T, B, H) f32."""
    _, T, B, G = gx.shape
    H = G // 3
    chunk = _largest_divisor_leq(T, 16)  # moderate unroll: vreg pressure vs LLO visibility
    n_chunks = T // chunk
    kernel = functools.partial(gru_kernel, chunk=chunk, hidden=H)

    def t_idx(d, c):
        # forward visits chunks left->right, backward right->left
        return (1 - d) * c + d * (n_chunks - 1 - c)

    # NOTE: the hidden-state carry in VMEM scratch requires the direction axis to stay
    # OUTERMOST and the time-chunk axis to be iterated in order -> it must remain
    # "arbitrary"; do not reorder this grid or mark the chunk axis "parallel".
    return pl.pallas_call(
        kernel,
        out_shape=jax.ShapeDtypeStruct((2, T, B, H), jnp.float32),
        grid_spec=pltpu.PrefetchScalarGridSpec(
            num_scalar_prefetch=0,
            grid=(2, n_chunks),
            in_specs=[
                pl.BlockSpec((None, chunk, B, G), lambda d, c: (d, t_idx(d, c), 0, 0)),
                pl.BlockSpec((None, H, G), lambda d, c: (d, 0, 0),
                             pipeline_mode=pl.Buffered(1)),
                pl.BlockSpec((None, 1, H), lambda d, c: (d, 0, 0),
                             pipeline_mode=pl.Buffered(1)),
            ],
            out_specs=pl.BlockSpec(
                (None, chunk, B, H), lambda d, c: (d, t_idx(d, c), 0, 0)
            ),
            scratch_shapes=[pltpu.VMEM((B, H), jnp.float32)],
        ),
        compiler_params=pltpu.CompilerParams(
            # direction axis is independent -> 2-way TensorCore split on v7x;
            # time-chunk axis carries the hidden state -> strictly sequential.
            dimension_semantics=("parallel", "arbitrary"),
            vmem_limit_bytes=_vmem_limit_bytes(),
        ),
    )(gx, whh_t, bhn)


# ----------------------------------------------------------------------------
# 3) Fused head: concat + leaky_relu + Linear, tiled over rows
# ----------------------------------------------------------------------------
def head_kernel(h_ref, w_ref, b_ref, o_ref):
    hf = h_ref[0]  # (rows, H) forward hidden states, f32
    hb = h_ref[1]  # (rows, H) backward hidden states
    hf = jnp.where(hf > 0, hf, 0.01 * hf).astype(w_ref.dtype)  # leaky_relu, slope 0.01
    hb = jnp.where(hb > 0, hb, 0.01 * hb).astype(w_ref.dtype)
    y = (
        jnp.dot(hf, w_ref[0], preferred_element_type=jnp.float32)
        + jnp.dot(hb, w_ref[1], preferred_element_type=jnp.float32)
        + b_ref[...]
    )
    o_ref[...] = y.astype(o_ref.dtype)


def linear_head(h_flat, w_lin_t, b_lin):
    """h_flat: (2, N, H) f32, w_lin_t: (2, H, D) bf16, b_lin: (1, D) f32 -> (N, D) f32."""
    _, N, H = h_flat.shape
    D = w_lin_t.shape[-1]
    rb = _row_block(N)
    return pl.pallas_call(
        head_kernel,
        out_shape=jax.ShapeDtypeStruct((N, D), jnp.float32),
        grid_spec=pltpu.PrefetchScalarGridSpec(
            num_scalar_prefetch=0,
            grid=(N // rb,),
            in_specs=[
                pl.BlockSpec((2, rb, H), lambda r: (0, r, 0)),
                pl.BlockSpec((2, H, D), lambda r: (0, 0, 0),
                             pipeline_mode=pl.Buffered(1)),
                pl.BlockSpec((1, D), lambda r: (0, 0),
                             pipeline_mode=pl.Buffered(1)),
            ],
            out_specs=pl.BlockSpec((rb, D), lambda r: (r, 0)),
        ),
        compiler_params=pltpu.CompilerParams(
            dimension_semantics=("parallel",),
            vmem_limit_bytes=_vmem_limit_bytes(),
        ),
    )(h_flat, w_lin_t, b_lin)


# ----------------------------------------------------------------------------
# Full FFN forward (dropout p=0 -> identity)
# ----------------------------------------------------------------------------
@jax.jit
def ffn_forward(x, params):
    B, T, D = x.shape
    H = params["whh_t"].shape[1]
    # time-major inside the kernels; these two D-wide transposes are the only
    # layout shuffles left in XLA.
    xt = jnp.transpose(x, (1, 0, 2)).reshape(T * B, D)
    gx = input_projection(xt, params["wih_t"], params["b_gate"])  # (2, T*B, 3H) bf16
    gx = gx.reshape(2, T, B, 3 * H)
    h = gru_recurrence(gx, params["whh_t"], params["bhn"])        # (2, T, B, H) f32
    y = linear_head(h.reshape(2, T * B, H), params["w_lin_t"], params["b_lin"])
    return jnp.transpose(y.reshape(T, B, D), (1, 0, 2))           # (B, T, D)


# ----------------------------------------------------------------------------
# Parameters: torch-style raw params + one-time layout prep (transpose, bias fold, bf16)
# ----------------------------------------------------------------------------
def init_raw_params(key, d_model):
    H = 2 * d_model           # GRU hidden size
    F_in = 2 * H              # bidirectional concat -> linear input
    k_gru = 1.0 / jnp.sqrt(H)
    k_lin = 1.0 / jnp.sqrt(F_in)
    keys = jax.random.split(key, 10)
    u = lambda k, shape, a: jax.random.uniform(k, shape, jnp.float32, -a, a)
    return {
        # torch nn.GRU layout, gate order (r, z, n) stacked along rows
        "weight_ih_f": u(keys[0], (3 * H, d_model), k_gru),
        "weight_hh_f": u(keys[1], (3 * H, H), k_gru),
        "bias_ih_f": u(keys[2], (3 * H,), k_gru),
        "bias_hh_f": u(keys[3], (3 * H,), k_gru),
        "weight_ih_b": u(keys[4], (3 * H, d_model), k_gru),
        "weight_hh_b": u(keys[5], (3 * H, H), k_gru),
        "bias_ih_b": u(keys[6], (3 * H,), k_gru),
        "bias_hh_b": u(keys[7], (3 * H,), k_gru),
        # torch nn.Linear(4*d_model, d_model)
        "w_lin": u(keys[8], (d_model, F_in), k_lin),
        "b_lin": u(keys[9], (d_model,), k_lin),
    }


def prepare_params(raw):
    H = raw["weight_hh_f"].shape[-1]

    def per_dir(sfx):
        wih_t = raw[f"weight_ih_{sfx}"].T              # (D, 3H)
        whh_t = raw[f"weight_hh_{sfx}"].T              # (H, 3H)
        bih = raw[f"bias_ih_{sfx}"]
        bhh = raw[f"bias_hh_{sfx}"]
        # fold bih (all gates) + bhh's r/z parts into the input projection bias
        b_gate = bih + jnp.concatenate([bhh[: 2 * H], jnp.zeros((H,), bhh.dtype)])
        bhn = bhh[2 * H :]                             # only n's hidden bias stays
        return wih_t, whh_t, b_gate[None, :], bhn[None, :]

    wf, hf, bf, nf = per_dir("f")
    wb, hb, bb, nb = per_dir("b")
    w_lin_t = raw["w_lin"].T                           # (2H, D)
    return {
        # weights stored bf16 (f32 accumulation happens on the MXU), biases stay f32
        "wih_t": jnp.stack([wf, wb]).astype(jnp.bfloat16),            # (2, D, 3H)
        "whh_t": jnp.stack([hf, hb]).astype(jnp.bfloat16),            # (2, H, 3H)
        "b_gate": jnp.stack([bf, bb]),                                 # (2, 1, 3H) f32
        "bhn": jnp.stack([nf, nb]),                                    # (2, 1, H)  f32
        "w_lin_t": jnp.stack([w_lin_t[:H], w_lin_t[H:]]).astype(jnp.bfloat16),  # (2, H, D)
        "b_lin": raw["b_lin"][None, :],                                # (1, D) f32
    }


# ----------------------------------------------------------------------------
# Pure-JAX reference (lax.scan, all-f32) for numerical validation
# ----------------------------------------------------------------------------
def ffn_reference(x, raw):
    B, T, D = x.shape
    H = raw["weight_hh_f"].shape[-1]
    xt = jnp.transpose(x, (1, 0, 2))  # (T, B, D)

    def run(sfx, xs):
        wih, whh = raw[f"weight_ih_{sfx}"], raw[f"weight_hh_{sfx}"]
        bih, bhh = raw[f"bias_ih_{sfx}"], raw[f"bias_hh_{sfx}"]

        def cell(h, x_t):
            gi = x_t @ wih.T + bih
            gh = h @ whh.T + bhh
            ir, iz, inn = jnp.split(gi, 3, -1)
            hr, hz, hn = jnp.split(gh, 3, -1)
            r = jax.nn.sigmoid(ir + hr)
            z = jax.nn.sigmoid(iz + hz)
            n = jnp.tanh(inn + r * hn)
            h_new = (1.0 - z) * n + z * h
            return h_new, h_new

        _, ys = jax.lax.scan(cell, jnp.zeros((B, H), x.dtype), xs)
        return ys  # (T, B, H)

    h_fwd = run("f", xt)
    h_bwd = run("b", xt[::-1])[::-1]
    g = jnp.concatenate([h_fwd, h_bwd], axis=-1)       # (T, B, 2H)
    g = jnp.where(g > 0, g, 0.01 * g)
    y = g @ raw["w_lin"].T + raw["b_lin"]
    return jnp.transpose(y, (1, 0, 2))


if __name__ == "__main__":
    B, T, D = 2, 8, 16  # batch, seq len, d_model  (GRU hidden = 2*D = 32)

    key = jax.random.PRNGKey(0)
    k_x, k_p = jax.random.split(key)
    x = jax.random.normal(k_x, (B, T, D), jnp.float32)
    raw = init_raw_params(k_p, D)
    params = prepare_params(raw)

    out = ffn_forward(x, params)
    jax.block_until_ready(out)
    assert out.shape == (B, T, D), out.shape

    ref = ffn_reference(x, raw)
    err = float(jnp.max(jnp.abs(out - ref)))
    # bf16-storage tolerance (weights + gx are bf16; an all-f32 path would be ~1e-4).
    assert err < 3e-2, f"mismatch vs reference: max abs err {err}"
    print("KERNEL_OK")
</pallas_src>

<mosaic_0001>
module attributes {stable_mosaic.version = 11 : i64} {
  func.func @proj_kernel(%arg0: i32, %arg1: i32, %arg2: i32, %arg3: memref<16x16xf32, #tpu.memory_space<vmem>>, %arg4: memref<1x16x96xbf16, #tpu.memory_space<vmem>>, %arg5: memref<1x1x96xf32, #tpu.memory_space<vmem>>, %arg6: memref<1x16x96xbf16, #tpu.memory_space<vmem>>) attributes {dimension_semantics = [#tpu.dimension_semantics<parallel>, #tpu.dimension_semantics<parallel>, #tpu.dimension_semantics<parallel>], iteration_bounds = array<i64: 2, 1, 1>, scalar_prefetch = 0 : i64, scratch_operands = 0 : i64, tpu.core_type = #tpu.core_type<tc>, window_params = [{transform_indices = @transform_0, window_bounds = array<i64: 16, 16>}, {pipeline_mode = #tpu.pipeline_mode<synchronous>, transform_indices = @transform_1, window_bounds = array<i64: 1, 16, 96>}, {pipeline_mode = #tpu.pipeline_mode<synchronous>, transform_indices = @transform_2, window_bounds = array<i64: 1, 1, 96>}, {transform_indices = @transform_3, window_bounds = array<i64: 1, 16, 96>}]} {
    %c0 = arith.constant 0 : index
    %c0_0 = arith.constant 0 : index
    %0 = vector.load %arg3[%c0, %c0_0] : memref<16x16xf32, #tpu.memory_space<vmem>>, vector<16x16xf32>
    %1 = arith.truncf %0 : vector<16x16xf32> to vector<16x16xbf16>
    %c0_1 = arith.constant 0 : index
    %c0_2 = arith.constant 0 : index
    %c0_3 = arith.constant 0 : index
    %2 = vector.load %arg4[%c0_1, %c0_2, %c0_3] : memref<1x16x96xbf16, #tpu.memory_space<vmem>>, vector<1x16x96xbf16>
    %3 = vector.shape_cast %2 : vector<1x16x96xbf16> to vector<16x96xbf16>
    %cst = arith.constant dense<0.000000e+00> : vector<16x96xf32>
    %4 = tpu.matmul %1, %3, %cst {dimension_numbers = #tpu.dot_dimension_numbers<[1], [0], [0], [1], [0, 0, 1, 1], [], []>} : vector<16x16xbf16>, vector<16x96xbf16>, vector<16x96xf32> -> vector<16x96xf32>
    %c0_4 = arith.constant 0 : index
    %c0_5 = arith.constant 0 : index
    %c0_6 = arith.constant 0 : index
    %5 = vector.load %arg5[%c0_4, %c0_5, %c0_6] : memref<1x1x96xf32, #tpu.memory_space<vmem>>, vector<1x1x96xf32>
    %6 = vector.shape_cast %5 : vector<1x1x96xf32> to vector<1x96xf32>
    %7 = vector.broadcast %6 : vector<1x96xf32> to vector<16x96xf32>
    %8 = arith.addf %4, %7 : vector<16x96xf32>
    %9 = arith.truncf %8 : vector<16x96xf32> to vector<16x96xbf16>
    %c0_7 = arith.constant 0 : index
    %c0_8 = arith.constant 0 : index
    %c0_9 = arith.constant 0 : index
    %10 = vector.load %arg6[%c0_7, %c0_8, %c0_9] : memref<1x16x96xbf16, #tpu.memory_space<vmem>>, vector<1x16x96xbf16>
    %11 = vector.shape_cast %10 : vector<1x16x96xbf16> to vector<16x96xbf16>
    %12 = vector.shape_cast %9 : vector<16x96xbf16> to vector<1x16x96xbf16>
    tpu.vector_store %arg6[%c0_7, %c0_8, %c0_9], %12 {strides = array<i32>} : memref<1x16x96xbf16, #tpu.memory_space<vmem>>, vector<1x16x96xbf16>,
    return
  }
  func.func @transform_0(%arg0: i32, %arg1: i32, %arg2: i32) -> (i32, i32) {
    %c0_i32 = arith.constant 0 : i32
    %c0_i32_0 = arith.constant 0 : i32
    return %arg2, %c0_i32 : i32, i32
  }
  func.func @transform_1(%arg0: i32, %arg1: i32, %arg2: i32) -> (i32, i32, i32) {
    %c0_i32 = arith.constant 0 : i32
    %c0_i32_0 = arith.constant 0 : i32
    return %arg0, %c0_i32, %arg1 : i32, i32, i32
  }
  func.func @transform_2(%arg0: i32, %arg1: i32, %arg2: i32) -> (i32, i32, i32) {
    %c0_i32 = arith.constant 0 : i32
    %c0_i32_0 = arith.constant 0 : i32
    return %arg0, %c0_i32, %arg1 : i32, i32, i32
  }
  func.func @transform_3(%arg0: i32, %arg1: i32, %arg2: i32) -> (i32, i32, i32) {
    %c0_i32 = arith.constant 0 : i32
    return %arg0, %arg2, %arg1 : i32, i32, i32
  }
}

module attributes {stable_mosaic.version = 11 : i64} {
  func.func @gru_kernel(%arg0: i32, %arg1: i32, %arg2: memref<1x8x2x96xbf16, #tpu.memory_space<vmem>>, %arg3: memref<1x32x96xbf16, #tpu.memory_space<vmem>>, %arg4: memref<1x1x32xf32, #tpu.memory_space<vmem>>, %arg5: memref<1x8x2x32xf32, #tpu.memory_space<vmem>>, %arg6: memref<2x32xf32, #tpu.memory_space<vmem>>) attributes {dimension_semantics = [#tpu.dimension_semantics<parallel>, #tpu.dimension_semantics<arbitrary>], iteration_bounds = array<i64: 2, 1>, scalar_prefetch = 0 : i64, scratch_operands = 1 : i64, tpu.core_type = #tpu.core_type<tc>, window_params = [{transform_indices = @transform_0, window_bounds = array<i64: 1, 8, 2, 96>}, {pipeline_mode = #tpu.pipeline_mode<synchronous>, transform_indices = @transform_1, window_bounds = array<i64: 1, 32, 96>}, {pipeline_mode = #tpu.pipeline_mode<synchronous>, transform_indices = @transform_2, window_bounds = array<i64: 1, 1, 32>}, {transform_indices = @transform_3, window_bounds = array<i64: 1, 8, 2, 32>}]} {
    %c0_i32 = arith.constant 0 : i32
    %0 = arith.cmpi eq, %arg1, %c0_i32 : i32
    %1 = arith.extui %0 : i1 to i32
    %c0_i32_0 = arith.constant 0 : i32
    %2 = arith.cmpi ne, %1, %c0_i32_0 : i32
    scf.if %2 {
      %cst = arith.constant 0.000000e+00 : f32
      %13 = vector.broadcast %cst : f32 to vector<2x32xf32>
      %c0_9 = arith.constant 0 : index
      %c0_10 = arith.constant 0 : index
      %14 = vector.load %arg6[%c0_9, %c0_10] : memref<2x32xf32, #tpu.memory_space<vmem>>, vector<2x32xf32>
      tpu.vector_store %arg6[%c0_9, %c0_10], %13 {strides = array<i32>} : memref<2x32xf32, #tpu.memory_space<vmem>>, vector<2x32xf32>,
    } else {
    }
    %c0 = arith.constant 0 : index
    %c0_1 = arith.constant 0 : index
    %c0_2 = arith.constant 0 : index
    %3 = vector.load %arg3[%c0, %c0_1, %c0_2] : memref<1x32x96xbf16, #tpu.memory_space<vmem>>, vector<1x32x96xbf16>
    %4 = vector.shape_cast %3 : vector<1x32x96xbf16> to vector<32x96xbf16>
    %c0_3 = arith.constant 0 : index
    %c0_4 = arith.constant 0 : index
    %c0_5 = arith.constant 0 : index
    %5 = vector.load %arg4[%c0_3, %c0_4, %c0_5] : memref<1x1x32xf32, #tpu.memory_space<vmem>>, vector<1x1x32xf32>
    %6 = vector.shape_cast %5 : vector<1x1x32xf32> to vector<1x32xf32>
    %c0_i32_6 = arith.constant 0 : i32
    %7 = arith.cmpi eq, %arg0, %c0_i32_6 : i32
    %8 = arith.extui %7 : i1 to i32
    %c0_i32_7 = arith.constant 0 : i32
    %9 = arith.cmpi ne, %8, %c0_i32_7 : i32
    scf.if %9 {
      %c0_9 = arith.constant 0 : index
      %c0_10 = arith.constant 0 : index
      %13 = vector.load %arg6[%c0_9, %c0_10] : memref<2x32xf32, #tpu.memory_space<vmem>>, vector<2x32xf32>
      %c0_11 = arith.constant 0 : index
      %c0_12 = arith.constant 0 : index
      %c0_13 = arith.constant 0 : index
      %c0_14 = arith.constant 0 : index
      %14 = vector.load %arg2[%c0_11, %c0_12, %c0_13, %c0_14] : memref<1x8x2x96xbf16, #tpu.memory_space<vmem>>, vector<1x1x2x96xbf16>
      %15 = vector.shape_cast %14 : vector<1x1x2x96xbf16> to vector<2x96xbf16>
      %16 = arith.truncf %13 : vector<2x32xf32> to vector<2x32xbf16>
      %cst = arith.constant dense<0.000000e+00> : vector<2x96xf32>
      %17 = tpu.matmul %16, %4, %cst {dimension_numbers = #tpu.dot_dimension_numbers<[1], [0], [0], [1], [0, 0, 1, 1], [], []>} : vector<2x32xbf16>, vector<32x96xbf16>, vector<2x96xf32> -> vector<2x96xf32>
      %18 = vector.extract_strided_slice %15 {offsets = [0, 0], sizes = [2, 64], strides = [1, 1]} : vector<2x96xbf16> to vector<2x64xbf16>
      %19 = arith.extf %18 : vector<2x64xbf16> to vector<2x64xf32>
      %20 = vector.extract_strided_slice %17 {offsets = [0, 0], sizes = [2, 64], strides = [1, 1]} : vector<2x96xf32> to vector<2x64xf32>
      %21 = arith.addf %19, %20 : vector<2x64xf32>
      %22 = arith.negf %21 : vector<2x64xf32>
      %23 = math.exp %22 : vector<2x64xf32>
      %cst_15 = arith.constant 1.000000e+00 : f32
      %24 = vector.broadcast %cst_15 : f32 to vector<2x64xf32>
      %25 = arith.addf %24, %23 : vector<2x64xf32>
      %26 = arith.divf %24, %25 : vector<2x64xf32>
      %27 = vector.extract_strided_slice %26 {offsets = [0, 0], sizes = [2, 32], strides = [1, 1]} : vector<2x64xf32> to vector<2x32xf32>
      %28 = vector.extract_strided_slice %26 {offsets = [0, 32], sizes = [2, 32], strides = [1, 1]} : vector<2x64xf32> to vector<2x32xf32>
      %29 = vector.extract_strided_slice %15 {offsets = [0, 64], sizes = [2, 32], strides = [1, 1]} : vector<2x96xbf16> to vector<2x32xbf16>
      %30 = arith.extf %29 : vector<2x32xbf16> to vector<2x32xf32>
      %31 = vector.extract_strided_slice %17 {offsets = [0, 64], sizes = [2, 32], strides = [1, 1]} : vector<2x96xf32> to vector<2x32xf32>
      %32 = vector.broadcast %6 : vector<1x32xf32> to vector<2x32xf32>
      %33 = arith.addf %31, %32 : vector<2x32xf32>
      %34 = arith.mulf %27, %33 : vector<2x32xf32>
      %35 = arith.addf %30, %34 : vector<2x32xf32>
      %36 = math.tanh %35 : vector<2x32xf32>
      %cst_16 = arith.constant 1.000000e+00 : f32
      %37 = vector.broadcast %cst_16 : f32 to vector<2x32xf32>
      %38 = arith.subf %37, %28 : vector<2x32xf32>
      %39 = arith.mulf %38, %36 : vector<2x32xf32>
      %40 = arith.mulf %28, %13 : vector<2x32xf32>
      %41 = arith.addf %39, %40 : vector<2x32xf32>
      %c0_17 = arith.constant 0 : index
      %c0_18 = arith.constant 0 : index
      %c0_19 = arith.constant 0 : index
      %c0_20 = arith.constant 0 : index
      %42 = vector.load %arg5[%c0_17, %c0_18, %c0_19, %c0_20] : memref<1x8x2x32xf32, #tpu.memory_space<vmem>>, vector<1x1x2x32xf32>
      %43 = vector.shape_cast %42 : vector<1x1x2x32xf32> to vector<2x32xf32>
      %44 = vector.shape_cast %41 : vector<2x32xf32> to vector<1x1x2x32xf32>
      tpu.vector_store %arg5[%c0_17, %c0_18, %c0_19, %c0_20], %44 {strides = array<i32>} : memref<1x8x2x32xf32, #tpu.memory_space<vmem>>, vector<1x1x2x32xf32>,
      %c0_21 = arith.constant 0 : index
      %c1 = arith.constant 1 : index
      %c0_22 = arith.constant 0 : index
      %c0_23 = arith.constant 0 : index
      %45 = vector.load %arg2[%c0_21, %c1, %c0_22, %c0_23] : memref<1x8x2x96xbf16, #tpu.memory_space<vmem>>, vector<1x1x2x96xbf16>
      %46 = vector.shape_cast %45 : vector<1x1x2x96xbf16> to vector<2x96xbf16>
      %47 = arith.truncf %41 : vector<2x32xf32> to vector<2x32xbf16>
      %cst_24 = arith.constant dense<0.000000e+00> : vector<2x96xf32>
      %48 = tpu.matmul %47, %4, %cst_24 {dimension_numbers = #tpu.dot_dimension_numbers<[1], [0], [0], [1], [0, 0, 1, 1], [], []>} : vector<2x32xbf16>, vector<32x96xbf16>, vector<2x96xf32> -> vector<2x96xf32>
      %49 = vector.extract_strided_slice %46 {offsets = [0, 0], sizes = [2, 64], strides = [1, 1]} : vector<2x96xbf16> to vector<2x64xbf16>
      %50 = arith.extf %49 : vector<2x64xbf16> to vector<2x64xf32>
      %51 = vector.extract_strided_slice %48 {offsets = [0, 0], sizes = [2, 64], strides = [1, 1]} : vector<2x96xf32> to vector<2x64xf32>
      %52 = arith.addf %50, %51 : vector<2x64xf32>
      %53 = arith.negf %52 : vector<2x64xf32>
      %54 = math.exp %53 : vector<2x64xf32>
      %cst_25 = arith.constant 1.000000e+00 : f32
      %55 = vector.broadcast %cst_25 : f32 to vector<2x64xf32>
      %56 = arith.addf %55, %54 : vector<2x64xf32>
      %57 = arith.divf %55, %56 : vector<2x64xf32>
      %58 = vector.extract_strided_slice %57 {offsets = [0, 0], sizes = [2, 32], strides = [1, 1]} : vector<2x64xf32> to vector<2x32xf32>
      %59 = vector.extract_strided_slice %57 {offsets = [0, 32], sizes = [2, 32], strides = [1, 1]} : vector<2x64xf32> to vector<2x32xf32>
      %60 = vector.extract_strided_slice %46 {offsets = [0, 64], sizes = [2, 32], strides = [1, 1]} : vector<2x96xbf16> to vector<2x32xbf16>
      %61 = arith.extf %60 : vector<2x32xbf16> to vector<2x32xf32>
      %62 = vector.extract_strided_slice %48 {offsets = [0, 64], sizes = [2, 32], strides = [1, 1]} : vector<2x96xf32> to vector<2x32xf32>
      %63 = vector.broadcast %6 : vector<1x32xf32> to vector<2x32xf32>
      %64 = arith.addf %62, %63 : vector<2x32xf32>
      %65 = arith.mulf %58, %64 : vector<2x32xf32>
      %66 = arith.addf %61, %65 : vector<2x32xf32>
      %67 = math.tanh %66 : vector<2x32xf32>
      %cst_26 = arith.constant 1.000000e+00 : f32
      %68 = vector.broadcast %cst_26 : f32 to vector<2x32xf32>
      %69 = arith.subf %68, %59 : vector<2x32xf32>
      %70 = arith.mulf %69, %67 : vector<2x32xf32>
      %71 = arith.mulf %59, %41 : vector<2x32xf32>
      %72 = arith.addf %70, %71 : vector<2x32xf32>
      %c0_27 = arith.constant 0 : index
      %c1_28 = arith.constant 1 : index
      %c0_29 = arith.constant 0 : index
      %c0_30 = arith.constant 0 : index
      %73 = vector.load %arg5[%c0_27, %c1_28, %c0_29, %c0_30] : memref<1x8x2x32xf32, #tpu.memory_space<vmem>>, vector<1x1x2x32xf32>
      %74 = vector.shape_cast %73 : vector<1x1x2x32xf32> to vector<2x32xf32>
      %75 = vector.shape_cast %72 : vector<2x32xf32> to vector<1x1x2x32xf32>
      tpu.vector_store %arg5[%c0_27, %c1_28, %c0_29, %c0_30], %75 {strides = array<i32>} : memref<1x8x2x32xf32, #tpu.memory_space<vmem>>, vector<1x1x2x32xf32>,
      %c0_31 = arith.constant 0 : index
      %c2 = arith.constant 2 : index
      %c0_32 = arith.constant 0 : index
      %c0_33 = arith.constant 0 : index
      %76 = vector.load %arg2[%c0_31, %c2, %c0_32, %c0_33] : memref<1x8x2x96xbf16, #tpu.memory_space<vmem>>, vector<1x1x2x96xbf16>
      %77 = vector.shape_cast %76 : vector<1x1x2x96xbf16> to vector<2x96xbf16>
      %78 = arith.truncf %72 : vector<2x32xf32> to vector<2x32xbf16>
      %cst_34 = arith.constant dense<0.000000e+00> : vector<2x96xf32>
      %79 = tpu.matmul %78, %4, %cst_34 {dimension_numbers = #tpu.dot_dimension_numbers<[1], [0], [0], [1], [0, 0, 1, 1], [], []>} : vector<2x32xbf16>, vector<32x96xbf16>, vector<2x96xf32> -> vector<2x96xf32>
      %80 = vector.extract_strided_slice %77 {offsets = [0, 0], sizes = [2, 64], strides = [1, 1]} : vector<2x96xbf16> to vector<2x64xbf16>
      %81 = arith.extf %80 : vector<2x64xbf16> to vector<2x64xf32>
      %82 = vector.extract_strided_slice %79 {offsets = [0, 0], sizes = [2, 64], strides = [1, 1]} : vector<2x96xf32> to vector<2x64xf32>
      %83 = arith.addf %81, %82 : vector<2x64xf32>
      %84 = arith.negf %83 : vector<2x64xf32>
      %85 = math.exp %84 : vector<2x64xf32>
      %cst_35 = arith.constant 1.000000e+00 : f32
      %86 = vector.broadcast %cst_35 : f32 to vector<2x64xf32>
      %87 = arith.addf %86, %85 : vector<2x64xf32>
      %88 = arith.divf %86, %87 : vector<2x64xf32>
      %89 = vector.extract_strided_slice %88 {offsets = [0, 0], sizes = [2, 32], strides = [1, 1]} : vector<2x64xf32> to vector<2x32xf32>
      %90 = vector.extract_strided_slice %88 {offsets = [0, 32], sizes = [2, 32], strides = [1, 1]} : vector<2x64xf32> to vector<2x32xf32>
      %91 = vector.extract_strided_slice %77 {offsets = [0, 64], sizes = [2, 32], strides = [1, 1]} : vector<2x96xbf16> to vector<2x32xbf16>
      %92 = arith.extf %91 : vector<2x32xbf16> to vector<2x32xf32>
      %93 = vector.extract_strided_slice %79 {offsets = [0, 64], sizes = [2, 32], strides = [1, 1]} : vector<2x96xf32> to vector<2x32xf32>
      %94 = vector.broadcast %6 : vector<1x32xf32> to vector<2x32xf32>
      %95 = arith.addf %93, %94 : vector<2x32xf32>
      %96 = arith.mulf %89, %95 : vector<2x32xf32>
      %97 = arith.addf %92, %96 : vector<2x32xf32>
      %98 = math.tanh %97 : vector<2x32xf32>
      %cst_36 = arith.constant 1.000000e+00 : f32
      %99 = vector.broadcast %cst_36 : f32 to vector<2x32xf32>
      %100 = arith.subf %99, %90 : vector<2x32xf32>
      %101 = arith.mulf %100, %98 : vector<2x32xf32>
      %102 = arith.mulf %90, %72 : vector<2x32xf32>
      %103 = arith.addf %101, %102 : vector<2x32xf32>
      %c0_37 = arith.constant 0 : index
      %c2_38 = arith.constant 2 : index
      %c0_39 = arith.constant 0 : index
      %c0_40 = arith.constant 0 : index
      %104 = vector.load %arg5[%c0_37, %c2_38, %c0_39, %c0_40] : memref<1x8x2x32xf32, #tpu.memory_space<vmem>>, vector<1x1x2x32xf32>
      %105 = vector.shape_cast %104 : vector<1x1x2x32xf32> to vector<2x32xf32>
      %106 = vector.shape_cast %103 : vector<2x32xf32> to vector<1x1x2x32xf32>
      tpu.vector_store %arg5[%c0_37, %c2_38, %c0_39, %c0_40], %106 {strides = array<i32>} : memref<1x8x2x32xf32, #tpu.memory_space<vmem>>, vector<1x1x2x32xf32>,
      %c0_41 = arith.constant 0 : index
      %c3 = arith.constant 3 : index
      %c0_42 = arith.constant 0 : index
      %c0_43 = arith.constant 0 : index
      %107 = vector.load %arg2[%c0_41, %c3, %c0_42, %c0_43] : memref<1x8x2x96xbf16, #tpu.memory_space<vmem>>, vector<1x1x2x96xbf16>
      %108 = vector.shape_cast %107 : vector<1x1x2x96xbf16> to vector<2x96xbf16>
      %109 = arith.truncf %103 : vector<2x32xf32> to vector<2x32xbf16>
      %cst_44 = arith.constant dense<0.000000e+00> : vector<2x96xf32>
      %110 = tpu.matmul %109, %4, %cst_44 {dimension_numbers = #tpu.dot_dimension_numbers<[1], [0], [0], [1], [0, 0, 1, 1], [], []>} : vector<2x32xbf16>, vector<32x96xbf16>, vector<2x96xf32> -> vector<2x96xf32>
      %111 = vector.extract_strided_slice %108 {offsets = [0, 0], sizes = [2, 64], strides = [1, 1]} : vector<2x96xbf16> to vector<2x64xbf16>
      %112 = arith.extf %111 : vector<2x64xbf16> to vector<2x64xf32>
      %113 = vector.extract_strided_slice %110 {offsets = [0, 0], sizes = [2, 64], strides = [1, 1]} : vector<2x96xf32> to vector<2x64xf32>
      %114 = arith.addf %112, %113 : vector<2x64xf32>
      %115 = arith.negf %114 : vector<2x64xf32>
      %116 = math.exp %115 : vector<2x64xf32>
      %cst_45 = arith.constant 1.000000e+00 : f32
      %117 = vector.broadcast %cst_45 : f32 to vector<2x64xf32>
      %118 = arith.addf %117, %116 : vector<2x64xf32>
      %119 = arith.divf %117, %118 : vector<2x64xf32>
      %120 = vector.extract_strided_slice %119 {offsets = [0, 0], sizes = [2, 32], strides = [1, 1]} : vector<2x64xf32> to vector<2x32xf32>
      %121 = vector.extract_strided_slice %119 {offsets = [0, 32], sizes = [2, 32], strides = [1, 1]} : vector<2x64xf32> to vector<2x32xf32>
      %122 = vector.extract_strided_slice %108 {offsets = [0, 64], sizes = [2, 32], strides = [1, 1]} : vector<2x96xbf16> to vector<2x32xbf16>
      %123 = arith.extf %122 : vector<2x32xbf16> to vector<2x32xf32>
      %124 = vector.extract_strided_slice %110 {offsets = [0, 64], sizes = [2, 32], strides = [1, 1]} : vector<2x96xf32> to vector<2x32xf32>
      %125 = vector.broadcast %6 : vector<1x32xf32> to vector<2x32xf32>
      %126 = arith.addf %124, %125 : vector<2x32xf32>
      %127 = arith.mulf %120, %126 : vector<2x32xf32>
      %128 = arith.addf %123, %127 : vector<2x32xf32>
      %129 = math.tanh %128 : vector<2x32xf32>
      %cst_46 = arith.constant 1.000000e+00 : f32
      %130 = vector.broadcast %cst_46 : f32 to vector<2x32xf32>
      %131 = arith.subf %130, %121 : vector<2x32xf32>
      %132 = arith.mulf %131, %129 : vector<2x32xf32>
      %133 = arith.mulf %121, %103 : vector<2x32xf32>
      %134 = arith.addf %132, %133 : vector<2x32xf32>
      %c0_47 = arith.constant 0 : index
      %c3_48 = arith.constant 3 : index
      %c0_49 = arith.constant 0 : index
      %c0_50 = arith.constant 0 : index
      %135 = vector.load %arg5[%c0_47, %c3_48, %c0_49, %c0_50] : memref<1x8x2x32xf32, #tpu.memory_space<vmem>>, vector<1x1x2x32xf32>
      %136 = vector.shape_cast %135 : vector<1x1x2x32xf32> to vector<2x32xf32>
      %137 = vector.shape_cast %134 : vector<2x32xf32> to vector<1x1x2x32xf32>
      tpu.vector_store %arg5[%c0_47, %c3_48, %c0_49, %c0_50], %137 {strides = array<i32>} : memref<1x8x2x32xf32, #tpu.memory_space<vmem>>, vector<1x1x2x32xf32>,
      %c0_51 = arith.constant 0 : index
      %c4 = arith.constant 4 : index
      %c0_52 = arith.constant 0 : index
      %c0_53 = arith.constant 0 : index
      %138 = vector.load %arg2[%c0_51, %c4, %c0_52, %c0_53] : memref<1x8x2x96xbf16, #tpu.memory_space<vmem>>, vector<1x1x2x96xbf16>
      %139 = vector.shape_cast %138 : vector<1x1x2x96xbf16> to vector<2x96xbf16>
      %140 = arith.truncf %134 : vector<2x32xf32> to vector<2x32xbf16>
      %cst_54 = arith.constant dense<0.000000e+00> : vector<2x96xf32>
      %141 = tpu.matmul %140, %4, %cst_54 {dimension_numbers = #tpu.dot_dimension_numbers<[1], [0], [0], [1], [0, 0, 1, 1], [], []>} : vector<2x32xbf16>, vector<32x96xbf16>, vector<2x96xf32> -> vector<2x96xf32>
      %142 = vector.extract_strided_slice %139 {offsets = [0, 0], sizes = [2, 64], strides = [1, 1]} : vector<2x96xbf16> to vector<2x64xbf16>
      %143 = arith.extf %142 : vector<2x64xbf16> to vector<2x64xf32>
      %144 = vector.extract_strided_slice %141 {offsets = [0, 0], sizes = [2, 64], strides = [1, 1]} : vector<2x96xf32> to vector<2x64xf32>
      %145 = arith.addf %143, %144 : vector<2x64xf32>
      %146 = arith.negf %145 : vector<2x64xf32>
      %147 = math.exp %146 : vector<2x64xf32>
      %cst_55 = arith.constant 1.000000e+00 : f32
      %148 = vector.broadcast %cst_55 : f32 to vector<2x64xf32>
      %149 = arith.addf %148, %147 : vector<2x64xf32>
      %150 = arith.divf %148, %149 : vector<2x64xf32>
      %151 = vector.extract_strided_slice %150 {offsets = [0, 0], sizes = [2, 32], strides = [1, 1]} : vector<2x64xf32> to vector<2x32xf32>
      %152 = vector.extract_strided_slice %150 {offsets = [0, 32], sizes = [2, 32], strides = [1, 1]} : vector<2x64xf32> to vector<2x32xf32>
      %153 = vector.extract_strided_slice %139 {offsets = [0, 64], sizes = [2, 32], strides = [1, 1]} : vector<2x96xbf16> to vector<2x32xbf16>
      %154 = arith.extf %153 : vector<2x32xbf16> to vector<2x32xf32>
      %155 = vector.extract_strided_slice %141 {offsets = [0, 64], sizes = [2, 32], strides = [1, 1]} : vector<2x96xf32> to vector<2x32xf32>
      %156 = vector.broadcast %6 : vector<1x32xf32> to vector<2x32xf32>
      %157 = arith.addf %155, %156 : vector<2x32xf32>
      %158 = arith.mulf %151, %157 : vector<2x32xf32>
      %159 = arith.addf %154, %158 : vector<2x32xf32>
      %160 = math.tanh %159 : vector<2x32xf32>
      %cst_56 = arith.constant 1.000000e+00 : f32
      %161 = vector.broadcast %cst_56 : f32 to vector<2x32xf32>
      %162 = arith.subf %161, %152 : vector<2x32xf32>
      %163 = arith.mulf %162, %160 : vector<2x32xf32>
      %164 = arith.mulf %152, %134 : vector<2x32xf32>
      %165 = arith.addf %163, %164 : vector<2x32xf32>
      %c0_57 = arith.constant 0 : index
      %c4_58 = arith.constant 4 : index
      %c0_59 = arith.constant 0 : index
      %c0_60 = arith.constant 0 : index
      %166 = vector.load %arg5[%c0_57, %c4_58, %c0_59, %c0_60] : memref<1x8x2x32xf32, #tpu.memory_space<vmem>>, vector<1x1x2x32xf32>
      %167 = vector.shape_cast %166 : vector<1x1x2x32xf32> to vector<2x32xf32>
      %168 = vector.shape_cast %165 : vector<2x32xf32> to vector<1x1x2x32xf32>
      tpu.vector_store %arg5[%c0_57, %c4_58, %c0_59, %c0_60], %168 {strides = array<i32>} : memref<1x8x2x32xf32, #tpu.memory_space<vmem>>, vector<1x1x2x32xf32>,
      %c0_61 = arith.constant 0 : index
      %c5 = arith.constant 5 : index
      %c0_62 = arith.constant 0 : index
      %c0_63 = arith.constant 0 : index
      %169 = vector.load %arg2[%c0_61, %c5, %c0_62, %c0_63] : memref<1x8x2x96xbf16, #tpu.memory_space<vmem>>, vector<1x1x2x96xbf16>
      %170 = vector.shape_cast %169 : vector<1x1x2x96xbf16> to vector<2x96xbf16>
      %171 = arith.truncf %165 : vector<2x32xf32> to vector<2x32xbf16>
      %cst_64 = arith.constant dense<0.000000e+00> : vector<2x96xf32>
      %172 = tpu.matmul %171, %4, %cst_64 {dimension_numbers = #tpu.dot_dimension_numbers<[1], [0], [0], [1], [0, 0, 1, 1], [], []>} : vector<2x32xbf16>, vector<32x96xbf16>, vector<2x96xf32> -> vector<2x96xf32>
      %173 = vector.extract_strided_slice %170 {offsets = [0, 0], sizes = [2, 64], strides = [1, 1]} : vector<2x96xbf16> to vector<2x64xbf16>
      %174 = arith.extf %173 : vector<2x64xbf16> to vector<2x64xf32>
      %175 = vector.extract_strided_slice %172 {offsets = [0, 0], sizes = [2, 64], strides = [1, 1]} : vector<2x96xf32> to vector<2x64xf32>
      %176 = arith.addf %174, %175 : vector<2x64xf32>
      %177 = arith.negf %176 : vector<2x64xf32>
      %178 = math.exp %177 : vector<2x64xf32>
      %cst_65 = arith.constant 1.000000e+00 : f32
      %179 = vector.broadcast %cst_65 : f32 to vector<2x64xf32>
      %180 = arith.addf %179, %178 : vector<2x64xf32>
      %181 = arith.divf %179, %180 : vector<2x64xf32>
      %182 = vector.extract_strided_slice %181 {offsets = [0, 0], sizes = [2, 32], strides = [1, 1]} : vector<2x64xf32> to vector<2x32xf32>
      %183 = vector.extract_strided_slice %181 {offsets = [0, 32], sizes = [2, 32], strides = [1, 1]} : vector<2x64xf32> to vector<2x32xf32>
      %184 = vector.extract_strided_slice %170 {offsets = [0, 64], sizes = [2, 32], strides = [1, 1]} : vector<2x96xbf16> to vector<2x32xbf16>
      %185 = arith.extf %184 : vector<2x32xbf16> to vector<2x32xf32>
      %186 = vector.extract_strided_slice %172 {offsets = [0, 64], sizes = [2, 32], strides = [1, 1]} : vector<2x96xf32> to vector<2x32xf32>
      %187 = vector.broadcast %6 : vector<1x32xf32> to vector<2x32xf32>
      %188 = arith.addf %186, %187 : vector<2x32xf32>
      %189 = arith.mulf %182, %188 : vector<2x32xf32>
      %190 = arith.addf %185, %189 : vector<2x32xf32>
      %191 = math.tanh %190 : vector<2x32xf32>
      %cst_66 = arith.constant 1.000000e+00 : f32
      %192 = vector.broadcast %cst_66 : f32 to vector<2x32xf32>
      %193 = arith.subf %192, %183 : vector<2x32xf32>
      %194 = arith.mulf %193, %191 : vector<2x32xf32>
      %195 = arith.mulf %183, %165 : vector<2x32xf32>
      %196 = arith.addf %194, %195 : vector<2x32xf32>
      %c0_67 = arith.constant 0 : index
      %c5_68 = arith.constant 5 : index
      %c0_69 = arith.constant 0 : index
      %c0_70 = arith.constant 0 : index
      %197 = vector.load %arg5[%c0_67, %c5_68, %c0_69, %c0_70] : memref<1x8x2x32xf32, #tpu.memory_space<vmem>>, vector<1x1x2x32xf32>
      %198 = vector.shape_cast %197 : vector<1x1x2x32xf32> to vector<2x32xf32>
      %199 = vector.shape_cast %196 : vector<2x32xf32> to vector<1x1x2x32xf32>
      tpu.vector_store %arg5[%c0_67, %c5_68, %c0_69, %c0_70], %199 {strides = array<i32>} : memref<1x8x2x32xf32, #tpu.memory_space<vmem>>, vector<1x1x2x32xf32>,
      %c0_71 = arith.constant 0 : index
      %c6 = arith.constant 6 : index
      %c0_72 = arith.constant 0 : index
      %c0_73 = arith.constant 0 : index
      %200 = vector.load %arg2[%c0_71, %c6, %c0_72, %c0_73] : memref<1x8x2x96xbf16, #tpu.memory_space<vmem>>, vector<1x1x2x96xbf16>
      %201 = vector.shape_cast %200 : vector<1x1x2x96xbf16> to vector<2x96xbf16>
      %202 = arith.truncf %196 : vector<2x32xf32> to vector<2x32xbf16>
      %cst_74 = arith.constant dense<0.000000e+00> : vector<2x96xf32>
      %203 = tpu.matmul %202, %4, %cst_74 {dimension_numbers = #tpu.dot_dimension_numbers<[1], [0], [0], [1], [0, 0, 1, 1], [], []>} : vector<2x32xbf16>, vector<32x96xbf16>, vector<2x96xf32> -> vector<2x96xf32>
      %204 = vector.extract_strided_slice %201 {offsets = [0, 0], sizes = [2, 64], strides = [1, 1]} : vector<2x96xbf16> to vector<2x64xbf16>
      %205 = arith.extf %204 : vector<2x64xbf16> to vector<2x64xf32>
      %206 = vector.extract_strided_slice %203 {offsets = [0, 0], sizes = [2, 64], strides = [1, 1]} : vector<2x96xf32> to vector<2x64xf32>
      %207 = arith.addf %205, %206 : vector<2x64xf32>
      %208 = arith.negf %207 : vector<2x64xf32>
      %209 = math.exp %208 : vector<2x64xf32>
      %cst_75 = arith.constant 1.000000e+00 : f32
      %210 = vector.broadcast %cst_75 : f32 to vector<2x64xf32>
      %211 = arith.addf %210, %209 : vector<2x64xf32>
      %212 = arith.divf %210, %211 : vector<2x64xf32>
      %213 = vector.extract_strided_slice %212 {offsets = [0, 0], sizes = [2, 32], strides = [1, 1]} : vector<2x64xf32> to vector<2x32xf32>
      %214 = vector.extract_strided_slice %212 {offsets = [0, 32], sizes = [2, 32], strides = [1, 1]} : vector<2x64xf32> to vector<2x32xf32>
      %215 = vector.extract_strided_slice %201 {offsets = [0, 64], sizes = [2, 32], strides = [1, 1]} : vector<2x96xbf16> to vector<2x32xbf16>
      %216 = arith.extf %215 : vector<2x32xbf16> to vector<2x32xf32>
      %217 = vector.extract_strided_slice %203 {offsets = [0, 64], sizes = [2, 32], strides = [1, 1]} : vector<2x96xf32> to vector<2x32xf32>
      %218 = vector.broadcast %6 : vector<1x32xf32> to vector<2x32xf32>
      %219 = arith.addf %217, %218 : vector<2x32xf32>
      %220 = arith.mulf %213, %219 : vector<2x32xf32>
      %221 = arith.addf %216, %220 : vector<2x32xf32>
      %222 = math.tanh %221 : vector<2x32xf32>
      %cst_76 = arith.constant 1.000000e+00 : f32
      %223 = vector.broadcast %cst_76 : f32 to vector<2x32xf32>
      %224 = arith.subf %223, %214 : vector<2x32xf32>
      %225 = arith.mulf %224, %222 : vector<2x32xf32>
      %226 = arith.mulf %214, %196 : vector<2x32xf32>
      %227 = arith.addf %225, %226 : vector<2x32xf32>
      %c0_77 = arith.constant 0 : index
      %c6_78 = arith.constant 6 : index
      %c0_79 = arith.constant 0 : index
      %c0_80 = arith.constant 0 : index
      %228 = vector.load %arg5[%c0_77, %c6_78, %c0_79, %c0_80] : memref<1x8x2x32xf32, #tpu.memory_space<vmem>>, vector<1x1x2x32xf32>
      %229 = vector.shape_cast %228 : vector<1x1x2x32xf32> to vector<2x32xf32>
      %230 = vector.shape_cast %227 : vector<2x32xf32> to vector<1x1x2x32xf32>
      tpu.vector_store %arg5[%c0_77, %c6_78, %c0_79, %c0_80], %230 {strides = array<i32>} : memref<1x8x2x32xf32, #tpu.memory_space<vmem>>, vector<1x1x2x32xf32>,
      %c0_81 = arith.constant 0 : index
      %c7 = arith.constant 7 : index
      %c0_82 = arith.constant 0 : index
      %c0_83 = arith.constant 0 : index
      %231 = vector.load %arg2[%c0_81, %c7, %c0_82, %c0_83] : memref<1x8x2x96xbf16, #tpu.memory_space<vmem>>, vector<1x1x2x96xbf16>
      %232 = vector.shape_cast %231 : vector<1x1x2x96xbf16> to vector<2x96xbf16>
      %233 = arith.truncf %227 : vector<2x32xf32> to vector<2x32xbf16>
      %cst_84 = arith.constant dense<0.000000e+00> : vector<2x96xf32>
      %234 = tpu.matmul %233, %4, %cst_84 {dimension_numbers = #tpu.dot_dimension_numbers<[1], [0], [0], [1], [0, 0, 1, 1], [], []>} : vector<2x32xbf16>, vector<32x96xbf16>, vector<2x96xf32> -> vector<2x96xf32>
      %235 = vector.extract_strided_slice %232 {offsets = [0, 0], sizes = [2, 64], strides = [1, 1]} : vector<2x96xbf16> to vector<2x64xbf16>
      %236 = arith.extf %235 : vector<2x64xbf16> to vector<2x64xf32>
      %237 = vector.extract_strided_slice %234 {offsets = [0, 0], sizes = [2, 64], strides = [1, 1]} : vector<2x96xf32> to vector<2x64xf32>
      %238 = arith.addf %236, %237 : vector<2x64xf32>
      %239 = arith.negf %238 : vector<2x64xf32>
      %240 = math.exp %239 : vector<2x64xf32>
      %cst_85 = arith.constant 1.000000e+00 : f32
      %241 = vector.broadcast %cst_85 : f32 to vector<2x64xf32>
      %242 = arith.addf %241, %240 : vector<2x64xf32>
      %243 = arith.divf %241, %242 : vector<2x64xf32>
      %244 = vector.extract_strided_slice %243 {offsets = [0, 0], sizes = [2, 32], strides = [1, 1]} : vector<2x64xf32> to vector<2x32xf32>
      %245 = vector.extract_strided_slice %243 {offsets = [0, 32], sizes = [2, 32], strides = [1, 1]} : vector<2x64xf32> to vector<2x32xf32>
      %246 = vector.extract_strided_slice %232 {offsets = [0, 64], sizes = [2, 32], strides = [1, 1]} : vector<2x96xbf16> to vector<2x32xbf16>
      %247 = arith.extf %246 : vector<2x32xbf16> to vector<2x32xf32>
      %248 = vector.extract_strided_slice %234 {offsets = [0, 64], sizes = [2, 32], strides = [1, 1]} : vector<2x96xf32> to vector<2x32xf32>
      %249 = vector.broadcast %6 : vector<1x32xf32> to vector<2x32xf32>
      %250 = arith.addf %248, %249 : vector<2x32xf32>
      %251 = arith.mulf %244, %250 : vector<2x32xf32>
      %252 = arith.addf %247, %251 : vector<2x32xf32>
      %253 = math.tanh %252 : vector<2x32xf32>
      %cst_86 = arith.constant 1.000000e+00 : f32
      %254 = vector.broadcast %cst_86 : f32 to vector<2x32xf32>
      %255 = arith.subf %254, %245 : vector<2x32xf32>
      %256 = arith.mulf %255, %253 : vector<2x32xf32>
      %257 = arith.mulf %245, %227 : vector<2x32xf32>
      %258 = arith.addf %256, %257 : vector<2x32xf32>
      %c0_87 = arith.constant 0 : index
      %c7_88 = arith.constant 7 : index
      %c0_89 = arith.constant 0 : index
      %c0_90 = arith.constant 0 : index
      %259 = vector.load %arg5[%c0_87, %c7_88, %c0_89, %c0_90] : memref<1x8x2x32xf32, #tpu.memory_space<vmem>>, vector<1x1x2x32xf32>
      %260 = vector.shape_cast %259 : vector<1x1x2x32xf32> to vector<2x32xf32>
      %261 = vector.shape_cast %258 : vector<2x32xf32> to vector<1x1x2x32xf32>
      tpu.vector_store %arg5[%c0_87, %c7_88, %c0_89, %c0_90], %261 {strides = array<i32>} : memref<1x8x2x32xf32, #tpu.memory_space<vmem>>, vector<1x1x2x32xf32>,
      %c0_91 = arith.constant 0 : index
      %c0_92 = arith.constant 0 : index
      %262 = vector.load %arg6[%c0_91, %c0_92] : memref<2x32xf32, #tpu.memory_space<vmem>>, vector<2x32xf32>
      tpu.vector_store %arg6[%c0_91, %c0_92], %258 {strides = array<i32>} : memref<2x32xf32, #tpu.memory_space<vmem>>, vector<2x32xf32>,
    } else {
    }
    %c1_i32 = arith.constant 1 : i32
    %10 = arith.cmpi eq, %arg0, %c1_i32 : i32
    %11 = arith.extui %10 : i1 to i32
    %c0_i32_8 = arith.constant 0 : i32
    %12 = arith.cmpi ne, %11, %c0_i32_8 : i32
    scf.if %12 {
      %c0_9 = arith.constant 0 : index
      %c0_10 = arith.constant 0 : index
      %13 = vector.load %arg6[%c0_9, %c0_10] : memref<2x32xf32, #tpu.memory_space<vmem>>, vector<2x32xf32>
      %c0_11 = arith.constant 0 : index
      %c7 = arith.constant 7 : index
      %c0_12 = arith.constant 0 : index
      %c0_13 = arith.constant 0 : index
      %14 = vector.load %arg2[%c0_11, %c7, %c0_12, %c0_13] : memref<1x8x2x96xbf16, #tpu.memory_space<vmem>>, vector<1x1x2x96xbf16>
      %15 = vector.shape_cast %14 : vector<1x1x2x96xbf16> to vector<2x96xbf16>
      %16 = arith.truncf %13 : vector<2x32xf32> to vector<2x32xbf16>
      %cst = arith.constant dense<0.000000e+00> : vector<2x96xf32>
      %17 = tpu.matmul %16, %4, %cst {dimension_numbers = #tpu.dot_dimension_numbers<[1], [0], [0], [1], [0, 0, 1, 1], [], []>} : vector<2x32xbf16>, vector<32x96xbf16>, vector<2x96xf32> -> vector<2x96xf32>
      %18 = vector.extract_strided_slice %15 {offsets = [0, 0], sizes = [2, 64], strides = [1, 1]} : vector<2x96xbf16> to vector<2x64xbf16>
      %19 = arith.extf %18 : vector<2x64xbf16> to vector<2x64xf32>
      %20 = vector.extract_strided_slice %17 {offsets = [0, 0], sizes = [2, 64], strides = [1, 1]} : vector<2x96xf32> to vector<2x64xf32>
      %21 = arith.addf %19, %20 : vector<2x64xf32>
      %22 = arith.negf %21 : vector<2x64xf32>
      %23 = math.exp %22 : vector<2x64xf32>
      %cst_14 = arith.constant 1.000000e+00 : f32
      %24 = vector.broadcast %cst_14 : f32 to vector<2x64xf32>
      %25 = arith.addf %24, %23 : vector<2x64xf32>
      %26 = arith.divf %24, %25 : vector<2x64xf32>
      %27 = vector.extract_strided_slice %26 {offsets = [0, 0], sizes = [2, 32], strides = [1, 1]} : vector<2x64xf32> to vector<2x32xf32>
      %28 = vector.extract_strided_slice %26 {offsets = [0, 32], sizes = [2, 32], strides = [1, 1]} : vector<2x64xf32> to vector<2x32xf32>
      %29 = vector.extract_strided_slice %15 {offsets = [0, 64], sizes = [2, 32], strides = [1, 1]} : vector<2x96xbf16> to vector<2x32xbf16>
      %30 = arith.extf %29 : vector<2x32xbf16> to vector<2x32xf32>
      %31 = vector.extract_strided_slice %17 {offsets = [0, 64], sizes = [2, 32], strides = [1, 1]} : vector<2x96xf32> to vector<2x32xf32>
      %32 = vector.broadcast %6 : vector<1x32xf32> to vector<2x32xf32>
      %33 = arith.addf %31, %32 : vector<2x32xf32>
      %34 = arith.mulf %27, %33 : vector<2x32xf32>
      %35 = arith.addf %30, %34 : vector<2x32xf32>
      %36 = math.tanh %35 : vector<2x32xf32>
      %cst_15 = arith.constant 1.000000e+00 : f32
      %37 = vector.broadcast %cst_15 : f32 to vector<2x32xf32>
      %38 = arith.subf %37, %28 : vector<2x32xf32>
      %39 = arith.mulf %38, %36 : vector<2x32xf32>
      %40 = arith.mulf %28, %13 : vector<2x32xf32>
      %41 = arith.addf %39, %40 : vector<2x32xf32>
      %c0_16 = arith.constant 0 : index
      %c7_17 = arith.constant 7 : index
      %c0_18 = arith.constant 0 : index
      %c0_19 = arith.constant 0 : index
      %42 = vector.load %arg5[%c0_16, %c7_17, %c0_18, %c0_19] : memref<1x8x2x32xf32, #tpu.memory_space<vmem>>, vector<1x1x2x32xf32>
      %43 = vector.shape_cast %42 : vector<1x1x2x32xf32> to vector<2x32xf32>
      %44 = vector.shape_cast %41 : vector<2x32xf32> to vector<1x1x2x32xf32>
      tpu.vector_store %arg5[%c0_16, %c7_17, %c0_18, %c0_19], %44 {strides = array<i32>} : memref<1x8x2x32xf32, #tpu.memory_space<vmem>>, vector<1x1x2x32xf32>,
      %c0_20 = arith.constant 0 : index
      %c6 = arith.constant 6 : index
      %c0_21 = arith.constant 0 : index
      %c0_22 = arith.constant 0 : index
      %45 = vector.load %arg2[%c0_20, %c6, %c0_21, %c0_22] : memref<1x8x2x96xbf16, #tpu.memory_space<vmem>>, vector<1x1x2x96xbf16>
      %46 = vector.shape_cast %45 : vector<1x1x2x96xbf16> to vector<2x96xbf16>
      %47 = arith.truncf %41 : vector<2x32xf32> to vector<2x32xbf16>
      %cst_23 = arith.constant dense<0.000000e+00> : vector<2x96xf32>
      %48 = tpu.matmul %47, %4, %cst_23 {dimension_numbers = #tpu.dot_dimension_numbers<[1], [0], [0], [1], [0, 0, 1, 1], [], []>} : vector<2x32xbf16>, vector<32x96xbf16>, vector<2x96xf32> -> vector<2x96xf32>
      %49 = vector.extract_strided_slice %46 {offsets = [0, 0], sizes = [2, 64], strides = [1, 1]} : vector<2x96xbf16> to vector<2x64xbf16>
      %50 = arith.extf %49 : vector<2x64xbf16> to vector<2x64xf32>
      %51 = vector.extract_strided_slice %48 {offsets = [0, 0], sizes = [2, 64], strides = [1, 1]} : vector<2x96xf32> to vector<2x64xf32>
      %52 = arith.addf %50, %51 : vector<2x64xf32>
      %53 = arith.negf %52 : vector<2x64xf32>
      %54 = math.exp %53 : vector<2x64xf32>
      %cst_24 = arith.constant 1.000000e+00 : f32
      %55 = vector.broadcast %cst_24 : f32 to vector<2x64xf32>
      %56 = arith.addf %55, %54 : vector<2x64xf32>
      %57 = arith.divf %55, %56 : vector<2x64xf32>
      %58 = vector.extract_strided_slice %57 {offsets = [0, 0], sizes = [2, 32], strides = [1, 1]} : vector<2x64xf32> to vector<2x32xf32>
      %59 = vector.extract_strided_slice %57 {offsets = [0, 32], sizes = [2, 32], strides = [1, 1]} : vector<2x64xf32> to vector<2x32xf32>
      %60 = vector.extract_strided_slice %46 {offsets = [0, 64], sizes = [2, 32], strides = [1, 1]} : vector<2x96xbf16> to vector<2x32xbf16>
      %61 = arith.extf %60 : vector<2x32xbf16> to vector<2x32xf32>
      %62 = vector.extract_strided_slice %48 {offsets = [0, 64], sizes = [2, 32], strides = [1, 1]} : vector<2x96xf32> to vector<2x32xf32>
      %63 = vector.broadcast %6 : vector<1x32xf32> to vector<2x32xf32>
      %64 = arith.addf %62, %63 : vector<2x32xf32>
      %65 = arith.mulf %58, %64 : vector<2x32xf32>
      %66 = arith.addf %61, %65 : vector<2x32xf32>
      %67 = math.tanh %66 : vector<2x32xf32>
      %cst_25 = arith.constant 1.000000e+00 : f32
      %68 = vector.broadcast %cst_25 : f32 to vector<2x32xf32>
      %69 = arith.subf %68, %59 : vector<2x32xf32>
      %70 = arith.mulf %69, %67 : vector<2x32xf32>
      %71 = arith.mulf %59, %41 : vector<2x32xf32>
      %72 = arith.addf %70, %71 : vector<2x32xf32>
      %c0_26 = arith.constant 0 : index
      %c6_27 = arith.constant 6 : index
      %c0_28 = arith.constant 0 : index
      %c0_29 = arith.constant 0 : index
      %73 = vector.load %arg5[%c0_26, %c6_27, %c0_28, %c0_29] : memref<1x8x2x32xf32, #tpu.memory_space<vmem>>, vector<1x1x2x32xf32>
      %74 = vector.shape_cast %73 : vector<1x1x2x32xf32> to vector<2x32xf32>
      %75 = vector.shape_cast %72 : vector<2x32xf32> to vector<1x1x2x32xf32>
      tpu.vector_store %arg5[%c0_26, %c6_27, %c0_28, %c0_29], %75 {strides = array<i32>} : memref<1x8x2x32xf32, #tpu.memory_space<vmem>>, vector<1x1x2x32xf32>,
      %c0_30 = arith.constant 0 : index
      %c5 = arith.constant 5 : index
      %c0_31 = arith.constant 0 : index
      %c0_32 = arith.constant 0 : index
      %76 = vector.load %arg2[%c0_30, %c5, %c0_31, %c0_32] : memref<1x8x2x96xbf16, #tpu.memory_space<vmem>>, vector<1x1x2x96xbf16>
      %77 = vector.shape_cast %76 : vector<1x1x2x96xbf16> to vector<2x96xbf16>
      %78 = arith.truncf %72 : vector<2x32xf32> to vector<2x32xbf16>
      %cst_33 = arith.constant dense<0.000000e+00> : vector<2x96xf32>
      %79 = tpu.matmul %78, %4, %cst_33 {dimension_numbers = #tpu.dot_dimension_numbers<[1], [0], [0], [1], [0, 0, 1, 1], [], []>} : vector<2x32xbf16>, vector<32x96xbf16>, vector<2x96xf32> -> vector<2x96xf32>
      %80 = vector.extract_strided_slice %77 {offsets = [0, 0], sizes = [2, 64], strides = [1, 1]} : vector<2x96xbf16> to vector<2x64xbf16>
      %81 = arith.extf %80 : vector<2x64xbf16> to vector<2x64xf32>
      %82 = vector.extract_strided_slice %79 {offsets = [0, 0], sizes = [2, 64], strides = [1, 1]} : vector<2x96xf32> to vector<2x64xf32>
      %83 = arith.addf %81, %82 : vector<2x64xf32>
      %84 = arith.negf %83 : vector<2x64xf32>
      %85 = math.exp %84 : vector<2x64xf32>
      %cst_34 = arith.constant 1.000000e+00 : f32
      %86 = vector.broadcast %cst_34 : f32 to vector<2x64xf32>
      %87 = arith.addf %86, %85 : vector<2x64xf32>
      %88 = arith.divf %86, %87 : vector<2x64xf32>
      %89 = vector.extract_strided_slice %88 {offsets = [0, 0], sizes = [2, 32], strides = [1, 1]} : vector<2x64xf32> to vector<2x32xf32>
      %90 = vector.extract_strided_slice %88 {offsets = [0, 32], sizes = [2, 32], strides = [1, 1]} : vector<2x64xf32> to vector<2x32xf32>
      %91 = vector.extract_strided_slice %77 {offsets = [0, 64], sizes = [2, 32], strides = [1, 1]} : vector<2x96xbf16> to vector<2x32xbf16>
      %92 = arith.extf %91 : vector<2x32xbf16> to vector<2x32xf32>
      %93 = vector.extract_strided_slice %79 {offsets = [0, 64], sizes = [2, 32], strides = [1, 1]} : vector<2x96xf32> to vector<2x32xf32>
      %94 = vector.broadcast %6 : vector<1x32xf32> to vector<2x32xf32>
      %95 = arith.addf %93, %94 : vector<2x32xf32>
      %96 = arith.mulf %89, %95 : vector<2x32xf32>
      %97 = arith.addf %92, %96 : vector<2x32xf32>
      %98 = math.tanh %97 : vector<2x32xf32>
      %cst_35 = arith.constant 1.000000e+00 : f32
      %99 = vector.broadcast %cst_35 : f32 to vector<2x32xf32>
      %100 = arith.subf %99, %90 : vector<2x32xf32>
      %101 = arith.mulf %100, %98 : vector<2x32xf32>
      %102 = arith.mulf %90, %72 : vector<2x32xf32>
      %103 = arith.addf %101, %102 : vector<2x32xf32>
      %c0_36 = arith.constant 0 : index
      %c5_37 = arith.constant 5 : index
      %c0_38 = arith.constant 0 : index
      %c0_39 = arith.constant 0 : index
      %104 = vector.load %arg5[%c0_36, %c5_37, %c0_38, %c0_39] : memref<1x8x2x32xf32, #tpu.memory_space<vmem>>, vector<1x1x2x32xf32>
      %105 = vector.shape_cast %104 : vector<1x1x2x32xf32> to vector<2x32xf32>
      %106 = vector.shape_cast %103 : vector<2x32xf32> to vector<1x1x2x32xf32>
      tpu.vector_store %arg5[%c0_36, %c5_37, %c0_38, %c0_39], %106 {strides = array<i32>} : memref<1x8x2x32xf32, #tpu.memory_space<vmem>>, vector<1x1x2x32xf32>,
      %c0_40 = arith.constant 0 : index
      %c4 = arith.constant 4 : index
      %c0_41 = arith.constant 0 : index
      %c0_42 = arith.constant 0 : index
      %107 = vector.load %arg2[%c0_40, %c4, %c0_41, %c0_42] : memref<1x8x2x96xbf16, #tpu.memory_space<vmem>>, vector<1x1x2x96xbf16>
      %108 = vector.shape_cast %107 : vector<1x1x2x96xbf16> to vector<2x96xbf16>
      %109 = arith.truncf %103 : vector<2x32xf32> to vector<2x32xbf16>
      %cst_43 = arith.constant dense<0.000000e+00> : vector<2x96xf32>
      %110 = tpu.matmul %109, %4, %cst_43 {dimension_numbers = #tpu.dot_dimension_numbers<[1], [0], [0], [1], [0, 0, 1, 1], [], []>} : vector<2x32xbf16>, vector<32x96xbf16>, vector<2x96xf32> -> vector<2x96xf32>
      %111 = vector.extract_strided_slice %108 {offsets = [0, 0], sizes = [2, 64], strides = [1, 1]} : vector<2x96xbf16> to vector<2x64xbf16>
      %112 = arith.extf %111 : vector<2x64xbf16> to vector<2x64xf32>
      %113 = vector.extract_strided_slice %110 {offsets = [0, 0], sizes = [2, 64], strides = [1, 1]} : vector<2x96xf32> to vector<2x64xf32>
      %114 = arith.addf %112, %113 : vector<2x64xf32>
      %115 = arith.negf %114 : vector<2x64xf32>
      %116 = math.exp %115 : vector<2x64xf32>
      %cst_44 = arith.constant 1.000000e+00 : f32
      %117 = vector.broadcast %cst_44 : f32 to vector<2x64xf32>
      %118 = arith.addf %117, %116 : vector<2x64xf32>
      %119 = arith.divf %117, %118 : vector<2x64xf32>
      %120 = vector.extract_strided_slice %119 {offsets = [0, 0], sizes = [2, 32], strides = [1, 1]} : vector<2x64xf32> to vector<2x32xf32>
      %121 = vector.extract_strided_slice %119 {offsets = [0, 32], sizes = [2, 32], strides = [1, 1]} : vector<2x64xf32> to vector<2x32xf32>
      %122 = vector.extract_strided_slice %108 {offsets = [0, 64], sizes = [2, 32], strides = [1, 1]} : vector<2x96xbf16> to vector<2x32xbf16>
      %123 = arith.extf %122 : vector<2x32xbf16> to vector<2x32xf32>
      %124 = vector.extract_strided_slice %110 {offsets = [0, 64], sizes = [2, 32], strides = [1, 1]} : vector<2x96xf32> to vector<2x32xf32>
      %125 = vector.broadcast %6 : vector<1x32xf32> to vector<2x32xf32>
      %126 = arith.addf %124, %125 : vector<2x32xf32>
      %127 = arith.mulf %120, %126 : vector<2x32xf32>
      %128 = arith.addf %123, %127 : vector<2x32xf32>
      %129 = math.tanh %128 : vector<2x32xf32>
      %cst_45 = arith.constant 1.000000e+00 : f32
      %130 = vector.broadcast %cst_45 : f32 to vector<2x32xf32>
      %131 = arith.subf %130, %121 : vector<2x32xf32>
      %132 = arith.mulf %131, %129 : vector<2x32xf32>
      %133 = arith.mulf %121, %103 : vector<2x32xf32>
      %134 = arith.addf %132, %133 : vector<2x32xf32>
      %c0_46 = arith.constant 0 : index
      %c4_47 = arith.constant 4 : index
      %c0_48 = arith.constant 0 : index
      %c0_49 = arith.constant 0 : index
      %135 = vector.load %arg5[%c0_46, %c4_47, %c0_48, %c0_49] : memref<1x8x2x32xf32, #tpu.memory_space<vmem>>, vector<1x1x2x32xf32>
      %136 = vector.shape_cast %135 : vector<1x1x2x32xf32> to vector<2x32xf32>
      %137 = vector.shape_cast %134 : vector<2x32xf32> to vector<1x1x2x32xf32>
      tpu.vector_store %arg5[%c0_46, %c4_47, %c0_48, %c0_49], %137 {strides = array<i32>} : memref<1x8x2x32xf32, #tpu.memory_space<vmem>>, vector<1x1x2x32xf32>,
      %c0_50 = arith.constant 0 : index
      %c3 = arith.constant 3 : index
      %c0_51 = arith.constant 0 : index
      %c0_52 = arith.constant 0 : index
      %138 = vector.load %arg2[%c0_50, %c3, %c0_51, %c0_52] : memref<1x8x2x96xbf16, #tpu.memory_space<vmem>>, vector<1x1x2x96xbf16>
      %139 = vector.shape_cast %138 : vector<1x1x2x96xbf16> to vector<2x96xbf16>
      %140 = arith.truncf %134 : vector<2x32xf32> to vector<2x32xbf16>
      %cst_53 = arith.constant dense<0.000000e+00> : vector<2x96xf32>
      %141 = tpu.matmul %140, %4, %cst_53 {dimension_numbers = #tpu.dot_dimension_numbers<[1], [0], [0], [1], [0, 0, 1, 1], [], []>} : vector<2x32xbf16>, vector<32x96xbf16>, vector<2x96xf32> -> vector<2x96xf32>
      %142 = vector.extract_strided_slice %139 {offsets = [0, 0], sizes = [2, 64], strides = [1, 1]} : vector<2x96xbf16> to vector<2x64xbf16>
      %143 = arith.extf %142 : vector<2x64xbf16> to vector<2x64xf32>
      %144 = vector.extract_strided_slice %141 {offsets = [0, 0], sizes = [2, 64], strides = [1, 1]} : vector<2x96xf32> to vector<2x64xf32>
      %145 = arith.addf %143, %144 : vector<2x64xf32>
      %146 = arith.negf %145 : vector<2x64xf32>
      %147 = math.exp %146 : vector<2x64xf32>
      %cst_54 = arith.constant 1.000000e+00 : f32
      %148 = vector.broadcast %cst_54 : f32 to vector<2x64xf32>
      %149 = arith.addf %148, %147 : vector<2x64xf32>
      %150 = arith.divf %148, %149 : vector<2x64xf32>
      %151 = vector.extract_strided_slice %150 {offsets = [0, 0], sizes = [2, 32], strides = [1, 1]} : vector<2x64xf32> to vector<2x32xf32>
      %152 = vector.extract_strided_slice %150 {offsets = [0, 32], sizes = [2, 32], strides = [1, 1]} : vector<2x64xf32> to vector<2x32xf32>
      %153 = vector.extract_strided_slice %139 {offsets = [0, 64], sizes = [2, 32], strides = [1, 1]} : vector<2x96xbf16> to vector<2x32xbf16>
      %154 = arith.extf %153 : vector<2x32xbf16> to vector<2x32xf32>
      %155 = vector.extract_strided_slice %141 {offsets = [0, 64], sizes = [2, 32], strides = [1, 1]} : vector<2x96xf32> to vector<2x32xf32>
      %156 = vector.broadcast %6 : vector<1x32xf32> to vector<2x32xf32>
      %157 = arith.addf %155, %156 : vector<2x32xf32>
      %158 = arith.mulf %151, %157 : vector<2x32xf32>
      %159 = arith.addf %154, %158 : vector<2x32xf32>
      %160 = math.tanh %159 : vector<2x32xf32>
      %cst_55 = arith.constant 1.000000e+00 : f32
      %161 = vector.broadcast %cst_55 : f32 to vector<2x32xf32>
      %162 = arith.subf %161, %152 : vector<2x32xf32>
      %163 = arith.mulf %162, %160 : vector<2x32xf32>
      %164 = arith.mulf %152, %134 : vector<2x32xf32>
      %165 = arith.addf %163, %164 : vector<2x32xf32>
      %c0_56 = arith.constant 0 : index
      %c3_57 = arith.constant 3 : index
      %c0_58 = arith.constant 0 : index
      %c0_59 = arith.constant 0 : index
      %166 = vector.load %arg5[%c0_56, %c3_57, %c0_58, %c0_59] : memref<1x8x2x32xf32, #tpu.memory_space<vmem>>, vector<1x1x2x32xf32>
      %167 = vector.shape_cast %166 : vector<1x1x2x32xf32> to vector<2x32xf32>
      %168 = vector.shape_cast %165 : vector<2x32xf32> to vector<1x1x2x32xf32>
      tpu.vector_store %arg5[%c0_56, %c3_57, %c0_58, %c0_59], %168 {strides = array<i32>} : memref<1x8x2x32xf32, #tpu.memory_space<vmem>>, vector<1x1x2x32xf32>,
      %c0_60 = arith.constant 0 : index
      %c2 = arith.constant 2 : index
      %c0_61 = arith.constant 0 : index
      %c0_62 = arith.constant 0 : index
      %169 = vector.load %arg2[%c0_60, %c2, %c0_61, %c0_62] : memref<1x8x2x96xbf16, #tpu.memory_space<vmem>>, vector<1x1x2x96xbf16>
      %170 = vector.shape_cast %169 : vector<1x1x2x96xbf16> to vector<2x96xbf16>
      %171 = arith.truncf %165 : vector<2x32xf32> to vector<2x32xbf16>
      %cst_63 = arith.constant dense<0.000000e+00> : vector<2x96xf32>
      %172 = tpu.matmul %171, %4, %cst_63 {dimension_numbers = #tpu.dot_dimension_numbers<[1], [0], [0], [1], [0, 0, 1, 1], [], []>} : vector<2x32xbf16>, vector<32x96xbf16>, vector<2x96xf32> -> vector<2x96xf32>
      %173 = vector.extract_strided_slice %170 {offsets = [0, 0], sizes = [2, 64], strides = [1, 1]} : vector<2x96xbf16> to vector<2x64xbf16>
      %174 = arith.extf %173 : vector<2x64xbf16> to vector<2x64xf32>
      %175 = vector.extract_strided_slice %172 {offsets = [0, 0], sizes = [2, 64], strides = [1, 1]} : vector<2x96xf32> to vector<2x64xf32>
      %176 = arith.addf %174, %175 : vector<2x64xf32>
      %177 = arith.negf %176 : vector<2x64xf32>
      %178 = math.exp %177 : vector<2x64xf32>
      %cst_64 = arith.constant 1.000000e+00 : f32
      %179 = vector.broadcast %cst_64 : f32 to vector<2x64xf32>
      %180 = arith.addf %179, %178 : vector<2x64xf32>
      %181 = arith.divf %179, %180 : vector<2x64xf32>
      %182 = vector.extract_strided_slice %181 {offsets = [0, 0], sizes = [2, 32], strides = [1, 1]} : vector<2x64xf32> to vector<2x32xf32>
      %183 = vector.extract_strided_slice %181 {offsets = [0, 32], sizes = [2, 32], strides = [1, 1]} : vector<2x64xf32> to vector<2x32xf32>
      %184 = vector.extract_strided_slice %170 {offsets = [0, 64], sizes = [2, 32], strides = [1, 1]} : vector<2x96xbf16> to vector<2x32xbf16>
      %185 = arith.extf %184 : vector<2x32xbf16> to vector<2x32xf32>
      %186 = vector.extract_strided_slice %172 {offsets = [0, 64], sizes = [2, 32], strides = [1, 1]} : vector<2x96xf32> to vector<2x32xf32>
      %187 = vector.broadcast %6 : vector<1x32xf32> to vector<2x32xf32>
      %188 = arith.addf %186, %187 : vector<2x32xf32>
      %189 = arith.mulf %182, %188 : vector<2x32xf32>
      %190 = arith.addf %185, %189 : vector<2x32xf32>
      %191 = math.tanh %190 : vector<2x32xf32>
      %cst_65 = arith.constant 1.000000e+00 : f32
      %192 = vector.broadcast %cst_65 : f32 to vector<2x32xf32>
      %193 = arith.subf %192, %183 : vector<2x32xf32>
      %194 = arith.mulf %193, %191 : vector<2x32xf32>
      %195 = arith.mulf %183, %165 : vector<2x32xf32>
      %196 = arith.addf %194, %195 : vector<2x32xf32>
      %c0_66 = arith.constant 0 : index
      %c2_67 = arith.constant 2 : index
      %c0_68 = arith.constant 0 : index
      %c0_69 = arith.constant 0 : index
      %197 = vector.load %arg5[%c0_66, %c2_67, %c0_68, %c0_69] : memref<1x8x2x32xf32, #tpu.memory_space<vmem>>, vector<1x1x2x32xf32>
      %198 = vector.shape_cast %197 : vector<1x1x2x32xf32> to vector<2x32xf32>
      %199 = vector.shape_cast %196 : vector<2x32xf32> to vector<1x1x2x32xf32>
      tpu.vector_store %arg5[%c0_66, %c2_67, %c0_68, %c0_69], %199 {strides = array<i32>} : memref<1x8x2x32xf32, #tpu.memory_space<vmem>>, vector<1x1x2x32xf32>,
      %c0_70 = arith.constant 0 : index
      %c1 = arith.constant 1 : index
      %c0_71 = arith.constant 0 : index
      %c0_72 = arith.constant 0 : index
      %200 = vector.load %arg2[%c0_70, %c1, %c0_71, %c0_72] : memref<1x8x2x96xbf16, #tpu.memory_space<vmem>>, vector<1x1x2x96xbf16>
      %201 = vector.shape_cast %200 : vector<1x1x2x96xbf16> to vector<2x96xbf16>
      %202 = arith.truncf %196 : vector<2x32xf32> to vector<2x32xbf16>
      %cst_73 = arith.constant dense<0.000000e+00> : vector<2x96xf32>
      %203 = tpu.matmul %202, %4, %cst_73 {dimension_numbers = #tpu.dot_dimension_numbers<[1], [0], [0], [1], [0, 0, 1, 1], [], []>} : vector<2x32xbf16>, vector<32x96xbf16>, vector<2x96xf32> -> vector<2x96xf32>
      %204 = vector.extract_strided_slice %201 {offsets = [0, 0], sizes = [2, 64], strides = [1, 1]} : vector<2x96xbf16> to vector<2x64xbf16>
      %205 = arith.extf %204 : vector<2x64xbf16> to vector<2x64xf32>
      %206 = vector.extract_strided_slice %203 {offsets = [0, 0], sizes = [2, 64], strides = [1, 1]} : vector<2x96xf32> to vector<2x64xf32>
      %207 = arith.addf %205, %206 : vector<2x64xf32>
      %208 = arith.negf %207 : vector<2x64xf32>
      %209 = math.exp %208 : vector<2x64xf32>
      %cst_74 = arith.constant 1.000000e+00 : f32
      %210 = vector.broadcast %cst_74 : f32 to vector<2x64xf32>
      %211 = arith.addf %210, %209 : vector<2x64xf32>
      %212 = arith.divf %210, %211 : vector<2x64xf32>
      %213 = vector.extract_strided_slice %212 {offsets = [0, 0], sizes = [2, 32], strides = [1, 1]} : vector<2x64xf32> to vector<2x32xf32>
      %214 = vector.extract_strided_slice %212 {offsets = [0, 32], sizes = [2, 32], strides = [1, 1]} : vector<2x64xf32> to vector<2x32xf32>
      %215 = vector.extract_strided_slice %201 {offsets = [0, 64], sizes = [2, 32], strides = [1, 1]} : vector<2x96xbf16> to vector<2x32xbf16>
      %216 = arith.extf %215 : vector<2x32xbf16> to vector<2x32xf32>
      %217 = vector.extract_strided_slice %203 {offsets = [0, 64], sizes = [2, 32], strides = [1, 1]} : vector<2x96xf32> to vector<2x32xf32>
      %218 = vector.broadcast %6 : vector<1x32xf32> to vector<2x32xf32>
      %219 = arith.addf %217, %218 : vector<2x32xf32>
      %220 = arith.mulf %213, %219 : vector<2x32xf32>
      %221 = arith.addf %216, %220 : vector<2x32xf32>
      %222 = math.tanh %221 : vector<2x32xf32>
      %cst_75 = arith.constant 1.000000e+00 : f32
      %223 = vector.broadcast %cst_75 : f32 to vector<2x32xf32>
      %224 = arith.subf %223, %214 : vector<2x32xf32>
      %225 = arith.mulf %224, %222 : vector<2x32xf32>
      %226 = arith.mulf %214, %196 : vector<2x32xf32>
      %227 = arith.addf %225, %226 : vector<2x32xf32>
      %c0_76 = arith.constant 0 : index
      %c1_77 = arith.constant 1 : index
      %c0_78 = arith.constant 0 : index
      %c0_79 = arith.constant 0 : index
      %228 = vector.load %arg5[%c0_76, %c1_77, %c0_78, %c0_79] : memref<1x8x2x32xf32, #tpu.memory_space<vmem>>, vector<1x1x2x32xf32>
      %229 = vector.shape_cast %228 : vector<1x1x2x32xf32> to vector<2x32xf32>
      %230 = vector.shape_cast %227 : vector<2x32xf32> to vector<1x1x2x32xf32>
      tpu.vector_store %arg5[%c0_76, %c1_77, %c0_78, %c0_79], %230 {strides = array<i32>} : memref<1x8x2x32xf32, #tpu.memory_space<vmem>>, vector<1x1x2x32xf32>,
      %c0_80 = arith.constant 0 : index
      %c0_81 = arith.constant 0 : index
      %c0_82 = arith.constant 0 : index
      %c0_83 = arith.constant 0 : index
      %231 = vector.load %arg2[%c0_80, %c0_81, %c0_82, %c0_83] : memref<1x8x2x96xbf16, #tpu.memory_space<vmem>>, vector<1x1x2x96xbf16>
      %232 = vector.shape_cast %231 : vector<1x1x2x96xbf16> to vector<2x96xbf16>
      %233 = arith.truncf %227 : vector<2x32xf32> to vector<2x32xbf16>
      %cst_84 = arith.constant dense<0.000000e+00> : vector<2x96xf32>
      %234 = tpu.matmul %233, %4, %cst_84 {dimension_numbers = #tpu.dot_dimension_numbers<[1], [0], [0], [1], [0, 0, 1, 1], [], []>} : vector<2x32xbf16>, vector<32x96xbf16>, vector<2x96xf32> -> vector<2x96xf32>
      %235 = vector.extract_strided_slice %232 {offsets = [0, 0], sizes = [2, 64], strides = [1, 1]} : vector<2x96xbf16> to vector<2x64xbf16>
      %236 = arith.extf %235 : vector<2x64xbf16> to vector<2x64xf32>
      %237 = vector.extract_strided_slice %234 {offsets = [0, 0], sizes = [2, 64], strides = [1, 1]} : vector<2x96xf32> to vector<2x64xf32>
      %238 = arith.addf %236, %237 : vector<2x64xf32>
      %239 = arith.negf %238 : vector<2x64xf32>
      %240 = math.exp %239 : vector<2x64xf32>
      %cst_85 = arith.constant 1.000000e+00 : f32
      %241 = vector.broadcast %cst_85 : f32 to vector<2x64xf32>
      %242 = arith.addf %241, %240 : vector<2x64xf32>
      %243 = arith.divf %241, %242 : vector<2x64xf32>
      %244 = vector.extract_strided_slice %243 {offsets = [0, 0], sizes = [2, 32], strides = [1, 1]} : vector<2x64xf32> to vector<2x32xf32>
      %245 = vector.extract_strided_slice %243 {offsets = [0, 32], sizes = [2, 32], strides = [1, 1]} : vector<2x64xf32> to vector<2x32xf32>
      %246 = vector.extract_strided_slice %232 {offsets = [0, 64], sizes = [2, 32], strides = [1, 1]} : vector<2x96xbf16> to vector<2x32xbf16>
      %247 = arith.extf %246 : vector<2x32xbf16> to vector<2x32xf32>
      %248 = vector.extract_strided_slice %234 {offsets = [0, 64], sizes = [2, 32], strides = [1, 1]} : vector<2x96xf32> to vector<2x32xf32>
      %249 = vector.broadcast %6 : vector<1x32xf32> to vector<2x32xf32>
      %250 = arith.addf %248, %249 : vector<2x32xf32>
      %251 = arith.mulf %244, %250 : vector<2x32xf32>
      %252 = arith.addf %247, %251 : vector<2x32xf32>
      %253 = math.tanh %252 : vector<2x32xf32>
      %cst_86 = arith.constant 1.000000e+00 : f32
      %254 = vector.broadcast %cst_86 : f32 to vector<2x32xf32>
      %255 = arith.subf %254, %245 : vector<2x32xf32>
      %256 = arith.mulf %255, %253 : vector<2x32xf32>
      %257 = arith.mulf %245, %227 : vector<2x32xf32>
      %258 = arith.addf %256, %257 : vector<2x32xf32>
      %c0_87 = arith.constant 0 : index
      %c0_88 = arith.constant 0 : index
      %c0_89 = arith.constant 0 : index
      %c0_90 = arith.constant 0 : index
      %259 = vector.load %arg5[%c0_87, %c0_88, %c0_89, %c0_90] : memref<1x8x2x32xf32, #tpu.memory_space<vmem>>, vector<1x1x2x32xf32>
      %260 = vector.shape_cast %259 : vector<1x1x2x32xf32> to vector<2x32xf32>
      %261 = vector.shape_cast %258 : vector<2x32xf32> to vector<1x1x2x32xf32>
      tpu.vector_store %arg5[%c0_87, %c0_88, %c0_89, %c0_90], %261 {strides = array<i32>} : memref<1x8x2x32xf32, #tpu.memory_space<vmem>>, vector<1x1x2x32xf32>,
      %c0_91 = arith.constant 0 : index
      %c0_92 = arith.constant 0 : index
      %262 = vector.load %arg6[%c0_91, %c0_92] : memref<2x32xf32, #tpu.memory_space<vmem>>, vector<2x32xf32>
      tpu.vector_store %arg6[%c0_91, %c0_92], %258 {strides = array<i32>} : memref<2x32xf32, #tpu.memory_space<vmem>>, vector<2x32xf32>,
    } else {
    }
    return
  }
  func.func @transform_0(%arg0: i32, %arg1: i32) -> (i32, i32, i32, i32) {
    %c1_i32 = arith.constant 1 : i32
    %0 = arith.subi %c1_i32, %arg0 : i32
    %1 = arith.muli %0, %arg1 : i32
    %c0_i32 = arith.constant 0 : i32
    %2 = arith.subi %c0_i32, %arg1 : i32
    %3 = arith.muli %arg0, %2 : i32
    %4 = arith.addi %1, %3 : i32
    %c0_i32_0 = arith.constant 0 : i32
    %c0_i32_1 = arith.constant 0 : i32
    %c0_i32_2 = arith.constant 0 : i32
    return %arg0, %4, %c0_i32_0, %c0_i32_1 : i32, i32, i32, i32
  }
  func.func @transform_1(%arg0: i32, %arg1: i32) -> (i32, i32, i32) {
    %c0_i32 = arith.constant 0 : i32
    %c0_i32_0 = arith.constant 0 : i32
    %c0_i32_1 = arith.constant 0 : i32
    return %arg0, %c0_i32, %c0_i32_0 : i32, i32, i32
  }
  func.func @transform_2(%arg0: i32, %arg1: i32) -> (i32, i32, i32) {
    %c0_i32 = arith.constant 0 : i32
    %c0_i32_0 = arith.constant 0 : i32
    %c0_i32_1 = arith.constant 0 : i32
    return %arg0, %c0_i32, %c0_i32_0 : i32, i32, i32
  }
  func.func @transform_3(%arg0: i32, %arg1: i32) -> (i32, i32, i32, i32) {
    %c1_i32 = arith.constant 1 : i32
    %0 = arith.subi %c1_i32, %arg0 : i32
    %1 = arith.muli %0, %arg1 : i32
    %c0_i32 = arith.constant 0 : i32
    %2 = arith.subi %c0_i32, %arg1 : i32
    %3 = arith.muli %arg0, %2 : i32
    %4 = arith.addi %1, %3 : i32
    %c0_i32_0 = arith.constant 0 : i32
    %c0_i32_1 = arith.constant 0 : i32
    %c0_i32_2 = arith.constant 0 : i32
    return %arg0, %4, %c0_i32_0, %c0_i32_1 : i32, i32, i32, i32
  }
}

module attributes {stable_mosaic.version = 11 : i64} {
  func.func @head_kernel(%arg0: i32, %arg1: memref<2x16x32xf32, #tpu.memory_space<vmem>>, %arg2: memref<2x32x16xbf16, #tpu.memory_space<vmem>>, %arg3: memref<1x16xf32, #tpu.memory_space<vmem>>, %arg4: memref<16x16xf32, #tpu.memory_space<vmem>>) attributes {dimension_semantics = [#tpu.dimension_semantics<parallel>], iteration_bounds = array<i64: 1>, scalar_prefetch = 0 : i64, scratch_operands = 0 : i64, tpu.core_type = #tpu.core_type<tc>, window_params = [{transform_indices = @transform_0, window_bounds = array<i64: 2, 16, 32>}, {pipeline_mode = #tpu.pipeline_mode<synchronous>, transform_indices = @transform_1, window_bounds = array<i64: 2, 32, 16>}, {pipeline_mode = #tpu.pipeline_mode<synchronous>, transform_indices = @transform_2, window_bounds = array<i64: 1, 16>}, {transform_indices = @transform_3, window_bounds = array<i64: 16, 16>}]} {
    %c0 = arith.constant 0 : index
    %c0_0 = arith.constant 0 : index
    %c0_1 = arith.constant 0 : index
    %0 = vector.load %arg1[%c0, %c0_0, %c0_1] : memref<2x16x32xf32, #tpu.memory_space<vmem>>, vector<1x16x32xf32>
    %1 = vector.shape_cast %0 : vector<1x16x32xf32> to vector<16x32xf32>
    %c1 = arith.constant 1 : index
    %c0_2 = arith.constant 0 : index
    %c0_3 = arith.constant 0 : index
    %2 = vector.load %arg1[%c1, %c0_2, %c0_3] : memref<2x16x32xf32, #tpu.memory_space<vmem>>, vector<1x16x32xf32>
    %3 = vector.shape_cast %2 : vector<1x16x32xf32> to vector<16x32xf32>
    %cst = arith.constant 0.000000e+00 : f32
    %4 = vector.broadcast %cst : f32 to vector<16x32xf32>
    %5 = arith.cmpf ogt, %1, %4 : vector<16x32xf32>
    %cst_4 = arith.constant 0.00999999977 : f32
    %6 = vector.broadcast %cst_4 : f32 to vector<16x32xf32>
    %7 = arith.mulf %6, %1 : vector<16x32xf32>
    %8 = arith.select %5, %1, %7 : vector<16x32xi1>, vector<16x32xf32>
    %9 = arith.truncf %8 : vector<16x32xf32> to vector<16x32xbf16>
    %cst_5 = arith.constant 0.000000e+00 : f32
    %10 = vector.broadcast %cst_5 : f32 to vector<16x32xf32>
    %11 = arith.cmpf ogt, %3, %10 : vector<16x32xf32>
    %cst_6 = arith.constant 0.00999999977 : f32
    %12 = vector.broadcast %cst_6 : f32 to vector<16x32xf32>
    %13 = arith.mulf %12, %3 : vector<16x32xf32>
    %14 = arith.select %11, %3, %13 : vector<16x32xi1>, vector<16x32xf32>
    %15 = arith.truncf %14 : vector<16x32xf32> to vector<16x32xbf16>
    %c0_7 = arith.constant 0 : index
    %c0_8 = arith.constant 0 : index
    %c0_9 = arith.constant 0 : index
    %16 = vector.load %arg2[%c0_7, %c0_8, %c0_9] : memref<2x32x16xbf16, #tpu.memory_space<vmem>>, vector<1x32x16xbf16>
    %17 = vector.shape_cast %16 : vector<1x32x16xbf16> to vector<32x16xbf16>
    %cst_10 = arith.constant dense<0.000000e+00> : vector<16x16xf32>
    %18 = tpu.matmul %9, %17, %cst_10 {dimension_numbers = #tpu.dot_dimension_numbers<[1], [0], [0], [1], [0, 0, 1, 1], [], []>} : vector<16x32xbf16>, vector<32x16xbf16>, vector<16x16xf32> -> vector<16x16xf32>
    %c1_11 = arith.constant 1 : index
    %c0_12 = arith.constant 0 : index
    %c0_13 = arith.constant 0 : index
    %19 = vector.load %arg2[%c1_11, %c0_12, %c0_13] : memref<2x32x16xbf16, #tpu.memory_space<vmem>>, vector<1x32x16xbf16>
    %20 = vector.shape_cast %19 : vector<1x32x16xbf16> to vector<32x16xbf16>
    %cst_14 = arith.constant dense<0.000000e+00> : vector<16x16xf32>
    %21 = tpu.matmul %15, %20, %cst_14 {dimension_numbers = #tpu.dot_dimension_numbers<[1], [0], [0], [1], [0, 0, 1, 1], [], []>} : vector<16x32xbf16>, vector<32x16xbf16>, vector<16x16xf32> -> vector<16x16xf32>
    %22 = arith.addf %18, %21 : vector<16x16xf32>
    %c0_15 = arith.constant 0 : index
    %c0_16 = arith.constant 0 : index
    %23 = vector.load %arg3[%c0_15, %c0_16] : memref<1x16xf32, #tpu.memory_space<vmem>>, vector<1x16xf32>
    %24 = vector.broadcast %23 : vector<1x16xf32> to vector<16x16xf32>
    %25 = arith.addf %22, %24 : vector<16x16xf32>
    %c0_17 = arith.constant 0 : index
    %c0_18 = arith.constant 0 : index
    %26 = vector.load %arg4[%c0_17, %c0_18] : memref<16x16xf32, #tpu.memory_space<vmem>>, vector<16x16xf32>
    tpu.vector_store %arg4[%c0_17, %c0_18], %25 {strides = array<i32>} : memref<16x16xf32, #tpu.memory_space<vmem>>, vector<16x16xf32>,
    return
  }
  func.func @transform_0(%arg0: i32) -> (i32, i32, i32) {
    %c0_i32 = arith.constant 0 : i32
    %c0_i32_0 = arith.constant 0 : i32
    %c0_i32_1 = arith.constant 0 : i32
    return %c0_i32, %arg0, %c0_i32_0 : i32, i32, i32
  }
  func.func @transform_1(%arg0: i32) -> (i32, i32, i32) {
    %c0_i32 = arith.constant 0 : i32
    %c0_i32_0 = arith.constant 0 : i32
    %c0_i32_1 = arith.constant 0 : i32
    %c0_i32_2 = arith.constant 0 : i32
    return %c0_i32, %c0_i32_0, %c0_i32_1 : i32, i32, i32
  }
  func.func @transform_2(%arg0: i32) -> (i32, i32) {
    %c0_i32 = arith.constant 0 : i32
    %c0_i32_0 = arith.constant 0 : i32
    %c0_i32_1 = arith.constant 0 : i32
    return %c0_i32, %c0_i32_0 : i32, i32
  }
  func.func @transform_3(%arg0: i32) -> (i32, i32) {
    %c0_i32 = arith.constant 0 : i32
    %c0_i32_0 = arith.constant 0 : i32
    return %arg0, %c0_i32 : i32, i32
  }
}

</mosaic_0001>

<llo_original>
// kernel: ffn_forward.5
$region0: #{ffn_forward.5}
  #allocation0 [shape = 'u32[]', space=smem, size = 0x4, offset = 0x4, fixed_abs, tag = 'smem constant byte address 0x4 - core index']
  #allocation1 [shape = 'u32[72,128]{1,0:T(1,128)}', space=vmem, size = 0x9000, scoped, tag = 'internal scratch']
  %s0 = inlined_call_operand.vmem [shape: f32[2,16,32], index: 0, kind: input, shape index: {}]
  %s1 = inlined_call_operand.vmem [shape: bf16[2,32,16], index: 1, kind: input, shape index: {}]
  %s2 = inlined_call_operand.vmem [shape: f32[1,16], index: 2, kind: input, shape index: {}]
  %s3 = inlined_call_operand.vmem [shape: f32[16,16], index: 3, kind: output, shape index: {}]
  %s4 = sld [smem:[#allocation0]]
  $region22: #{ffn_forward.5} parent=0
    _
  %s6 = ssub.s32 1, %s4
  %s7 = scalar_select 0, %s6, %s4
  // Predicated region
  $region2: #{ffn_forward.5} parent=0 // pred_check
    _
  $region3: #{ffn_forward.5} parent=0 // pred_check_branch
    %9 = sbr.rel (0) target = $region5
  $region4: #{ffn_forward.5} parent=0 // pred_region
    _
  $region5: #{ffn_forward.5} parent=0 // pred_fallthru
    _
  // Predicated region
  $region6: #{ffn_forward.5} parent=0 // pred_check
    _
  $region7: #{ffn_forward.5} parent=0 // pred_check_branch
    %11 = sbr.rel (0) target = $region9
  $region8: #{ffn_forward.5} parent=0 // pred_region
    _
  $region9: #{ffn_forward.5} parent=0 // pred_fallthru
    _
  // Predicated region
  $region10: #{ffn_forward.5} parent=0 // pred_check
    _
  $region11: #{ffn_forward.5} parent=0 // pred_check_branch
    %13 = sbr.rel (0) target = $region13
  $region12: #{ffn_forward.5} parent=0 // pred_region
    _
  $region13: #{ffn_forward.5} parent=0 // pred_fallthru
    _
  %v15 = vld [vmem:[%s0] sm:$0xff]
  %v16 = vld [vmem:[%s0 + $0x8] sm:$0xff]
  %s17 = scalar_lea.vmem %s0, 16
  %v18 = vld [vmem:[%s17] sm:$0xff]
  %v19 = vld [vmem:[%s17 + $0x8] sm:$0xff]
  %vm20 = vcmp.gt.f32.partialorder %v15, 0.0
  %vm21 = vcmp.gt.f32.partialorder %v16, 0.0
  %v22 = vmul.f32 %v15, 0.01
  %v23 = vmul.f32 %v16, 0.01
  %v24 = vsel %vm20, %v15, %v22
  %v25 = vsel %vm21, %v16, %v23
  %v26 = vpack.c.bf16 %v25, %v24
  %vm27 = vcmp.gt.f32.partialorder %v18, 0.0
  %vm28 = vcmp.gt.f32.partialorder %v19, 0.0
  %v29 = vmul.f32 %v18, 0.01
  %v30 = vmul.f32 %v19, 0.01
  %v31 = vsel %vm27, %v18, %v29
  %v32 = vsel %vm28, %v19, %v30
  %v33 = vpack.c.bf16 %v32, %v31
  %v34 = vld [vmem:[%s1] sm:$0xf]
  %v35 = vld [vmem:[%s1 + $0x4] sm:$0xf]
  %v36 = vld [vmem:[%s1 + $0x8] sm:$0xf]
  %v37 = vld [vmem:[%s1 + $0xc] sm:$0xf]
  %s38 = scalar_lea.vmem %s1, 16
  %v39 = vld [vmem:[%s38] sm:$0xf]
  %v40 = vld [vmem:[%s38 + $0x4] sm:$0xf]
  %v41 = vld [vmem:[%s38 + $0x8] sm:$0xf]
  %v42 = vld [vmem:[%s38 + $0xc] sm:$0xf]
  %v47 = vunpack.c.l.b16 %v39
  %v48 = vunpack.c.l.b16 %v40
  %v49 = vunpack.c.l.b16 %v41
  %v50 = vunpack.c.l.b16 %v42
  %v51 = vpack.c.b16 %v48, %v47
  %v52 = vpack.c.b16 %v50, %v49
  %vm55 = vcmask 261120
  %v57 = vsel %vm55, %v33, 0
  %59 = vmatpush.bf16.msra.mxu0 0
  %60 = vmatpush.bf16.msra.mxu0 0
  %61 = vmatpush.bf16.msra.mxu0 0
  %62 = vmatpush.bf16.msra.mxu0 0
  %63 = vmatpush.bf16.msra.mxu0 0
  %64 = vmatpush.bf16.msra.mxu0 0
  %65 = vmatpush.bf16.msra.mxu0 %v52
  %66 = vmatpush.bf16.msra.mxu0 %v51
  %67 = vmatmul.bf16.gmra.mxu0 %v57
  %v68 = vpop.f32.mrf.mxu0
  %v69 = vadd.f32 0.0, %v68
  %v70 = vpop.f32.mrf.mxu0
  %v71 = vadd.f32 0.0, %v70
  %72 = vdwg.mxu0
  %v77 = vunpack.c.l.b16 %v34
  %v78 = vunpack.c.l.b16 %v35
  %v79 = vunpack.c.l.b16 %v36
  %v80 = vunpack.c.l.b16 %v37
  %v81 = vpack.c.b16 %v78, %v77
  %v82 = vpack.c.b16 %v80, %v79
  %v86 = vsel %vm55, %v26, 0
  %88 = vmatpush.bf16.msra.mxu0 0
  %89 = vmatpush.bf16.msra.mxu0 0
  %90 = vmatpush.bf16.msra.mxu0 0
  %91 = vmatpush.bf16.msra.mxu0 0
  %92 = vmatpush.bf16.msra.mxu0 0
  %93 = vmatpush.bf16.msra.mxu0 0
  %94 = vmatpush.bf16.msra.mxu0 %v82
  %95 = vmatpush.bf16.msra.mxu0 %v81
  %96 = vmatmul.bf16.gmra.mxu0 %v86
  %v97 = vpop.f32.mrf.mxu0
  %v98 = vadd.f32 %v69, %v97
  %v99 = vpop.f32.mrf.mxu0
  %v100 = vadd.f32 %v71, %v99
  %101 = vdwg.mxu0
  %v102 = vld [vmem:[%s2] sm:$0x1]
  %v104 = vperm.slane %v102, 0
  %v106 = vadd.f32 %v98, %v104
  %v107 = vadd.f32 %v100, %v104
  %vm108 = vcmask 130048
  %109 = vst.msk [vmem:[%s3] sm:$0xff] %vm108, %v106
  %110 = vst.msk [vmem:[%s3 + $0x8] sm:$0xff] %vm108, %v107
  // Predicated region
  $region14: #{ffn_forward.5} parent=0 // pred_check
    _
  $region15: #{ffn_forward.5} parent=0 // pred_check_branch
    %112 = sbr.rel (0) target = $region17
  $region16: #{ffn_forward.5} parent=0 // pred_region
    _
  $region17: #{ffn_forward.5} parent=0 // pred_fallthru
    _
  // Predicated region
  $region18: #{ffn_forward.5} parent=0 // pred_check
    _
  $region19: #{ffn_forward.5} parent=0 // pred_check_branch
    %114 = sbr.rel (0) target = $region21
  $region20: #{ffn_forward.5} parent=0 // pred_region
    _
  $region21: #{ffn_forward.5} parent=0 // pred_fallthru
    _

// kernel: ffn_forward.3
$region0: #{ffn_forward.3}
  #allocation0 [shape = 'u32[]', space=smem, size = 0x4, offset = 0x4, fixed_abs, tag = 'smem constant byte address 0x4 - core index']
  #allocation1 [shape = 'u32[72,128]{1,0:T(1,128)}', space=vmem, size = 0x9000, scoped, tag = 'internal scratch']
  %s0 = inlined_call_operand.vmem [shape: f32[16,16], index: 0, kind: input, shape index: {}]
  %s1 = inlined_call_operand.vmem [shape: bf16[2,16,96], index: 1, kind: input, shape index: {}]
  %s2 = inlined_call_operand.vmem [shape: f32[2,1,96], index: 2, kind: input, shape index: {}]
  %s3 = inlined_call_operand.vmem [shape: bf16[2,16,96], index: 3, kind: output, shape index: {}]
  %s4 = sld [smem:[#allocation0]]
  $region45: #{ffn_forward.3} parent=0
    _
  %s6 = ssub.s32 1, %s4
  %s7 = scalar_select 0, %s6, %s4
  loop: start=0, step=1, limit=4
  $region2: #{ffn_forward.3} parent=0 // loop_pre_header
    _
  $region3: #{ffn_forward.3} parent=0 // loop_header
    %s9 = sphi 0, %s13
    %p10 = scmp.ge.s32.totalorder %s9, 4
    %s16 = sphi 0, %s35
    %s17 = sphi 0, %s31
    %s18 = sphi 0, %s27
    %s19 = sphi 0, %s16
    %s20 = sphi 0, %s17
    %s21 = sphi 0, %s18
    %s22 = sphi 0, %s19
    %s23 = sphi 0, %s20
    %s24 = sphi 0, %s21
    %s38 = sphi 0, %s40
    %s41 = sphi 0, %s38
    %s42 = sphi 0, %s41
    %s58 = sphi 0, %s42
    %s66 = sphi 0, %s68
    %s69 = sphi 0, %s66
    %s70 = sphi 0, %s69
    %s86 = sphi 0, %s70
    %s94 = sphi 0, %s96
    %s97 = sphi 0, %s94
    %s98 = sphi 0, %s97
    %s114 = sphi 0, %s98
    %s124 = sphi 0, %s126
    %s127 = sphi 0, %s124
    %s128 = sphi 0, %s127
    %s144 = sphi 0, %s128
  $region4: #{ffn_forward.3} parent=0 // loop_header_branch
    %12 = sbr.rel (%p10) target = $region8
  $region5: #{ffn_forward.3} parent=0 // loop_body
    %s14 = ssub.s32 %s9, 1
    %s15 = ssub.s32 %s9, 2
    %s25 = sadd.s32 1, %s18
    %p26 = scmp.ge.s32.totalorder %s25, 1
    %s27 = scalar_select %p26, 0, %s25
    %s28 = sadd.s32 1, %s17
    %s29 = scalar_select %p26, %s28, %s17
    %p30 = scmp.ge.s32.totalorder %s29, 1
    %s31 = scalar_select %p30, 0, %s29
    %s32 = sadd.s32 1, %s16
    %s33 = scalar_select %p30, %s32, %s16
    %p34 = scmp.ge.s32.totalorder %s33, 2
    %s35 = scalar_select %p34, 0, %s33
    %s36 = ssub.s32 %s18, %s27
    %p37 = scmp.eq.s32.totalorder %s36, 0
    %s39 = sadd.s32 %s38, 1
    %s40 = scalar_select %p37, %s38, %s39
    %p43 = pneg %p37
    %p44 = scmp.eq.s32.totalorder %s9, 1
    %p45 = por %p43, %p44
    %p46 = scmp.ne.s32.totalorder %s38, %s41
    %p47 = scmp.eq.s32.totalorder %s9, 0
    %p48 = por %p46, %p47
    %p49 = scmp.ne.s32.totalorder %s38, %s41
    %p50 = scmp.eq.s32.totalorder %s14, 1
    %p51 = por %p49, %p50
    %p52 = scmp.ne.s32.totalorder %s41, %s42
    %p53 = scmp.eq.s32.totalorder %s14, 0
    %p54 = por %p52, %p53
    %p55 = scmp.ne.s32.totalorder %s41, %s42
    %p56 = scmp.eq.s32.totalorder %s15, 1
    %p57 = por %p55, %p56
    %p59 = scmp.ne.s32.totalorder %s42, %s58
    %p60 = scmp.eq.s32.totalorder %s15, 0
    %p61 = por %p59, %p60
    %s62 = ssub.s32 %s16, %s35
    %s63 = ssub.s32 %s17, %s31
    %s64 = sor.u32 %s62, %s63
    %p65 = scmp.eq.s32.totalorder %s64, 0
    %s67 = sadd.s32 %s66, 1
    %s68 = scalar_select %p65, %s66, %s67
    %p71 = pneg %p65
    %p72 = scmp.eq.s32.totalorder %s9, 1
    %p73 = por %p71, %p72
    %p74 = scmp.ne.s32.totalorder %s66, %s69
    %p75 = scmp.eq.s32.totalorder %s9, 0
    %p76 = por %p74, %p75
    %p77 = scmp.ne.s32.totalorder %s66, %s69
    %p78 = scmp.eq.s32.totalorder %s14, 1
    %p79 = por %p77, %p78
    %p80 = scmp.ne.s32.totalorder %s69, %s70
    %p81 = scmp.eq.s32.totalorder %s14, 0
    %p82 = por %p80, %p81
    %p83 = scmp.ne.s32.totalorder %s69, %s70
    %p84 = scmp.eq.s32.totalorder %s15, 1
    %p85 = por %p83, %p84
    %p87 = scmp.ne.s32.totalorder %s70, %s86
    %p88 = scmp.eq.s32.totalorder %s15, 0
    %p89 = por %p87, %p88
    %s90 = ssub.s32 %s16, %s35
    %s91 = ssub.s32 %s17, %s31
    %s92 = sor.u32 %s90, %s91
    %p93 = scmp.eq.s32.totalorder %s92, 0
    %s95 = sadd.s32 %s94, 1
    %s96 = scalar_select %p93, %s94, %s95
    %p99 = pneg %p93
    %p100 = scmp.eq.s32.totalorder %s9, 1
    %p101 = por %p99, %p100
    %p102 = scmp.ne.s32.totalorder %s94, %s97
    %p103 = scmp.eq.s32.totalorder %s9, 0
    %p104 = por %p102, %p103
    %p105 = scmp.ne.s32.totalorder %s94, %s97
    %p106 = scmp.eq.s32.totalorder %s14, 1
    %p107 = por %p105, %p106
    %p108 = scmp.ne.s32.totalorder %s97, %s98
    %p109 = scmp.eq.s32.totalorder %s14, 0
    %p110 = por %p108, %p109
    %p111 = scmp.ne.s32.totalorder %s97, %s98
    %p112 = scmp.eq.s32.totalorder %s15, 1
    %p113 = por %p111, %p112
    %p115 = scmp.ne.s32.totalorder %s98, %s114
    %p116 = scmp.eq.s32.totalorder %s15, 0
    %p117 = por %p115, %p116
    %s118 = ssub.s32 %s16, %s35
    %s119 = ssub.s32 %s18, %s27
    %s120 = sor.u32 %s118, %s119
    %s121 = ssub.s32 %s17, %s31
    %s122 = sor.u32 %s120, %s121
    %p123 = scmp.eq.s32.totalorder %s122, 0
    %s125 = sadd.s32 %s124, 1
    %s126 = scalar_select %p123, %s124, %s125
    %p129 = pneg %p123
    %p130 = scmp.eq.s32.totalorder %s9, 1
    %p131 = por %p129, %p130
    %p132 = scmp.ne.s32.totalorder %s124, %s127
    %p133 = scmp.eq.s32.totalorder %s9, 0
    %p134 = por %p132, %p133
    %p135 = scmp.ne.s32.totalorder %s124, %s127
    %p136 = scmp.eq.s32.totalorder %s14, 1
    %p137 = por %p135, %p136
    %p138 = scmp.ne.s32.totalorder %s127, %s128
    %p139 = scmp.eq.s32.totalorder %s14, 0
    %p140 = por %p138, %p139
    %p141 = scmp.ne.s32.totalorder %s127, %s128
    %p142 = scmp.eq.s32.totalorder %s15, 1
    %p143 = por %p141, %p142
    %p145 = scmp.ne.s32.totalorder %s128, %s144
    %p146 = scmp.eq.s32.totalorder %s15, 0
    %p147 = por %p145, %p146
    %p148 = scmp.le.s32.totalorder 1, %s9
    %p149 = scmp.lt.s32.totalorder %s9, 3
    %p150 = pnand %p148, %p149
    %p151 = pneg %p150
    // Predicated region
    $region9: #{ffn_forward.3} parent=5 // pred_check
      _
    $region10: #{ffn_forward.3} parent=5 // pred_check_branch
      %153 = sbr.rel (%p150) target = $region12
    $region11: #{ffn_forward.3} parent=5 // pred_region
      %s154 = ssub.s32 %s9, 1
      // Predicated region
      $region13: #{ffn_forward.3} parent=11 // pred_check
        %p155 = pneg %p54
      $region14: #{ffn_forward.3} parent=11 // pred_check_branch
        %157 = sbr.rel (%p155) target = $region16
      $region15: #{ffn_forward.3} parent=11 // pred_region
        %s158 = smul.u32 2, %s21
        %p159 = scmp.lt.s32.totalorder %s158, 1
        %s160 = scalar_select %p159, %s158, 1
        %s161 = smul.addr %s160, 8
        %s162 = scalar_lea.vmem %s0, %s161
        %s163 = smul.u32 2, %s21
      $region16: #{ffn_forward.3} parent=11 // pred_fallthru
        _
      // Predicated region
      $region17: #{ffn_forward.3} parent=11 // pred_check
        %p164 = pneg %p82
      $region18: #{ffn_forward.3} parent=11 // pred_check_branch
        %166 = sbr.rel (%p164) target = $region20
      $region19: #{ffn_forward.3} parent=11 // pred_region
        %p167 = scmp.lt.s32.totalorder %s19, 1
        %s168 = scalar_select %p167, %s19, 1
        %p169 = scmp.lt.s32.totalorder %s20, 0
        %s170 = scalar_select %p169, %s20, 0
        %s171 = smul.addr %s168, 2
        %s172 = sadd.s32 %s170, %s171
        %s173 = smul.addr %s172, 4
        %s174 = scalar_lea.vmem %s1, %s173
      $region20: #{ffn_forward.3} parent=11 // pred_fallthru
        _
      // Predicated region
      $region21: #{ffn_forward.3} parent=11 // pred_check
        %p175 = pneg %p110
      $region22: #{ffn_forward.3} parent=11 // pred_check_branch
        %177 = sbr.rel (%p175) target = $region24
      $region23: #{ffn_forward.3} parent=11 // pred_region
        %p178 = scmp.lt.s32.totalorder %s19, 1
        %s179 = scalar_select %p178, %s19, 1
        %p180 = scmp.lt.s32.totalorder %s20, 0
        %s181 = scalar_select %p180, %s20, 0
        %s182 = sadd.s32 %s181, %s179
        %s183 = scalar_lea.vmem %s2, %s182
      $region24: #{ffn_forward.3} parent=11 // pred_fallthru
        _
    $region12: #{ffn_forward.3} parent=5 // pred_fallthru
      _
    %p184 = scmp.lt.s32.totalorder %s9, 2
    // Predicated region
    $region25: #{ffn_forward.3} parent=5 // pred_check
      %p185 = pneg %p184
    $region26: #{ffn_forward.3} parent=5 // pred_check_branch
      %187 = sbr.rel (%p185) target = $region28
    $region27: #{ffn_forward.3} parent=5 // pred_region
      _
    $region28: #{ffn_forward.3} parent=5 // pred_fallthru
      _
    %p188 = scmp.le.s32.totalorder 1, %s9
    %p189 = scmp.lt.s32.totalorder %s9, 3
    %p190 = pnand %p188, %p189
    %p191 = pneg %p190
    // Predicated region
    $region29: #{ffn_forward.3} parent=5 // pred_check
      _
    $region30: #{ffn_forward.3} parent=5 // pred_check_branch
      %193 = sbr.rel (%p190) target = $region32
    $region31: #{ffn_forward.3} parent=5 // pred_region
      %s194 = ssub.s32 %s9, 1
      %s195 = smul.u32 2, %s21
      %p196 = scmp.lt.s32.totalorder %s195, 1
      %s197 = scalar_select %p196, %s195, 1
      %s198 = smul.addr %s197, 8
      %s199 = scalar_lea.vmem %s0, %s198
      %p200 = pneg %p54
      %p201 = pneg %p51
      %p202 = scmp.lt.s32.totalorder %s19, 1
      %s203 = scalar_select %p202, %s19, 1
      %p204 = scmp.lt.s32.totalorder %s20, 0
      %s205 = scalar_select %p204, %s20, 0
      %s206 = smul.addr %s203, 2
      %s207 = sadd.s32 %s205, %s206
      %s208 = smul.addr %s207, 4
      %s209 = scalar_lea.vmem %s1, %s208
      %p210 = pneg %p82
      %p211 = pneg %p79
      %p212 = scmp.lt.s32.totalorder %s19, 1
      %s213 = scalar_select %p212, %s19, 1
      %p214 = scmp.lt.s32.totalorder %s20, 0
      %s215 = scalar_select %p214, %s20, 0
      %s216 = sadd.s32 %s215, %s213
      %s217 = scalar_lea.vmem %s2, %s216
      %p218 = pneg %p110
      %p219 = pneg %p107
      %p220 = pneg %p140
      %p221 = pneg %p137
      %s222 = smul.u32 2, %s21
      %p223 = scmp.lt.s32.totalorder %s19, 1
      %s224 = scalar_select %p223, %s19, 1
      %p225 = scmp.lt.s32.totalorder %s222, 1
      %s226 = scalar_select %p225, %s222, 1
      %p227 = scmp.lt.s32.totalorder %s20, 0
      %s228 = scalar_select %p227, %s20, 0
      %s229 = sadd.s32 %s228, %s226
      %s230 = smul.addr %s224, 2
      %s231 = sadd.s32 %s229, %s230
      %s232 = smul.addr %s231, 4
      %s233 = scalar_lea.vmem %s3, %s232
      %s234 = smul.u32 2, %s21
      %p235 = scmp.lt.s32.totalorder %s234, 1
      %s236 = scalar_select %p235, %s234, 1
      %s237 = smul.addr %s236, 8
      %s238 = scalar_lea.vmem %s0, %s237
      %s239 = smul.u32 2, %s21
      %p240 = scmp.lt.s32.totalorder %s19, 1
      %s241 = scalar_select %p240, %s19, 1
      %p242 = scmp.lt.s32.totalorder %s20, 0
      %s243 = scalar_select %p242, %s20, 0
      %s244 = smul.addr %s241, 2
      %s245 = sadd.s32 %s243, %s244
      %s246 = smul.addr %s245, 4
      %s247 = scalar_lea.vmem %s1, %s246
      %p248 = scmp.lt.s32.totalorder %s19, 1
      %s249 = scalar_select %p248, %s19, 1
      %p250 = scmp.lt.s32.totalorder %s20, 0
      %s251 = scalar_select %p250, %s20, 0
      %s252 = sadd.s32 %s251, %s249
      %s253 = scalar_lea.vmem %s2, %s252
      %s254 = smul.u32 2, %s21
      %p255 = scmp.lt.s32.totalorder %s19, 1
      %s256 = scalar_select %p255, %s19, 1
      %p257 = scmp.lt.s32.totalorder %s254, 1
      %s258 = scalar_select %p257, %s254, 1
      %p259 = scmp.lt.s32.totalorder %s20, 0
      %s260 = scalar_select %p259, %s20, 0
      %s261 = sadd.s32 %s260, %s258
      %s262 = smul.addr %s256, 2
      %s263 = sadd.s32 %s261, %s262
      %s264 = smul.addr %s263, 4
      %s265 = scalar_lea.vmem %s3, %s264
      %s266 = smul.u32 2, %s21
      %v268 = vld [vmem:[%s238] sm:$0xff]
      %v269 = vld [vmem:[%s238 + $0x8] sm:$0xff]
      %v270 = vpack.c.bf16 %v269, %v268
      %v271 = vld [vmem:[%s247] sm:$0xf]
      %v272 = vld [vmem:[%s247 + $0x4] sm:$0xf]
      %v273 = vld [vmem:[%s253] sm:$0x1]
      %v275 = vperm.slane %v273, 0
      %v279 = vunpack.c.l.b16 %v271
      %v280 = vunpack.c.l.b16 %v272
      %v281 = vpack.c.b16 %v280, %v279
      %vm283 = vcmask 130048
      %v285 = vsel %vm283, %v270, 0
      %287 = vmatpush.bf16.msra.mxu0 0
      %288 = vmatpush.bf16.msra.mxu0 0
      %289 = vmatpush.bf16.msra.mxu0 0
      %290 = vmatpush.bf16.msra.mxu0 0
      %291 = vmatpush.bf16.msra.mxu0 0
      %292 = vmatpush.bf16.msra.mxu0 0
      %293 = vmatpush.bf16.msra.mxu0 0
      %294 = vmatpush.bf16.msra.mxu0 %v281
      %295 = vmatmul.bf16.gmra.mxu0 %v285
      %v296 = vpop.f32.mrf.mxu0
      %v297 = vadd.f32 %v275, %v296
      %v298 = vpop.f32.mrf.mxu0
      %v299 = vadd.f32 %v275, %v298
      %300 = vdwg.mxu0
      %v301 = vpack.c.bf16 %v297, %v297
      %v302 = vpack.c.bf16 %v299, %v299
      %vm303 = vcmask 781312
      %304 = vst.msk [vmem:[%s265] sm:$0xf] %vm303, %v301
      %305 = vst.msk [vmem:[%s265 + $0x4] sm:$0xf] %vm303, %v302
      %s306 = smul.u32 2, %s21
      %p307 = scmp.lt.s32.totalorder %s19, 1
      %s308 = scalar_select %p307, %s19, 1
      %p309 = scmp.lt.s32.totalorder %s306, 1
      %s310 = scalar_select %p309, %s306, 1
      %p311 = scmp.lt.s32.totalorder %s20, 0
      %s312 = scalar_select %p311, %s20, 0
      %s313 = sadd.s32 %s312, %s310
      %s314 = smul.addr %s308, 2
      %s315 = sadd.s32 %s313, %s314
      %s316 = smul.addr %s315, 4
      %s317 = scalar_lea.vmem %s3, %s316
      // Predicated region
      $region33: #{ffn_forward.3} parent=31 // pred_check
        %p318 = pneg %p137
      $region34: #{ffn_forward.3} parent=31 // pred_check_branch
        %320 = sbr.rel (%p318) target = $region36
      $region35: #{ffn_forward.3} parent=31 // pred_region
        %s321 = smul.u32 2, %s21
      $region36: #{ffn_forward.3} parent=31 // pred_fallthru
        _
    $region32: #{ffn_forward.3} parent=5 // pred_fallthru
      _
    %p322 = scmp.le.s32.totalorder 2, %s9
    // Predicated region
    $region37: #{ffn_forward.3} parent=5 // pred_check
      %p323 = pneg %p322
    $region38: #{ffn_forward.3} parent=5 // pred_check_branch
      %325 = sbr.rel (%p323) target = $region40
    $region39: #{ffn_forward.3} parent=5 // pred_region
      %s326 = ssub.s32 %s9, 2
      // Predicated region
      $region41: #{ffn_forward.3} parent=39 // pred_check
        %p327 = pneg %p143
      $region42: #{ffn_forward.3} parent=39 // pred_check_branch
        %329 = sbr.rel (%p327) target = $region44
      $region43: #{ffn_forward.3} parent=39 // pred_region
        %s330 = smul.u32 2, %s24
        %p331 = scmp.lt.s32.totalorder %s22, 1
        %s332 = scalar_select %p331, %s22, 1
        %p333 = scmp.lt.s32.totalorder %s330, 1
        %s334 = scalar_select %p333, %s330, 1
        %p335 = scmp.lt.s32.totalorder %s23, 0
        %s336 = scalar_select %p335, %s23, 0
        %s337 = sadd.s32 %s336, %s334
        %s338 = smul.addr %s332, 2
        %s339 = sadd.s32 %s337, %s338
        %s340 = smul.addr %s339, 4
        %s341 = scalar_lea.vmem %s3, %s340
      $region44: #{ffn_forward.3} parent=39 // pred_fallthru
        _
    $region40: #{ffn_forward.3} parent=5 // pred_fallthru
      _
  $region6: #{ffn_forward.3} parent=0 // loop_footer
    %s13 = sadd.s32 1, %s9
  $region7: #{ffn_forward.3} parent=0 // loop_footer_branch
    %8 = sbr.rel target = $region3
  $region8: #{ffn_forward.3} parent=0 // loop_exit
    _

// kernel: ffn_forward.4
$region0: #{ffn_forward.4}
  #allocation0 [shape = 'u32[]', space=smem, size = 0x4, offset = 0x4, fixed_abs, tag = 'smem constant byte address 0x4 - core index']
  #allocation1 [shape = 'u32[72,128]{1,0:T(1,128)}', space=vmem, size = 0x9000, scoped, tag = 'internal scratch']
  #allocation2 [shape = 'f32[2,32]{1,0:T(2,128)}', space=vmem, size = 0x400, scoped, tag = 'scratch operand']
  %s0 = inlined_call_operand.vmem [shape: bf16[2,8,2,96], index: 0, kind: input, shape index: {}]
  %s1 = inlined_call_operand.hbm [shape: bf16[2,32,96], index: 1, kind: input, shape index: {}]
  %s2 = inlined_call_operand.vmem [shape: f32[2,1,32], index: 2, kind: input, shape index: {}]
  %s3 = inlined_call_operand.vmem [shape: f32[2,8,2,32], index: 3, kind: output, shape index: {}]
  %s4 = sld [smem:[#allocation0]]
  $region61: #{ffn_forward.4} parent=0
    _
  %s6 = ssub.s32 1, %s4
  %s7 = scalar_select 0, %s6, %s4
  $region1: #{ffn_forward.4} parent=0
    #allocation3 [shape = 'u8[8192]{0}', space=vmem, size = 0x2000, scoped, tag = 'input window, operand 1, single buffered']
    #allocation4 [shape = 's32[2]{0}', space=sflag, size = 0x8, scoped, tag = 'scoped memory for ffn_forward.4']
    %8 = vsyncpa [#allocation4], 0
    loop: start=0, step=1, limit=4
    $region2: #{ffn_forward.4} parent=1 // loop_pre_header
      _
    $region3: #{ffn_forward.4} parent=1 // loop_header
      %s10 = sphi 0, %s14
      %p11 = scmp.ge.s32.totalorder %s10, 4
      %s17 = sphi 0, %s29
      %s18 = sphi 0, %s25
      %s19 = sphi 0, %s17
      %s20 = sphi 0, %s18
      %s21 = sphi 0, %s19
      %s22 = sphi 0, %s20
      %s44 = sphi 0, %s46
      %s47 = sphi 0, %s44
      %s48 = sphi 0, %s47
      %s64 = sphi 0, %s48
      %s70 = sphi 0, %s72
      %s73 = sphi 0, %s70
      %s74 = sphi 0, %s73
      %s90 = sphi 0, %s74
      %s96 = sphi 0, %s98
      %s99 = sphi 0, %s96
      %s100 = sphi 0, %s99
      %s116 = sphi 0, %s100
      %s134 = sphi 0, %s136
      %s137 = sphi 0, %s134
      %s138 = sphi 0, %s137
      %s154 = sphi 0, %s138
    $region4: #{ffn_forward.4} parent=1 // loop_header_branch
      %13 = sbr.rel (%p11) target = $region8
    $region5: #{ffn_forward.4} parent=1 // loop_body
      %s15 = ssub.s32 %s10, 1
      %s16 = ssub.s32 %s10, 2
      %s23 = sadd.s32 1, %s18
      %p24 = scmp.ge.s32.totalorder %s23, 1
      %s25 = scalar_select %p24, 0, %s23
      %s26 = sadd.s32 1, %s17
      %s27 = scalar_select %p24, %s26, %s17
      %p28 = scmp.ge.s32.totalorder %s27, 2
      %s29 = scalar_select %p28, 0, %s27
      %s30 = ssub.s32 1, %s17
      %s31 = smul.u32 %s30, %s18
      %s32 = ssub.s32 0, %s18
      %s33 = smul.u32 %s17, %s32
      %s34 = sadd.s32 %s31, %s33
      %s35 = ssub.s32 1, %s29
      %s36 = smul.u32 %s35, %s25
      %s37 = ssub.s32 0, %s25
      %s38 = smul.u32 %s29, %s37
      %s39 = sadd.s32 %s36, %s38
      %s40 = ssub.s32 %s17, %s29
      %s41 = ssub.s32 %s34, %s39
      %s42 = sor.u32 %s40, %s41
      %p43 = scmp.eq.s32.totalorder %s42, 0
      %s45 = sadd.s32 %s44, 1
      %s46 = scalar_select %p43, %s44, %s45
      %p49 = pneg %p43
      %p50 = scmp.eq.s32.totalorder %s10, 1
      %p51 = por %p49, %p50
      %p52 = scmp.ne.s32.totalorder %s44, %s47
      %p53 = scmp.eq.s32.totalorder %s10, 0
      %p54 = por %p52, %p53
      %p55 = scmp.ne.s32.totalorder %s44, %s47
      %p56 = scmp.eq.s32.totalorder %s15, 1
      %p57 = por %p55, %p56
      %p58 = scmp.ne.s32.totalorder %s47, %s48
      %p59 = scmp.eq.s32.totalorder %s15, 0
      %p60 = por %p58, %p59
      %p61 = scmp.ne.s32.totalorder %s47, %s48
      %p62 = scmp.eq.s32.totalorder %s16, 1
      %p63 = por %p61, %p62
      %p65 = scmp.ne.s32.totalorder %s48, %s64
      %p66 = scmp.eq.s32.totalorder %s16, 0
      %p67 = por %p65, %p66
      %s68 = ssub.s32 %s17, %s29
      %p69 = scmp.eq.s32.totalorder %s68, 0
      %s71 = sadd.s32 %s70, 1
      %s72 = scalar_select %p69, %s70, %s71
      %p75 = pneg %p69
      %p76 = scmp.eq.s32.totalorder %s10, 1
      %p77 = por %p75, %p76
      %p78 = scmp.ne.s32.totalorder %s70, %s73
      %p79 = scmp.eq.s32.totalorder %s10, 0
      %p80 = por %p78, %p79
      %p81 = scmp.ne.s32.totalorder %s70, %s73
      %p82 = scmp.eq.s32.totalorder %s15, 1
      %p83 = por %p81, %p82
      %p84 = scmp.ne.s32.totalorder %s73, %s74
      %p85 = scmp.eq.s32.totalorder %s15, 0
      %p86 = por %p84, %p85
      %p87 = scmp.ne.s32.totalorder %s73, %s74
      %p88 = scmp.eq.s32.totalorder %s16, 1
      %p89 = por %p87, %p88
      %p91 = scmp.ne.s32.totalorder %s74, %s90
      %p92 = scmp.eq.s32.totalorder %s16, 0
      %p93 = por %p91, %p92
      %s94 = ssub.s32 %s17, %s29
      %p95 = scmp.eq.s32.totalorder %s94, 0
      %s97 = sadd.s32 %s96, 1
      %s98 = scalar_select %p95, %s96, %s97
      %p101 = pneg %p95
      %p102 = scmp.eq.s32.totalorder %s10, 1
      %p103 = por %p101, %p102
      %p104 = scmp.ne.s32.totalorder %s96, %s99
      %p105 = scmp.eq.s32.totalorder %s10, 0
      %p106 = por %p104, %p105
      %p107 = scmp.ne.s32.totalorder %s96, %s99
      %p108 = scmp.eq.s32.totalorder %s15, 1
      %p109 = por %p107, %p108
      %p110 = scmp.ne.s32.totalorder %s99, %s100
      %p111 = scmp.eq.s32.totalorder %s15, 0
      %p112 = por %p110, %p111
      %p113 = scmp.ne.s32.totalorder %s99, %s100
      %p114 = scmp.eq.s32.totalorder %s16, 1
      %p115 = por %p113, %p114
      %p117 = scmp.ne.s32.totalorder %s100, %s116
      %p118 = scmp.eq.s32.totalorder %s16, 0
      %p119 = por %p117, %p118
      %s120 = ssub.s32 1, %s17
      %s121 = smul.u32 %s120, %s18
      %s122 = ssub.s32 0, %s18
      %s123 = smul.u32 %s17, %s122
      %s124 = sadd.s32 %s121, %s123
      %s125 = ssub.s32 1, %s29
      %s126 = smul.u32 %s125, %s25
      %s127 = ssub.s32 0, %s25
      %s128 = smul.u32 %s29, %s127
      %s129 = sadd.s32 %s126, %s128
      %s130 = ssub.s32 %s17, %s29
      %s131 = ssub.s32 %s124, %s129
      %s132 = sor.u32 %s130, %s131
      %p133 = scmp.eq.s32.totalorder %s132, 0
      %s135 = sadd.s32 %s134, 1
      %s136 = scalar_select %p133, %s134, %s135
      %p139 = pneg %p133
      %p140 = scmp.eq.s32.totalorder %s10, 1
      %p141 = por %p139, %p140
      %p142 = scmp.ne.s32.totalorder %s134, %s137
      %p143 = scmp.eq.s32.totalorder %s10, 0
      %p144 = por %p142, %p143
      %p145 = scmp.ne.s32.totalorder %s134, %s137
      %p146 = scmp.eq.s32.totalorder %s15, 1
      %p147 = por %p145, %p146
      %p148 = scmp.ne.s32.totalorder %s137, %s138
      %p149 = scmp.eq.s32.totalorder %s15, 0
      %p150 = por %p148, %p149
      %p151 = scmp.ne.s32.totalorder %s137, %s138
      %p152 = scmp.eq.s32.totalorder %s16, 1
      %p153 = por %p151, %p152
      %p155 = scmp.ne.s32.totalorder %s138, %s154
      %p156 = scmp.eq.s32.totalorder %s16, 0
      %p157 = por %p155, %p156
      %p158 = scmp.le.s32.totalorder 1, %s10
      %p159 = scmp.lt.s32.totalorder %s10, 3
      %p160 = pnand %p158, %p159
      %p161 = pneg %p160
      // Predicated region
      $region9: #{ffn_forward.4} parent=5 // pred_check
        _
      $region10: #{ffn_forward.4} parent=5 // pred_check_branch
        %163 = sbr.rel (%p160) target = $region12
      $region11: #{ffn_forward.4} parent=5 // pred_region
        %s164 = ssub.s32 %s10, 1
        // Predicated region
        $region13: #{ffn_forward.4} parent=11 // pred_check
          %p165 = pneg %p86
        $region14: #{ffn_forward.4} parent=11 // pred_check_branch
          %167 = sbr.rel (%p165) target = $region16
        $region15: #{ffn_forward.4} parent=11 // pred_region
          %169 = vsyncadd [#allocation4], 0
          %s170 = smul.addr %s19, 4
          %s171 = smul.addr %s170, 4
          %s172 = scalar_lea.hbm %s1, %s171
          %s173 = sshll.u32 %s172, 4
          %s174 = int_to_ptr.hbm [resolvable:$true] %s173
          %s175 = sshll.u32 [#allocation3], 4
          %s176 = int_to_ptr.vmem [resolvable:$true] %s175
          %181 = dma.hbm_to_vmem [thread:$0]  %s174, 256, %s176, [#allocation4], 64, 64, 4
        $region16: #{ffn_forward.4} parent=11 // pred_fallthru
          _
        // Predicated region
        $region17: #{ffn_forward.4} parent=11 // pred_check
          %p182 = pneg %p112
        $region18: #{ffn_forward.4} parent=11 // pred_check_branch
          %184 = sbr.rel (%p182) target = $region20
        $region19: #{ffn_forward.4} parent=11 // pred_region
          %p185 = scmp.lt.s32.totalorder %s19, 1
          %s186 = scalar_select %p185, %s19, 1
          %s187 = scalar_lea.vmem %s2, %s186
        $region20: #{ffn_forward.4} parent=11 // pred_fallthru
          _
      $region12: #{ffn_forward.4} parent=5 // pred_fallthru
        _
      %p188 = scmp.lt.s32.totalorder %s10, 2
      // Predicated region
      $region21: #{ffn_forward.4} parent=5 // pred_check
        %p189 = pneg %p188
      $region22: #{ffn_forward.4} parent=5 // pred_check_branch
        %191 = sbr.rel (%p189) target = $region24
      $region23: #{ffn_forward.4} parent=5 // pred_region
        // Predicated region
        $region25: #{ffn_forward.4} parent=23 // pred_check
          %p192 = pneg %p54
        $region26: #{ffn_forward.4} parent=23 // pred_check_branch
          %194 = sbr.rel (%p192) target = $region28
        $region27: #{ffn_forward.4} parent=23 // pred_region
          %s195 = ssub.s32 1, %s17
          %s196 = smul.u32 %s195, %s18
          %s197 = ssub.s32 0, %s18
          %s198 = smul.u32 %s17, %s197
          %s199 = sadd.s32 %s196, %s198
          %s200 = smul.u32 8, %s199
          %p201 = scmp.lt.s32.totalorder %s17, 1
          %s202 = scalar_select %p201, %s17, 1
          %p203 = scmp.lt.s32.totalorder %s200, 7
          %s204 = scalar_select %p203, %s200, 7
          %s205 = smul.addr %s202, 8
          %s206 = sadd.s32 %s204, %s205
          %s207 = scalar_lea.vmem %s0, %s206
          %s208 = ssub.s32 1, %s17
          %s209 = smul.u32 %s208, %s18
          %s210 = ssub.s32 0, %s18
          %s211 = smul.u32 %s17, %s210
          %s212 = sadd.s32 %s209, %s211
          %s213 = smul.u32 8, %s212
        $region28: #{ffn_forward.4} parent=23 // pred_fallthru
          _
      $region24: #{ffn_forward.4} parent=5 // pred_fallthru
        _
      %p214 = scmp.le.s32.totalorder 1, %s10
      %p215 = scmp.lt.s32.totalorder %s10, 3
      %p216 = pnand %p214, %p215
      %p217 = pneg %p216
      // Predicated region
      $region29: #{ffn_forward.4} parent=5 // pred_check
        _
      $region30: #{ffn_forward.4} parent=5 // pred_check_branch
        %219 = sbr.rel (%p216) target = $region32
      $region31: #{ffn_forward.4} parent=5 // pred_region
        %s220 = ssub.s32 %s10, 1
        // Predicated region
        $region33: #{ffn_forward.4} parent=31 // pred_check
          %p221 = pneg %p86
        $region34: #{ffn_forward.4} parent=31 // pred_check_branch
          %223 = sbr.rel (%p221) target = $region36
        $region35: #{ffn_forward.4} parent=31 // pred_region
          %225 = dma.done [#allocation4], 256
        $region36: #{ffn_forward.4} parent=31 // pred_fallthru
          _
        %s226 = ssub.s32 1, %s19
        %s227 = smul.u32 %s226, %s20
        %s228 = ssub.s32 0, %s20
        %s229 = smul.u32 %s19, %s228
        %s230 = sadd.s32 %s227, %s229
        %s231 = smul.u32 8, %s230
        %p232 = scmp.lt.s32.totalorder %s19, 1
        %s233 = scalar_select %p232, %s19, 1
        %p234 = scmp.lt.s32.totalorder %s231, 7
        %s235 = scalar_select %p234, %s231, 7
        %s236 = smul.addr %s233, 8
        %s237 = sadd.s32 %s235, %s236
        %s238 = scalar_lea.vmem %s0, %s237
        %p239 = pneg %p60
        %p240 = pneg %p57
        %p241 = pneg %p86
        %p242 = pneg %p83
        %p243 = scmp.lt.s32.totalorder %s19, 1
        %s244 = scalar_select %p243, %s19, 1
        %s245 = scalar_lea.vmem %s2, %s244
        %p246 = pneg %p112
        %p247 = pneg %p109
        %p248 = pneg %p150
        %p249 = pneg %p147
        %s250 = ssub.s32 1, %s19
        %s251 = smul.u32 %s250, %s20
        %s252 = ssub.s32 0, %s20
        %s253 = smul.u32 %s19, %s252
        %s254 = sadd.s32 %s251, %s253
        %s255 = smul.u32 8, %s254
        %p256 = scmp.lt.s32.totalorder %s19, 1
        %s257 = scalar_select %p256, %s19, 1
        %p258 = scmp.lt.s32.totalorder %s255, 7
        %s259 = scalar_select %p258, %s255, 7
        %s260 = smul.addr %s257, 8
        %s261 = sadd.s32 %s259, %s260
        %s262 = smul.addr %s261, 2
        %s263 = scalar_lea.vmem %s3, %s262
        %s264 = ssub.s32 1, %s19
        %s265 = smul.u32 %s264, %s20
        %s266 = ssub.s32 0, %s20
        %s267 = smul.u32 %s19, %s266
        %s268 = sadd.s32 %s265, %s267
        %s269 = smul.u32 8, %s268
        %p270 = scmp.lt.s32.totalorder %s19, 1
        %s271 = scalar_select %p270, %s19, 1
        %p272 = scmp.lt.s32.totalorder %s269, 7
        %s273 = scalar_select %p272, %s269, 7
        %s274 = smul.addr %s271, 8
        %s275 = sadd.s32 %s273, %s274
        %s276 = scalar_lea.vmem %s0, %s275
        %s277 = ssub.s32 1, %s19
        %s278 = smul.u32 %s277, %s20
        %s279 = ssub.s32 0, %s20
        %s280 = smul.u32 %s19, %s279
        %s281 = sadd.s32 %s278, %s280
        %s282 = smul.u32 8, %s281
        %p283 = scmp.lt.s32.totalorder %s19, 1
        %s284 = scalar_select %p283, %s19, 1
        %s285 = scalar_lea.vmem %s2, %s284
        %s286 = ssub.s32 1, %s19
        %s287 = smul.u32 %s286, %s20
        %s288 = ssub.s32 0, %s20
        %s289 = smul.u32 %s19, %s288
        %s290 = sadd.s32 %s287, %s289
        %s291 = smul.u32 8, %s290
        %p292 = scmp.lt.s32.totalorder %s19, 1
        %s293 = scalar_select %p292, %s19, 1
        %p294 = scmp.lt.s32.totalorder %s291, 7
        %s295 = scalar_select %p294, %s291, 7
        %s296 = smul.addr %s293, 8
        %s297 = sadd.s32 %s295, %s296
        %s298 = smul.addr %s297, 2
        %s299 = scalar_lea.vmem %s3, %s298
        %s300 = ssub.s32 1, %s19
        %s301 = smul.u32 %s300, %s20
        %s302 = ssub.s32 0, %s20
        %s303 = smul.u32 %s19, %s302
        %s304 = sadd.s32 %s301, %s303
        %s305 = smul.u32 8, %s304
        %p307 = scmp.eq.s32.totalorder %s20, 0
        // Predicated region
        $region37: #{ffn_forward.4} parent=31 // pred_check
          %p308 = pneg %p307
        $region38: #{ffn_forward.4} parent=31 // pred_check_branch
          %310 = sbr.rel (%p308) target = $region40
        $region39: #{ffn_forward.4} parent=31 // pred_region
          %vm311 = vcmask 254976
          %312 = vst.msk [vmem:[#allocation2] sm:$0x3] %vm311, 0.0
        $region40: #{ffn_forward.4} parent=31 // pred_fallthru
          _
        %v313 = vld [vmem:[#allocation3] sm:$0xf]
        %v314 = vld [vmem:[#allocation3 + $0x4] sm:$0xf]
        %v315 = vld [vmem:[#allocation3 + $0x8] sm:$0xf]
        %v316 = vld [vmem:[#allocation3 + $0xc] sm:$0xf]
        %v317 = vld [vmem:[%s285] sm:$0x1]
        %p318 = scmp.eq.s32.totalorder %s19, 0
        // Predicated region
        $region41: #{ffn_forward.4} parent=31 // pred_check
          %p319 = pneg %p318
        $region42: #{ffn_forward.4} parent=31 // pred_check_branch
          %321 = sbr.rel (%p319) target = $region44
        $region43: #{ffn_forward.4} parent=31 // pred_region
          %v322 = vld [vmem:[#allocation2] sm:$0x3]
          %v323 = vld [vmem:[%s276] sm:$0x1]
          %v324 = vpack.c.bf16 %v322, %v322
          %v329 = vunpack.c.l.b16 %v313
          %v330 = vunpack.c.l.b16 %v314
          %v331 = vunpack.c.l.b16 %v315
          %v332 = vunpack.c.l.b16 %v316
          %v333 = vpack.c.b16 %v330, %v329
          %v334 = vpack.c.b16 %v332, %v331
          %vm337 = vcmask 261120
          %v339 = vsel %vm337, %v324, 0
          %341 = vmatpush.bf16.msra.mxu0 0
          %342 = vmatpush.bf16.msra.mxu0 0
          %343 = vmatpush.bf16.msra.mxu0 0
          %344 = vmatpush.bf16.msra.mxu0 0
          %345 = vmatpush.bf16.msra.mxu0 0
          %346 = vmatpush.bf16.msra.mxu0 0
          %347 = vmatpush.bf16.msra.mxu0 %v334
          %348 = vmatpush.bf16.msra.mxu0 %v333
          %349 = vmatmul.bf16.gmra.mxu0 %v339
          %v350 = vpop.f32.mrf.mxu0
          %v351 = vadd.f32 0.0, %v350
          %v352 = vpop.f32.mrf.mxu0
          %353 = vdwg.mxu0
          %v354 = vunpack.c.l.bf16 %v323
          %v355 = vadd.f32 %v354, %v351
          %v356 = vxor.u32 %v355, 2147483648
          %v357 = vmul.f32 %v356, 1.442695
          %v358 = vpow.pop %v357
          %v359 = vadd.f32 %v358, 1.0
          %v360 = vrcp.pop %v359
          %v361 = vmul.f32 %v359, %v360
          %v362 = vsub.f32 1.0, %v361
          %v363 = vmul.f32 %v360, %v362
          %v364 = vadd.f32 %v360, %v363
          %vm365 = vweird.f32 %v359
          %vm366 = vweird.f32 %v360
          %vm367 = vmor %vm365, %vm366
          %v368 = vsel %vm367, %v360, %v364
          %v369 = vand.u32 2147483647, %v359
          %vm370 = vcmp.eq.f32.partialorder %v369, 8.507059e+37
          %v371 = vand.u32 %v359, 2147483648
          %v372 = vor.u32 1.1754944e-38, %v371
          %v373 = vsel %vm370, %v372, %v368
          %v374 = vmul.f32 1.0, %v373
          %v376 = vperm.slane %v317, 0
          %377 = vrot.lane.b32.xlu0 %v376, 64
          %v378 = vpop.permute.xlu0 %377
          %v380 = vadd.f32 %v351, %v378
          %382 = vrot.lane.b32.xlu0 %v380, 64
          %v383 = vpop.permute.xlu0 %382
          %v385 = vmul.f32 %v374, %v383
          %387 = vrot.lane.b32.xlu0 %v385, 64
          %v388 = vpop.permute.xlu0 %387
          %v390 = vadd.f32 %v354, %v388
          %v391 = vtanh.pop %v390
          %v392 = vsub.f32 1.0, %v374
          %394 = vrot.lane.b32.xlu0 %v391, 96
          %v395 = vpop.permute.xlu0 %394
          %v397 = vmul.f32 %v392, %v395
          %399 = vrot.lane.b32.xlu0 %v322, 32
          %v400 = vpop.permute.xlu0 %399
          %v402 = vmul.f32 %v374, %v400
          %v403 = vadd.f32 %v397, %v402
          %405 = vst [vmem:[#allocation1] ss:$4 sm:$0xff] %v403
          %v406 = vld.sshfl [vmem:[#allocation1] sm:$0xff pattern:$0x73625140]
          %407 = vrot.lane.b32.xlu0 %v406, 96
          %v408 = vpop.permute.xlu0 %407
          %vm410 = vcmask 254976
          %411 = vst.msk [vmem:[%s299] sm:$0x3] %vm410, %v408
          %s412 = scalar_lea.vmem %s276, 1
          %v413 = vld [vmem:[%s412] sm:$0x1]
          %v414 = vpack.c.bf16 %v403, %v403
          %416 = vrot.lane.b32.xlu0 %v414, 96
          %v417 = vpop.permute.xlu0 %416
          %v419 = vsel %vm337, %v417, 0
          %421 = vmatpush.bf16.msra.mxu0 0
          %422 = vmatpush.bf16.msra.mxu0 0
          %423 = vmatpush.bf16.msra.mxu0 0
          %424 = vmatpush.bf16.msra.mxu0 0
          %425 = vmatpush.bf16.msra.mxu0 0
          %426 = vmatpush.bf16.msra.mxu0 0
          %427 = vmatpush.bf16.msra.mxu0 %v334
          %428 = vmatpush.bf16.msra.mxu0 %v333
          %429 = vmatmul.bf16.gmra.mxu0 %v419
          %v430 = vpop.f32.mrf.mxu0
          %v431 = vadd.f32 0.0, %v430
          %v432 = vpop.f32.mrf.mxu0
          %433 = vdwg.mxu0
          %v434 = vunpack.c.l.bf16 %v413
          %v435 = vadd.f32 %v434, %v431
          %v436 = vxor.u32 %v435, 2147483648
          %v437 = vmul.f32 %v436, 1.442695
          %v438 = vpow.pop %v437
          %v439 = vadd.f32 %v438, 1.0
          %v440 = vrcp.pop %v439
          %v441 = vmul.f32 %v439, %v440
          %v442 = vsub.f32 1.0, %v441
          %v443 = vmul.f32 %v440, %v442
          %v444 = vadd.f32 %v440, %v443
          %vm445 = vweird.f32 %v439
          %vm446 = vweird.f32 %v440
          %vm447 = vmor %vm445, %vm446
          %v448 = vsel %vm447, %v440, %v444
          %v449 = vand.u32 2147483647, %v439
          %vm450 = vcmp.eq.f32.partialorder %v449, 8.507059e+37
          %v451 = vand.u32 %v439, 2147483648
          %v452 = vor.u32 1.1754944e-38, %v451
          %v453 = vsel %vm450, %v452, %v448
          %v454 = vmul.f32 1.0, %v453
          %v455 = vadd.f32 %v431, %v378
          %457 = vrot.lane.b32.xlu0 %v455, 64
          %v458 = vpop.permute.xlu0 %457
          %v460 = vmul.f32 %v454, %v458
          %462 = vrot.lane.b32.xlu0 %v460, 64
          %v463 = vpop.permute.xlu0 %462
          %v465 = vadd.f32 %v434, %v463
          %v466 = vtanh.pop %v465
          %v467 = vsub.f32 1.0, %v454
          %469 = vrot.lane.b32.xlu0 %v466, 96
          %v470 = vpop.permute.xlu0 %469
          %v472 = vmul.f32 %v467, %v470
          %v473 = vmul.f32 %v454, %v403
          %v474 = vadd.f32 %v472, %v473
          %476 = vst [vmem:[#allocation1] ss:$4 sm:$0xff] %v474
          %v477 = vld.sshfl [vmem:[#allocation1] sm:$0xff pattern:$0x73625140]
          %478 = vrot.lane.b32.xlu0 %v477, 96
          %v479 = vpop.permute.xlu0 %478
          %s481 = scalar_lea.vmem %s299, 2
          %482 = vst.msk [vmem:[%s481] sm:$0x3] %vm410, %v479
          %s483 = scalar_lea.vmem %s276, 2
          %v484 = vld [vmem:[%s483] sm:$0x1]
          %v485 = vpack.c.bf16 %v474, %v474
          %487 = vrot.lane.b32.xlu0 %v485, 96
          %v488 = vpop.permute.xlu0 %487
          %v490 = vsel %vm337, %v488, 0
          %492 = vmatpush.bf16.msra.mxu0 0
          %493 = vmatpush.bf16.msra.mxu0 0
          %494 = vmatpush.bf16.msra.mxu0 0
          %495 = vmatpush.bf16.msra.mxu0 0
          %496 = vmatpush.bf16.msra.mxu0 0
          %497 = vmatpush.bf16.msra.mxu0 0
          %498 = vmatpush.bf16.msra.mxu0 %v334
          %499 = vmatpush.bf16.msra.mxu0 %v333
          %500 = vmatmul.bf16.gmra.mxu0 %v490
          %v501 = vpop.f32.mrf.mxu0
          %v502 = vadd.f32 0.0, %v501
          %v503 = vpop.f32.mrf.mxu0
          %504 = vdwg.mxu0
          %v505 = vunpack.c.l.bf16 %v484
          %v506 = vadd.f32 %v505, %v502
          %v507 = vxor.u32 %v506, 2147483648
          %v508 = vmul.f32 %v507, 1.442695
          %v509 = vpow.pop %v508
          %v510 = vadd.f32 %v509, 1.0
          %v511 = vrcp.pop %v510
          %v512 = vmul.f32 %v510, %v511
          %v513 = vsub.f32 1.0, %v512
          %v514 = vmul.f32 %v511, %v513
          %v515 = vadd.f32 %v511, %v514
          %vm516 = vweird.f32 %v510
          %vm517 = vweird.f32 %v511
          %vm518 = vmor %vm516, %vm517
          %v519 = vsel %vm518, %v511, %v515
          %v520 = vand.u32 2147483647, %v510
          %vm521 = vcmp.eq.f32.partialorder %v520, 8.507059e+37
          %v522 = vand.u32 %v510, 2147483648
          %v523 = vor.u32 1.1754944e-38, %v522
          %v524 = vsel %vm521, %v523, %v519
          %v525 = vmul.f32 1.0, %v524
          %v526 = vadd.f32 %v502, %v378
          %528 = vrot.lane.b32.xlu0 %v526, 64
          %v529 = vpop.permute.xlu0 %528
          %v531 = vmul.f32 %v525, %v529
          %533 = vrot.lane.b32.xlu0 %v531, 64
          %v534 = vpop.permute.xlu0 %533
          %v536 = vadd.f32 %v505, %v534
          %v537 = vtanh.pop %v536
          %v538 = vsub.f32 1.0, %v525
          %540 = vrot.lane.b32.xlu0 %v537, 96
          %v541 = vpop.permute.xlu0 %540
          %v543 = vmul.f32 %v538, %v541
          %v544 = vmul.f32 %v525, %v474
          %v545 = vadd.f32 %v543, %v544
          %547 = vst [vmem:[#allocation1] ss:$4 sm:$0xff] %v545
          %v548 = vld.sshfl [vmem:[#allocation1] sm:$0xff pattern:$0x73625140]
          %549 = vrot.lane.b32.xlu0 %v548, 96
          %v550 = vpop.permute.xlu0 %549
          %s552 = scalar_lea.vmem %s299, 4
          %553 = vst.msk [vmem:[%s552] sm:$0x3] %vm410, %v550
          %s554 = scalar_lea.vmem %s276, 3
          %v555 = vld [vmem:[%s554] sm:$0x1]
          %v556 = vpack.c.bf16 %v545, %v545
          %558 = vrot.lane.b32.xlu0 %v556, 96
          %v559 = vpop.permute.xlu0 %558
          %v561 = vsel %vm337, %v559, 0
          %563 = vmatpush.bf16.msra.mxu0 0
          %564 = vmatpush.bf16.msra.mxu0 0
          %565 = vmatpush.bf16.msra.mxu0 0
          %566 = vmatpush.bf16.msra.mxu0 0
          %567 = vmatpush.bf16.msra.mxu0 0
          %568 = vmatpush.bf16.msra.mxu0 0
          %569 = vmatpush.bf16.msra.mxu0 %v334
          %570 = vmatpush.bf16.msra.mxu0 %v333
          %571 = vmatmul.bf16.gmra.mxu0 %v561
          %v572 = vpop.f32.mrf.mxu0
          %v573 = vadd.f32 0.0, %v572
          %v574 = vpop.f32.mrf.mxu0
          %575 = vdwg.mxu0
          %v576 = vunpack.c.l.bf16 %v555
          %v577 = vadd.f32 %v576, %v573
          %v578 = vxor.u32 %v577, 2147483648
          %v579 = vmul.f32 %v578, 1.442695
          %v580 = vpow.pop %v579
          %v581 = vadd.f32 %v580, 1.0
          %v582 = vrcp.pop %v581
          %v583 = vmul.f32 %v581, %v582
          %v584 = vsub.f32 1.0, %v583
          %v585 = vmul.f32 %v582, %v584
          %v586 = vadd.f32 %v582, %v585
          %vm587 = vweird.f32 %v581
          %vm588 = vweird.f32 %v582
          %vm589 = vmor %vm587, %vm588
          %v590 = vsel %vm589, %v582, %v586
          %v591 = vand.u32 2147483647, %v581
          %vm592 = vcmp.eq.f32.partialorder %v591, 8.507059e+37
          %v593 = vand.u32 %v581, 2147483648
          %v594 = vor.u32 1.1754944e-38, %v593
          %v595 = vsel %vm592, %v594, %v590
          %v596 = vmul.f32 1.0, %v595
          %v597 = vadd.f32 %v573, %v378
          %599 = vrot.lane.b32.xlu0 %v597, 64
          %v600 = vpop.permute.xlu0 %599
          %v602 = vmul.f32 %v596, %v600
          %604 = vrot.lane.b32.xlu0 %v602, 64
          %v605 = vpop.permute.xlu0 %604
          %v607 = vadd.f32 %v576, %v605
          %v608 = vtanh.pop %v607
          %v609 = vsub.f32 1.0, %v596
          %611 = vrot.lane.b32.xlu0 %v608, 96
          %v612 = vpop.permute.xlu0 %611
          %v614 = vmul.f32 %v609, %v612
          %v615 = vmul.f32 %v596, %v545
          %v616 = vadd.f32 %v614, %v615
          %618 = vst [vmem:[#allocation1] ss:$4 sm:$0xff] %v616
          %v619 = vld.sshfl [vmem:[#allocation1] sm:$0xff pattern:$0x73625140]
          %620 = vrot.lane.b32.xlu0 %v619, 96
          %v621 = vpop.permute.xlu0 %620
          %s623 = scalar_lea.vmem %s299, 6
          %624 = vst.msk [vmem:[%s623] sm:$0x3] %vm410, %v621
          %s625 = scalar_lea.vmem %s276, 4
          %v626 = vld [vmem:[%s625] sm:$0x1]
          %v627 = vpack.c.bf16 %v616, %v616
          %629 = vrot.lane.b32.xlu0 %v627, 96
          %v630 = vpop.permute.xlu0 %629
          %v632 = vsel %vm337, %v630, 0
          %634 = vmatpush.bf16.msra.mxu0 0
          %635 = vmatpush.bf16.msra.mxu0 0
          %636 = vmatpush.bf16.msra.mxu0 0
          %637 = vmatpush.bf16.msra.mxu0 0
          %638 = vmatpush.bf16.msra.mxu0 0
          %639 = vmatpush.bf16.msra.mxu0 0
          %640 = vmatpush.bf16.msra.mxu0 %v334
          %641 = vmatpush.bf16.msra.mxu0 %v333
          %642 = vmatmul.bf16.gmra.mxu0 %v632
          %v643 = vpop.f32.mrf.mxu0
          %v644 = vadd.f32 0.0, %v643
          %v645 = vpop.f32.mrf.mxu0
          %646 = vdwg.mxu0
          %v647 = vunpack.c.l.bf16 %v626
          %v648 = vadd.f32 %v647, %v644
          %v649 = vxor.u32 %v648, 2147483648
          %v650 = vmul.f32 %v649, 1.442695
          %v651 = vpow.pop %v650
          %v652 = vadd.f32 %v651, 1.0
          %v653 = vrcp.pop %v652
          %v654 = vmul.f32 %v652, %v653
          %v655 = vsub.f32 1.0, %v654
          %v656 = vmul.f32 %v653, %v655
          %v657 = vadd.f32 %v653, %v656
          %vm658 = vweird.f32 %v652
          %vm659 = vweird.f32 %v653
          %vm660 = vmor %vm658, %vm659
          %v661 = vsel %vm660, %v653, %v657
          %v662 = vand.u32 2147483647, %v652
          %vm663 = vcmp.eq.f32.partialorder %v662, 8.507059e+37
          %v664 = vand.u32 %v652, 2147483648
          %v665 = vor.u32 1.1754944e-38, %v664
          %v666 = vsel %vm663, %v665, %v661
          %v667 = vmul.f32 1.0, %v666
          %v668 = vadd.f32 %v644, %v378
          %670 = vrot.lane.b32.xlu0 %v668, 64
          %v671 = vpop.permute.xlu0 %670
          %v673 = vmul.f32 %v667, %v671
          %675 = vrot.lane.b32.xlu0 %v673, 64
          %v676 = vpop.permute.xlu0 %675
          %v678 = vadd.f32 %v647, %v676
          %v679 = vtanh.pop %v678
          %v680 = vsub.f32 1.0, %v667
          %682 = vrot.lane.b32.xlu0 %v679, 96
          %v683 = vpop.permute.xlu0 %682
          %v685 = vmul.f32 %v680, %v683
          %v686 = vmul.f32 %v667, %v616
          %v687 = vadd.f32 %v685, %v686
          %689 = vst [vmem:[#allocation1] ss:$4 sm:$0xff] %v687
          %v690 = vld.sshfl [vmem:[#allocation1] sm:$0xff pattern:$0x73625140]
          %691 = vrot.lane.b32.xlu0 %v690, 96
          %v692 = vpop.permute.xlu0 %691
          %s694 = scalar_lea.vmem %s299, 8
          %695 = vst.msk [vmem:[%s694] sm:$0x3] %vm410, %v692
          %s696 = scalar_lea.vmem %s276, 5
          %v697 = vld [vmem:[%s696] sm:$0x1]
          %v698 = vpack.c.bf16 %v687, %v687
          %700 = vrot.lane.b32.xlu0 %v698, 96
          %v701 = vpop.permute.xlu0 %700
          %v703 = vsel %vm337, %v701, 0
          %705 = vmatpush.bf16.msra.mxu0 0
          %706 = vmatpush.bf16.msra.mxu0 0
          %707 = vmatpush.bf16.msra.mxu0 0
          %708 = vmatpush.bf16.msra.mxu0 0
          %709 = vmatpush.bf16.msra.mxu0 0
          %710 = vmatpush.bf16.msra.mxu0 0
          %711 = vmatpush.bf16.msra.mxu0 %v334
          %712 = vmatpush.bf16.msra.mxu0 %v333
          %713 = vmatmul.bf16.gmra.mxu0 %v703
          %v714 = vpop.f32.mrf.mxu0
          %v715 = vadd.f32 0.0, %v714
          %v716 = vpop.f32.mrf.mxu0
          %717 = vdwg.mxu0
          %v718 = vunpack.c.l.bf16 %v697
          %v719 = vadd.f32 %v718, %v715
          %v720 = vxor.u32 %v719, 2147483648
          %v721 = vmul.f32 %v720, 1.442695
          %v722 = vpow.pop %v721
          %v723 = vadd.f32 %v722, 1.0
          %v724 = vrcp.pop %v723
          %v725 = vmul.f32 %v723, %v724
          %v726 = vsub.f32 1.0, %v725
          %v727 = vmul.f32 %v724, %v726
          %v728 = vadd.f32 %v724, %v727
          %vm729 = vweird.f32 %v723
          %vm730 = vweird.f32 %v724
          %vm731 = vmor %vm729, %vm730
          %v732 = vsel %vm731, %v724, %v728
          %v733 = vand.u32 2147483647, %v723
          %vm734 = vcmp.eq.f32.partialorder %v733, 8.507059e+37
          %v735 = vand.u32 %v723, 2147483648
          %v736 = vor.u32 1.1754944e-38, %v735
          %v737 = vsel %vm734, %v736, %v732
          %v738 = vmul.f32 1.0, %v737
          %v739 = vadd.f32 %v715, %v378
          %741 = vrot.lane.b32.xlu0 %v739, 64
          %v742 = vpop.permute.xlu0 %741
          %v744 = vmul.f32 %v738, %v742
          %746 = vrot.lane.b32.xlu0 %v744, 64
          %v747 = vpop.permute.xlu0 %746
          %v749 = vadd.f32 %v718, %v747
          %v750 = vtanh.pop %v749
          %v751 = vsub.f32 1.0, %v738
          %753 = vrot.lane.b32.xlu0 %v750, 96
          %v754 = vpop.permute.xlu0 %753
          %v756 = vmul.f32 %v751, %v754
          %v757 = vmul.f32 %v738, %v687
          %v758 = vadd.f32 %v756, %v757
          %760 = vst [vmem:[#allocation1] ss:$4 sm:$0xff] %v758
          %v761 = vld.sshfl [vmem:[#allocation1] sm:$0xff pattern:$0x73625140]
          %762 = vrot.lane.b32.xlu0 %v761, 96
          %v763 = vpop.permute.xlu0 %762
          %s765 = scalar_lea.vmem %s299, 10
          %766 = vst.msk [vmem:[%s765] sm:$0x3] %vm410, %v763
          %s767 = scalar_lea.vmem %s276, 6
          %v768 = vld [vmem:[%s767] sm:$0x1]
          %v769 = vpack.c.bf16 %v758, %v758
          %771 = vrot.lane.b32.xlu0 %v769, 96
          %v772 = vpop.permute.xlu0 %771
          %v774 = vsel %vm337, %v772, 0
          %776 = vmatpush.bf16.msra.mxu0 0
          %777 = vmatpush.bf16.msra.mxu0 0
          %778 = vmatpush.bf16.msra.mxu0 0
          %779 = vmatpush.bf16.msra.mxu0 0
          %780 = vmatpush.bf16.msra.mxu0 0
          %781 = vmatpush.bf16.msra.mxu0 0
          %782 = vmatpush.bf16.msra.mxu0 %v334
          %783 = vmatpush.bf16.msra.mxu0 %v333
          %784 = vmatmul.bf16.gmra.mxu0 %v774
          %v785 = vpop.f32.mrf.mxu0
          %v786 = vadd.f32 0.0, %v785
          %v787 = vpop.f32.mrf.mxu0
          %788 = vdwg.mxu0
          %v789 = vunpack.c.l.bf16 %v768
          %v790 = vadd.f32 %v789, %v786
          %v791 = vxor.u32 %v790, 2147483648
          %v792 = vmul.f32 %v791, 1.442695
          %v793 = vpow.pop %v792
          %v794 = vadd.f32 %v793, 1.0
          %v795 = vrcp.pop %v794
          %v796 = vmul.f32 %v794, %v795
          %v797 = vsub.f32 1.0, %v796
          %v798 = vmul.f32 %v795, %v797
          %v799 = vadd.f32 %v795, %v798
          %vm800 = vweird.f32 %v794
          %vm801 = vweird.f32 %v795
          %vm802 = vmor %vm800, %vm801
          %v803 = vsel %vm802, %v795, %v799
          %v804 = vand.u32 2147483647, %v794
          %vm805 = vcmp.eq.f32.partialorder %v804, 8.507059e+37
          %v806 = vand.u32 %v794, 2147483648
          %v807 = vor.u32 1.1754944e-38, %v806
          %v808 = vsel %vm805, %v807, %v803
          %v809 = vmul.f32 1.0, %v808
          %v810 = vadd.f32 %v786, %v378
          %812 = vrot.lane.b32.xlu0 %v810, 64
          %v813 = vpop.permute.xlu0 %812
          %v815 = vmul.f32 %v809, %v813
          %817 = vrot.lane.b32.xlu0 %v815, 64
          %v818 = vpop.permute.xlu0 %817
          %v820 = vadd.f32 %v789, %v818
          %v821 = vtanh.pop %v820
          %v822 = vsub.f32 1.0, %v809
          %824 = vrot.lane.b32.xlu0 %v821, 96
          %v825 = vpop.permute.xlu0 %824
          %v827 = vmul.f32 %v822, %v825
          %v828 = vmul.f32 %v809, %v758
          %v829 = vadd.f32 %v827, %v828
          %831 = vst [vmem:[#allocation1] ss:$4 sm:$0xff] %v829
          %v832 = vld.sshfl [vmem:[#allocation1] sm:$0xff pattern:$0x73625140]
          %833 = vrot.lane.b32.xlu0 %v832, 96
          %v834 = vpop.permute.xlu0 %833
          %s836 = scalar_lea.vmem %s299, 12
          %837 = vst.msk [vmem:[%s836] sm:$0x3] %vm410, %v834
          %s838 = scalar_lea.vmem %s276, 7
          %v839 = vld [vmem:[%s838] sm:$0x1]
          %v840 = vpack.c.bf16 %v829, %v829
          %842 = vrot.lane.b32.xlu0 %v840, 96
          %v843 = vpop.permute.xlu0 %842
          %v845 = vsel %vm337, %v843, 0
          %847 = vmatpush.bf16.msra.mxu0 0
          %848 = vmatpush.bf16.msra.mxu0 0
          %849 = vmatpush.bf16.msra.mxu0 0
          %850 = vmatpush.bf16.msra.mxu0 0
          %851 = vmatpush.bf16.msra.mxu0 0
          %852 = vmatpush.bf16.msra.mxu0 0
          %853 = vmatpush.bf16.msra.mxu0 %v334
          %854 = vmatpush.bf16.msra.mxu0 %v333
          %855 = vmatmul.bf16.gmra.mxu0 %v845
          %v856 = vpop.f32.mrf.mxu0
          %v857 = vadd.f32 0.0, %v856
          %v858 = vpop.f32.mrf.mxu0
          %859 = vdwg.mxu0
          %v860 = vunpack.c.l.bf16 %v839
          %v861 = vadd.f32 %v860, %v857
          %v862 = vxor.u32 %v861, 2147483648
          %v863 = vmul.f32 %v862, 1.442695
          %v864 = vpow.pop %v863
          %v865 = vadd.f32 %v864, 1.0
          %v866 = vrcp.pop %v865
          %v867 = vmul.f32 %v865, %v866
          %v868 = vsub.f32 1.0, %v867
          %v869 = vmul.f32 %v866, %v868
          %v870 = vadd.f32 %v866, %v869
          %vm871 = vweird.f32 %v865
          %vm872 = vweird.f32 %v866
          %vm873 = vmor %vm871, %vm872
          %v874 = vsel %vm873, %v866, %v870
          %v875 = vand.u32 2147483647, %v865
          %vm876 = vcmp.eq.f32.partialorder %v875, 8.507059e+37
          %v877 = vand.u32 %v865, 2147483648
          %v878 = vor.u32 1.1754944e-38, %v877
          %v879 = vsel %vm876, %v878, %v874
          %v880 = vmul.f32 1.0, %v879
          %v881 = vadd.f32 %v857, %v378
          %883 = vrot.lane.b32.xlu0 %v881, 64
          %v884 = vpop.permute.xlu0 %883
          %v886 = vmul.f32 %v880, %v884
          %888 = vrot.lane.b32.xlu0 %v886, 64
          %v889 = vpop.permute.xlu0 %888
          %v891 = vadd.f32 %v860, %v889
          %v892 = vtanh.pop %v891
          %v893 = vsub.f32 1.0, %v880
          %895 = vrot.lane.b32.xlu0 %v892, 96
          %v896 = vpop.permute.xlu0 %895
          %v898 = vmul.f32 %v893, %v896
          %v899 = vmul.f32 %v880, %v829
          %v900 = vadd.f32 %v898, %v899
          %902 = vst [vmem:[#allocation1] ss:$4 sm:$0xff] %v900
          %v903 = vld.sshfl [vmem:[#allocation1] sm:$0xff pattern:$0x73625140]
          %904 = vrot.lane.b32.xlu0 %v903, 96
          %v905 = vpop.permute.xlu0 %904
          %s907 = scalar_lea.vmem %s299, 14
          %908 = vst.msk [vmem:[%s907] sm:$0x3] %vm410, %v905
          %909 = vst [vmem:[#allocation1] ss:$4 sm:$0xff] %v900
          %v910 = vld.sshfl [vmem:[#allocation1] sm:$0xff pattern:$0x73625140]
          %911 = vrot.lane.b32.xlu0 %v910, 96
          %v912 = vpop.permute.xlu0 %911
          %914 = vst.msk [vmem:[#allocation2] sm:$0x3] %vm410, %v912
        $region44: #{ffn_forward.4} parent=31 // pred_fallthru
          _
        %p915 = scmp.eq.s32.totalorder %s19, 1
        // Predicated region
        $region45: #{ffn_forward.4} parent=31 // pred_check
          %p916 = pneg %p915
        $region46: #{ffn_forward.4} parent=31 // pred_check_branch
          %918 = sbr.rel (%p916) target = $region48
        $region47: #{ffn_forward.4} parent=31 // pred_region
          %v919 = vld [vmem:[#allocation2] sm:$0x3]
          %s920 = scalar_lea.vmem %s276, 7
          %v921 = vld [vmem:[%s920] sm:$0x1]
          %v922 = vpack.c.bf16 %v919, %v919
          %v927 = vunpack.c.l.b16 %v313
          %v928 = vunpack.c.l.b16 %v314
          %v929 = vunpack.c.l.b16 %v315
          %v930 = vunpack.c.l.b16 %v316
          %v931 = vpack.c.b16 %v928, %v927
          %v932 = vpack.c.b16 %v930, %v929
          %vm935 = vcmask 261120
          %v937 = vsel %vm935, %v922, 0
          %939 = vmatpush.bf16.msra.mxu0 0
          %940 = vmatpush.bf16.msra.mxu0 0
          %941 = vmatpush.bf16.msra.mxu0 0
          %942 = vmatpush.bf16.msra.mxu0 0
          %943 = vmatpush.bf16.msra.mxu0 0
          %944 = vmatpush.bf16.msra.mxu0 0
          %945 = vmatpush.bf16.msra.mxu0 %v932
          %946 = vmatpush.bf16.msra.mxu0 %v931
          %947 = vmatmul.bf16.gmra.mxu0 %v937
          %v948 = vpop.f32.mrf.mxu0
          %v949 = vadd.f32 0.0, %v948
          %v950 = vpop.f32.mrf.mxu0
          %951 = vdwg.mxu0
          %v952 = vunpack.c.l.bf16 %v921
          %v953 = vadd.f32 %v952, %v949
          %v954 = vxor.u32 %v953, 2147483648
          %v955 = vmul.f32 %v954, 1.442695
          %v956 = vpow.pop %v955
          %v957 = vadd.f32 %v956, 1.0
          %v958 = vrcp.pop %v957
          %v959 = vmul.f32 %v957, %v958
          %v960 = vsub.f32 1.0, %v959
          %v961 = vmul.f32 %v958, %v960
          %v962 = vadd.f32 %v958, %v961
          %vm963 = vweird.f32 %v957
          %vm964 = vweird.f32 %v958
          %vm965 = vmor %vm963, %vm964
          %v966 = vsel %vm965, %v958, %v962
          %v967 = vand.u32 2147483647, %v957
          %vm968 = vcmp.eq.f32.partialorder %v967, 8.507059e+37
          %v969 = vand.u32 %v957, 2147483648
          %v970 = vor.u32 1.1754944e-38, %v969
          %v971 = vsel %vm968, %v970, %v966
          %v972 = vmul.f32 1.0, %v971
          %v974 = vperm.slane %v317, 0
          %975 = vrot.lane.b32.xlu0 %v974, 64
          %v976 = vpop.permute.xlu0 %975
          %v978 = vadd.f32 %v949, %v976
          %980 = vrot.lane.b32.xlu0 %v978, 64
          %v981 = vpop.permute.xlu0 %980
          %v983 = vmul.f32 %v972, %v981
          %985 = vrot.lane.b32.xlu0 %v983, 64
          %v986 = vpop.permute.xlu0 %985
          %v988 = vadd.f32 %v952, %v986
          %v989 = vtanh.pop %v988
          %v990 = vsub.f32 1.0, %v972
          %992 = vrot.lane.b32.xlu0 %v989, 96
          %v993 = vpop.permute.xlu0 %992
          %v995 = vmul.f32 %v990, %v993
          %997 = vrot.lane.b32.xlu0 %v919, 32
          %v998 = vpop.permute.xlu0 %997
          %v1000 = vmul.f32 %v972, %v998
          %v1001 = vadd.f32 %v995, %v1000
          %1003 = vst [vmem:[#allocation1] ss:$4 sm:$0xff] %v1001
          %v1004 = vld.sshfl [vmem:[#allocation1] sm:$0xff pattern:$0x73625140]
          %1005 = vrot.lane.b32.xlu0 %v1004, 96
          %v1006 = vpop.permute.xlu0 %1005
          %s1008 = scalar_lea.vmem %s299, 14
          %vm1009 = vcmask 254976
          %1010 = vst.msk [vmem:[%s1008] sm:$0x3] %vm1009, %v1006
          %s1011 = scalar_lea.vmem %s276, 6
          %v1012 = vld [vmem:[%s1011] sm:$0x1]
          %v1013 = vpack.c.bf16 %v1001, %v1001
          %1015 = vrot.lane.b32.xlu0 %v1013, 96
          %v1016 = vpop.permute.xlu0 %1015
          %v1018 = vsel %vm935, %v1016, 0
          %1020 = vmatpush.bf16.msra.mxu0 0
          %1021 = vmatpush.bf16.msra.mxu0 0
          %1022 = vmatpush.bf16.msra.mxu0 0
          %1023 = vmatpush.bf16.msra.mxu0 0
          %1024 = vmatpush.bf16.msra.mxu0 0
          %1025 = vmatpush.bf16.msra.mxu0 0
          %1026 = vmatpush.bf16.msra.mxu0 %v932
          %1027 = vmatpush.bf16.msra.mxu0 %v931
          %1028 = vmatmul.bf16.gmra.mxu0 %v1018
          %v1029 = vpop.f32.mrf.mxu0
          %v1030 = vadd.f32 0.0, %v1029
          %v1031 = vpop.f32.mrf.mxu0
          %1032 = vdwg.mxu0
          %v1033 = vunpack.c.l.bf16 %v1012
          %v1034 = vadd.f32 %v1033, %v1030
          %v1035 = vxor.u32 %v1034, 2147483648
          %v1036 = vmul.f32 %v1035, 1.442695
          %v1037 = vpow.pop %v1036
          %v1038 = vadd.f32 %v1037, 1.0
          %v1039 = vrcp.pop %v1038
          %v1040 = vmul.f32 %v1038, %v1039
          %v1041 = vsub.f32 1.0, %v1040
          %v1042 = vmul.f32 %v1039, %v1041
          %v1043 = vadd.f32 %v1039, %v1042
          %vm1044 = vweird.f32 %v1038
          %vm1045 = vweird.f32 %v1039
          %vm1046 = vmor %vm1044, %vm1045
          %v1047 = vsel %vm1046, %v1039, %v1043
          %v1048 = vand.u32 2147483647, %v1038
          %vm1049 = vcmp.eq.f32.partialorder %v1048, 8.507059e+37
          %v1050 = vand.u32 %v1038, 2147483648
          %v1051 = vor.u32 1.1754944e-38, %v1050
          %v1052 = vsel %vm1049, %v1051, %v1047
          %v1053 = vmul.f32 1.0, %v1052
          %v1054 = vadd.f32 %v1030, %v976
          %1056 = vrot.lane.b32.xlu0 %v1054, 64
          %v1057 = vpop.permute.xlu0 %1056
          %v1059 = vmul.f32 %v1053, %v1057
          %1061 = vrot.lane.b32.xlu0 %v1059, 64
          %v1062 = vpop.permute.xlu0 %1061
          %v1064 = vadd.f32 %v1033, %v1062
          %v1065 = vtanh.pop %v1064
          %v1066 = vsub.f32 1.0, %v1053
          %1068 = vrot.lane.b32.xlu0 %v1065, 96
          %v1069 = vpop.permute.xlu0 %1068
          %v1071 = vmul.f32 %v1066, %v1069
          %v1072 = vmul.f32 %v1053, %v1001
          %v1073 = vadd.f32 %v1071, %v1072
          %1075 = vst [vmem:[#allocation1] ss:$4 sm:$0xff] %v1073
          %v1076 = vld.sshfl [vmem:[#allocation1] sm:$0xff pattern:$0x73625140]
          %1077 = vrot.lane.b32.xlu0 %v1076, 96
          %v1078 = vpop.permute.xlu0 %1077
          %s1080 = scalar_lea.vmem %s299, 12
          %1081 = vst.msk [vmem:[%s1080] sm:$0x3] %vm1009, %v1078
          %s1082 = scalar_lea.vmem %s276, 5
          %v1083 = vld [vmem:[%s1082] sm:$0x1]
          %v1084 = vpack.c.bf16 %v1073, %v1073
          %1086 = vrot.lane.b32.xlu0 %v1084, 96
          %v1087 = vpop.permute.xlu0 %1086
          %v1089 = vsel %vm935, %v1087, 0
          %1091 = vmatpush.bf16.msra.mxu0 0
          %1092 = vmatpush.bf16.msra.mxu0 0
          %1093 = vmatpush.bf16.msra.mxu0 0
          %1094 = vmatpush.bf16.msra.mxu0 0
          %1095 = vmatpush.bf16.msra.mxu0 0
          %1096 = vmatpush.bf16.msra.mxu0 0
          %1097 = vmatpush.bf16.msra.mxu0 %v932
          %1098 = vmatpush.bf16.msra.mxu0 %v931
          %1099 = vmatmul.bf16.gmra.mxu0 %v1089
          %v1100 = vpop.f32.mrf.mxu0
          %v1101 = vadd.f32 0.0, %v1100
          %v1102 = vpop.f32.mrf.mxu0
          %1103 = vdwg.mxu0
          %v1104 = vunpack.c.l.bf16 %v1083
          %v1105 = vadd.f32 %v1104, %v1101
          %v1106 = vxor.u32 %v1105, 2147483648
          %v1107 = vmul.f32 %v1106, 1.442695
          %v1108 = vpow.pop %v1107
          %v1109 = vadd.f32 %v1108, 1.0
          %v1110 = vrcp.pop %v1109
          %v1111 = vmul.f32 %v1109, %v1110
          %v1112 = vsub.f32 1.0, %v1111
          %v1113 = vmul.f32 %v1110, %v1112
          %v1114 = vadd.f32 %v1110, %v1113
          %vm1115 = vweird.f32 %v1109
          %vm1116 = vweird.f32 %v1110
          %vm1117 = vmor %vm1115, %vm1116
          %v1118 = vsel %vm1117, %v1110, %v1114
          %v1119 = vand.u32 2147483647, %v1109
          %vm1120 = vcmp.eq.f32.partialorder %v1119, 8.507059e+37
          %v1121 = vand.u32 %v1109, 2147483648
          %v1122 = vor.u32 1.1754944e-38, %v1121
          %v1123 = vsel %vm1120, %v1122, %v1118
          %v1124 = vmul.f32 1.0, %v1123
          %v1125 = vadd.f32 %v1101, %v976
          %1127 = vrot.lane.b32.xlu0 %v1125, 64
          %v1128 = vpop.permute.xlu0 %1127
          %v1130 = vmul.f32 %v1124, %v1128
          %1132 = vrot.lane.b32.xlu0 %v1130, 64
          %v1133 = vpop.permute.xlu0 %1132
          %v1135 = vadd.f32 %v1104, %v1133
          %v1136 = vtanh.pop %v1135
          %v1137 = vsub.f32 1.0, %v1124
          %1139 = vrot.lane.b32.xlu0 %v1136, 96
          %v1140 = vpop.permute.xlu0 %1139
          %v1142 = vmul.f32 %v1137, %v1140
          %v1143 = vmul.f32 %v1124, %v1073
          %v1144 = vadd.f32 %v1142, %v1143
          %1146 = vst [vmem:[#allocation1] ss:$4 sm:$0xff] %v1144
          %v1147 = vld.sshfl [vmem:[#allocation1] sm:$0xff pattern:$0x73625140]
          %1148 = vrot.lane.b32.xlu0 %v1147, 96
          %v1149 = vpop.permute.xlu0 %1148
          %s1151 = scalar_lea.vmem %s299, 10
          %1152 = vst.msk [vmem:[%s1151] sm:$0x3] %vm1009, %v1149
          %s1153 = scalar_lea.vmem %s276, 4
          %v1154 = vld [vmem:[%s1153] sm:$0x1]
          %v1155 = vpack.c.bf16 %v1144, %v1144
          %1157 = vrot.lane.b32.xlu0 %v1155, 96
          %v1158 = vpop.permute.xlu0 %1157
          %v1160 = vsel %vm935, %v1158, 0
          %1162 = vmatpush.bf16.msra.mxu0 0
          %1163 = vmatpush.bf16.msra.mxu0 0
          %1164 = vmatpush.bf16.msra.mxu0 0
          %1165 = vmatpush.bf16.msra.mxu0 0
          %1166 = vmatpush.bf16.msra.mxu0 0
          %1167 = vmatpush.bf16.msra.mxu0 0
          %1168 = vmatpush.bf16.msra.mxu0 %v932
          %1169 = vmatpush.bf16.msra.mxu0 %v931
          %1170 = vmatmul.bf16.gmra.mxu0 %v1160
          %v1171 = vpop.f32.mrf.mxu0
          %v1172 = vadd.f32 0.0, %v1171
          %v1173 = vpop.f32.mrf.mxu0
          %1174 = vdwg.mxu0
          %v1175 = vunpack.c.l.bf16 %v1154
          %v1176 = vadd.f32 %v1175, %v1172
          %v1177 = vxor.u32 %v1176, 2147483648
          %v1178 = vmul.f32 %v1177, 1.442695
          %v1179 = vpow.pop %v1178
          %v1180 = vadd.f32 %v1179, 1.0
          %v1181 = vrcp.pop %v1180
          %v1182 = vmul.f32 %v1180, %v1181
          %v1183 = vsub.f32 1.0, %v1182
          %v1184 = vmul.f32 %v1181, %v1183
          %v1185 = vadd.f32 %v1181, %v1184
          %vm1186 = vweird.f32 %v1180
          %vm1187 = vweird.f32 %v1181
          %vm1188 = vmor %vm1186, %vm1187
          %v1189 = vsel %vm1188, %v1181, %v1185
          %v1190 = vand.u32 2147483647, %v1180
          %vm1191 = vcmp.eq.f32.partialorder %v1190, 8.507059e+37
          %v1192 = vand.u32 %v1180, 2147483648
          %v1193 = vor.u32 1.1754944e-38, %v1192
          %v1194 = vsel %vm1191, %v1193, %v1189
          %v1195 = vmul.f32 1.0, %v1194
          %v1196 = vadd.f32 %v1172, %v976
          %1198 = vrot.lane.b32.xlu0 %v1196, 64
          %v1199 = vpop.permute.xlu0 %1198
          %v1201 = vmul.f32 %v1195, %v1199
          %1203 = vrot.lane.b32.xlu0 %v1201, 64
          %v1204 = vpop.permute.xlu0 %1203
          %v1206 = vadd.f32 %v1175, %v1204
          %v1207 = vtanh.pop %v1206
          %v1208 = vsub.f32 1.0, %v1195
          %1210 = vrot.lane.b32.xlu0 %v1207, 96
          %v1211 = vpop.permute.xlu0 %1210
          %v1213 = vmul.f32 %v1208, %v1211
          %v1214 = vmul.f32 %v1195, %v1144
          %v1215 = vadd.f32 %v1213, %v1214
          %1217 = vst [vmem:[#allocation1] ss:$4 sm:$0xff] %v1215
          %v1218 = vld.sshfl [vmem:[#allocation1] sm:$0xff pattern:$0x73625140]
          %1219 = vrot.lane.b32.xlu0 %v1218, 96
          %v1220 = vpop.permute.xlu0 %1219
          %s1222 = scalar_lea.vmem %s299, 8
          %1223 = vst.msk [vmem:[%s1222] sm:$0x3] %vm1009, %v1220
          %s1224 = scalar_lea.vmem %s276, 3
          %v1225 = vld [vmem:[%s1224] sm:$0x1]
          %v1226 = vpack.c.bf16 %v1215, %v1215
          %1228 = vrot.lane.b32.xlu0 %v1226, 96
          %v1229 = vpop.permute.xlu0 %1228
          %v1231 = vsel %vm935, %v1229, 0
          %1233 = vmatpush.bf16.msra.mxu0 0
          %1234 = vmatpush.bf16.msra.mxu0 0
          %1235 = vmatpush.bf16.msra.mxu0 0
          %1236 = vmatpush.bf16.msra.mxu0 0
          %1237 = vmatpush.bf16.msra.mxu0 0
          %1238 = vmatpush.bf16.msra.mxu0 0
          %1239 = vmatpush.bf16.msra.mxu0 %v932
          %1240 = vmatpush.bf16.msra.mxu0 %v931
          %1241 = vmatmul.bf16.gmra.mxu0 %v1231
          %v1242 = vpop.f32.mrf.mxu0
          %v1243 = vadd.f32 0.0, %v1242
          %v1244 = vpop.f32.mrf.mxu0
          %1245 = vdwg.mxu0
          %v1246 = vunpack.c.l.bf16 %v1225
          %v1247 = vadd.f32 %v1246, %v1243
          %v1248 = vxor.u32 %v1247, 2147483648
          %v1249 = vmul.f32 %v1248, 1.442695
          %v1250 = vpow.pop %v1249
          %v1251 = vadd.f32 %v1250, 1.0
          %v1252 = vrcp.pop %v1251
          %v1253 = vmul.f32 %v1251, %v1252
          %v1254 = vsub.f32 1.0, %v1253
          %v1255 = vmul.f32 %v1252, %v1254
          %v1256 = vadd.f32 %v1252, %v1255
          %vm1257 = vweird.f32 %v1251
          %vm1258 = vweird.f32 %v1252
          %vm1259 = vmor %vm1257, %vm1258
          %v1260 = vsel %vm1259, %v1252, %v1256
          %v1261 = vand.u32 2147483647, %v1251
          %vm1262 = vcmp.eq.f32.partialorder %v1261, 8.507059e+37
          %v1263 = vand.u32 %v1251, 2147483648
          %v1264 = vor.u32 1.1754944e-38, %v1263
          %v1265 = vsel %vm1262, %v1264, %v1260
          %v1266 = vmul.f32 1.0, %v1265
          %v1267 = vadd.f32 %v1243, %v976
          %1269 = vrot.lane.b32.xlu0 %v1267, 64
          %v1270 = vpop.permute.xlu0 %1269
          %v1272 = vmul.f32 %v1266, %v1270
          %1274 = vrot.lane.b32.xlu0 %v1272, 64
          %v1275 = vpop.permute.xlu0 %1274
          %v1277 = vadd.f32 %v1246, %v1275
          %v1278 = vtanh.pop %v1277
          %v1279 = vsub.f32 1.0, %v1266
          %1281 = vrot.lane.b32.xlu0 %v1278, 96
          %v1282 = vpop.permute.xlu0 %1281
          %v1284 = vmul.f32 %v1279, %v1282
          %v1285 = vmul.f32 %v1266, %v1215
          %v1286 = vadd.f32 %v1284, %v1285
          %1288 = vst [vmem:[#allocation1] ss:$4 sm:$0xff] %v1286
          %v1289 = vld.sshfl [vmem:[#allocation1] sm:$0xff pattern:$0x73625140]
          %1290 = vrot.lane.b32.xlu0 %v1289, 96
          %v1291 = vpop.permute.xlu0 %1290
          %s1293 = scalar_lea.vmem %s299, 6
          %1294 = vst.msk [vmem:[%s1293] sm:$0x3] %vm1009, %v1291
          %s1295 = scalar_lea.vmem %s276, 2
          %v1296 = vld [vmem:[%s1295] sm:$0x1]
          %v1297 = vpack.c.bf16 %v1286, %v1286
          %1299 = vrot.lane.b32.xlu0 %v1297, 96
          %v1300 = vpop.permute.xlu0 %1299
          %v1302 = vsel %vm935, %v1300, 0
          %1304 = vmatpush.bf16.msra.mxu0 0
          %1305 = vmatpush.bf16.msra.mxu0 0
          %1306 = vmatpush.bf16.msra.mxu0 0
          %1307 = vmatpush.bf16.msra.mxu0 0
          %1308 = vmatpush.bf16.msra.mxu0 0
          %1309 = vmatpush.bf16.msra.mxu0 0
          %1310 = vmatpush.bf16.msra.mxu0 %v932
          %1311 = vmatpush.bf16.msra.mxu0 %v931
          %1312 = vmatmul.bf16.gmra.mxu0 %v1302
          %v1313 = vpop.f32.mrf.mxu0
          %v1314 = vadd.f32 0.0, %v1313
          %v1315 = vpop.f32.mrf.mxu0
          %1316 = vdwg.mxu0
          %v1317 = vunpack.c.l.bf16 %v1296
          %v1318 = vadd.f32 %v1317, %v1314
          %v1319 = vxor.u32 %v1318, 2147483648
          %v1320 = vmul.f32 %v1319, 1.442695
          %v1321 = vpow.pop %v1320
          %v1322 = vadd.f32 %v1321, 1.0
          %v1323 = vrcp.pop %v1322
          %v1324 = vmul.f32 %v1322, %v1323
          %v1325 = vsub.f32 1.0, %v1324
          %v1326 = vmul.f32 %v1323, %v1325
          %v1327 = vadd.f32 %v1323, %v1326
          %vm1328 = vweird.f32 %v1322
          %vm1329 = vweird.f32 %v1323
          %vm1330 = vmor %vm1328, %vm1329
          %v1331 = vsel %vm1330, %v1323, %v1327
          %v1332 = vand.u32 2147483647, %v1322
          %vm1333 = vcmp.eq.f32.partialorder %v1332, 8.507059e+37
          %v1334 = vand.u32 %v1322, 2147483648
          %v1335 = vor.u32 1.1754944e-38, %v1334
          %v1336 = vsel %vm1333, %v1335, %v1331
          %v1337 = vmul.f32 1.0, %v1336
          %v1338 = vadd.f32 %v1314, %v976
          %1340 = vrot.lane.b32.xlu0 %v1338, 64
          %v1341 = vpop.permute.xlu0 %1340
          %v1343 = vmul.f32 %v1337, %v1341
          %1345 = vrot.lane.b32.xlu0 %v1343, 64
          %v1346 = vpop.permute.xlu0 %1345
          %v1348 = vadd.f32 %v1317, %v1346
          %v1349 = vtanh.pop %v1348
          %v1350 = vsub.f32 1.0, %v1337
          %1352 = vrot.lane.b32.xlu0 %v1349, 96
          %v1353 = vpop.permute.xlu0 %1352
          %v1355 = vmul.f32 %v1350, %v1353
          %v1356 = vmul.f32 %v1337, %v1286
          %v1357 = vadd.f32 %v1355, %v1356
          %1359 = vst [vmem:[#allocation1] ss:$4 sm:$0xff] %v1357
          %v1360 = vld.sshfl [vmem:[#allocation1] sm:$0xff pattern:$0x73625140]
          %1361 = vrot.lane.b32.xlu0 %v1360, 96
          %v1362 = vpop.permute.xlu0 %1361
          %s1364 = scalar_lea.vmem %s299, 4
          %1365 = vst.msk [vmem:[%s1364] sm:$0x3] %vm1009, %v1362
          %s1366 = scalar_lea.vmem %s276, 1
          %v1367 = vld [vmem:[%s1366] sm:$0x1]
          %v1368 = vpack.c.bf16 %v1357, %v1357
          %1370 = vrot.lane.b32.xlu0 %v1368, 96
          %v1371 = vpop.permute.xlu0 %1370
          %v1373 = vsel %vm935, %v1371, 0
          %1375 = vmatpush.bf16.msra.mxu0 0
          %1376 = vmatpush.bf16.msra.mxu0 0
          %1377 = vmatpush.bf16.msra.mxu0 0
          %1378 = vmatpush.bf16.msra.mxu0 0
          %1379 = vmatpush.bf16.msra.mxu0 0
          %1380 = vmatpush.bf16.msra.mxu0 0
          %1381 = vmatpush.bf16.msra.mxu0 %v932
          %1382 = vmatpush.bf16.msra.mxu0 %v931
          %1383 = vmatmul.bf16.gmra.mxu0 %v1373
          %v1384 = vpop.f32.mrf.mxu0
          %v1385 = vadd.f32 0.0, %v1384
          %v1386 = vpop.f32.mrf.mxu0
          %1387 = vdwg.mxu0
          %v1388 = vunpack.c.l.bf16 %v1367
          %v1389 = vadd.f32 %v1388, %v1385
          %v1390 = vxor.u32 %v1389, 2147483648
          %v1391 = vmul.f32 %v1390, 1.442695
          %v1392 = vpow.pop %v1391
          %v1393 = vadd.f32 %v1392, 1.0
          %v1394 = vrcp.pop %v1393
          %v1395 = vmul.f32 %v1393, %v1394
          %v1396 = vsub.f32 1.0, %v1395
          %v1397 = vmul.f32 %v1394, %v1396
          %v1398 = vadd.f32 %v1394, %v1397
          %vm1399 = vweird.f32 %v1393
          %vm1400 = vweird.f32 %v1394
          %vm1401 = vmor %vm1399, %vm1400
          %v1402 = vsel %vm1401, %v1394, %v1398
          %v1403 = vand.u32 2147483647, %v1393
          %vm1404 = vcmp.eq.f32.partialorder %v1403, 8.507059e+37
          %v1405 = vand.u32 %v1393, 2147483648
          %v1406 = vor.u32 1.1754944e-38, %v1405
          %v1407 = vsel %vm1404, %v1406, %v1402
          %v1408 = vmul.f32 1.0, %v1407
          %v1409 = vadd.f32 %v1385, %v976
          %1411 = vrot.lane.b32.xlu0 %v1409, 64
          %v1412 = vpop.permute.xlu0 %1411
          %v1414 = vmul.f32 %v1408, %v1412
          %1416 = vrot.lane.b32.xlu0 %v1414, 64
          %v1417 = vpop.permute.xlu0 %1416
          %v1419 = vadd.f32 %v1388, %v1417
          %v1420 = vtanh.pop %v1419
          %v1421 = vsub.f32 1.0, %v1408
          %1423 = vrot.lane.b32.xlu0 %v1420, 96
          %v1424 = vpop.permute.xlu0 %1423
          %v1426 = vmul.f32 %v1421, %v1424
          %v1427 = vmul.f32 %v1408, %v1357
          %v1428 = vadd.f32 %v1426, %v1427
          %1430 = vst [vmem:[#allocation1] ss:$4 sm:$0xff] %v1428
          %v1431 = vld.sshfl [vmem:[#allocation1] sm:$0xff pattern:$0x73625140]
          %1432 = vrot.lane.b32.xlu0 %v1431, 96
          %v1433 = vpop.permute.xlu0 %1432
          %s1435 = scalar_lea.vmem %s299, 2
          %1436 = vst.msk [vmem:[%s1435] sm:$0x3] %vm1009, %v1433
          %v1437 = vld [vmem:[%s276] sm:$0x1]
          %v1438 = vpack.c.bf16 %v1428, %v1428
          %1440 = vrot.lane.b32.xlu0 %v1438, 96
          %v1441 = vpop.permute.xlu0 %1440
          %v1443 = vsel %vm935, %v1441, 0
          %1445 = vmatpush.bf16.msra.mxu0 0
          %1446 = vmatpush.bf16.msra.mxu0 0
          %1447 = vmatpush.bf16.msra.mxu0 0
          %1448 = vmatpush.bf16.msra.mxu0 0
          %1449 = vmatpush.bf16.msra.mxu0 0
          %1450 = vmatpush.bf16.msra.mxu0 0
          %1451 = vmatpush.bf16.msra.mxu0 %v932
          %1452 = vmatpush.bf16.msra.mxu0 %v931
          %1453 = vmatmul.bf16.gmra.mxu0 %v1443
          %v1454 = vpop.f32.mrf.mxu0
          %v1455 = vadd.f32 0.0, %v1454
          %v1456 = vpop.f32.mrf.mxu0
          %1457 = vdwg.mxu0
          %v1458 = vunpack.c.l.bf16 %v1437
          %v1459 = vadd.f32 %v1458, %v1455
          %v1460 = vxor.u32 %v1459, 2147483648
          %v1461 = vmul.f32 %v1460, 1.442695
          %v1462 = vpow.pop %v1461
          %v1463 = vadd.f32 %v1462, 1.0
          %v1464 = vrcp.pop %v1463
          %v1465 = vmul.f32 %v1463, %v1464
          %v1466 = vsub.f32 1.0, %v1465
          %v1467 = vmul.f32 %v1464, %v1466
          %v1468 = vadd.f32 %v1464, %v1467
          %vm1469 = vweird.f32 %v1463
          %vm1470 = vweird.f32 %v1464
          %vm1471 = vmor %vm1469, %vm1470
          %v1472 = vsel %vm1471, %v1464, %v1468
          %v1473 = vand.u32 2147483647, %v1463
          %vm1474 = vcmp.eq.f32.partialorder %v1473, 8.507059e+37
          %v1475 = vand.u32 %v1463, 2147483648
          %v1476 = vor.u32 1.1754944e-38, %v1475
          %v1477 = vsel %vm1474, %v1476, %v1472
          %v1478 = vmul.f32 1.0, %v1477
          %v1479 = vadd.f32 %v1455, %v976
          %1481 = vrot.lane.b32.xlu0 %v1479, 64
          %v1482 = vpop.permute.xlu0 %1481
          %v1484 = vmul.f32 %v1478, %v1482
          %1486 = vrot.lane.b32.xlu0 %v1484, 64
          %v1487 = vpop.permute.xlu0 %1486
          %v1489 = vadd.f32 %v1458, %v1487
          %v1490 = vtanh.pop %v1489
          %v1491 = vsub.f32 1.0, %v1478
          %1493 = vrot.lane.b32.xlu0 %v1490, 96
          %v1494 = vpop.permute.xlu0 %1493
          %v1496 = vmul.f32 %v1491, %v1494
          %v1497 = vmul.f32 %v1478, %v1428
          %v1498 = vadd.f32 %v1496, %v1497
          %1500 = vst [vmem:[#allocation1] ss:$4 sm:$0xff] %v1498
          %v1501 = vld.sshfl [vmem:[#allocation1] sm:$0xff pattern:$0x73625140]
          %1502 = vrot.lane.b32.xlu0 %v1501, 96
          %v1503 = vpop.permute.xlu0 %1502
          %1505 = vst.msk [vmem:[%s299] sm:$0x3] %vm1009, %v1503
          %1506 = vst [vmem:[#allocation1] ss:$4 sm:$0xff] %v1498
          %v1507 = vld.sshfl [vmem:[#allocation1] sm:$0xff pattern:$0x73625140]
          %1508 = vrot.lane.b32.xlu0 %v1507, 96
          %v1509 = vpop.permute.xlu0 %1508
          %1511 = vst.msk [vmem:[#allocation2] sm:$0x3] %vm1009, %v1509
        $region48: #{ffn_forward.4} parent=31 // pred_fallthru
          _
        %s1512 = ssub.s32 1, %s19
        %s1513 = smul.u32 %s1512, %s20
        %s1514 = ssub.s32 0, %s20
        %s1515 = smul.u32 %s19, %s1514
        %s1516 = sadd.s32 %s1513, %s1515
        %s1517 = smul.u32 8, %s1516
        %p1518 = scmp.lt.s32.totalorder %s19, 1
        %s1519 = scalar_select %p1518, %s19, 1
        %p1520 = scmp.lt.s32.totalorder %s1517, 7
        %s1521 = scalar_select %p1520, %s1517, 7
        %s1522 = smul.addr %s1519, 8
        %s1523 = sadd.s32 %s1521, %s1522
        %s1524 = smul.addr %s1523, 2
        %s1525 = scalar_lea.vmem %s3, %s1524
        // Predicated region
        $region49: #{ffn_forward.4} parent=31 // pred_check
          %p1526 = pneg %p147
        $region50: #{ffn_forward.4} parent=31 // pred_check_branch
          %1528 = sbr.rel (%p1526) target = $region52
        $region51: #{ffn_forward.4} parent=31 // pred_region
          %s1529 = ssub.s32 1, %s19
          %s1530 = smul.u32 %s1529, %s20
          %s1531 = ssub.s32 0, %s20
          %s1532 = smul.u32 %s19, %s1531
          %s1533 = sadd.s32 %s1530, %s1532
          %s1534 = smul.u32 8, %s1533
        $region52: #{ffn_forward.4} parent=31 // pred_fallthru
          _
      $region32: #{ffn_forward.4} parent=5 // pred_fallthru
        _
      %p1535 = scmp.le.s32.totalorder 2, %s10
      // Predicated region
      $region53: #{ffn_forward.4} parent=5 // pred_check
        %p1536 = pneg %p1535
      $region54: #{ffn_forward.4} parent=5 // pred_check_branch
        %1538 = sbr.rel (%p1536) target = $region56
      $region55: #{ffn_forward.4} parent=5 // pred_region
        %s1539 = ssub.s32 %s10, 2
        // Predicated region
        $region57: #{ffn_forward.4} parent=55 // pred_check
          %p1540 = pneg %p153
        $region58: #{ffn_forward.4} parent=55 // pred_check_branch
          %1542 = sbr.rel (%p1540) target = $region60
        $region59: #{ffn_forward.4} parent=55 // pred_region
          %s1543 = ssub.s32 1, %s21
          %s1544 = smul.u32 %s1543, %s22
          %s1545 = ssub.s32 0, %s22
          %s1546 = smul.u32 %s21, %s1545
          %s1547 = sadd.s32 %s1544, %s1546
          %s1548 = smul.u32 8, %s1547
          %p1549 = scmp.lt.s32.totalorder %s21, 1
          %s1550 = scalar_select %p1549, %s21, 1
          %p1551 = scmp.lt.s32.totalorder %s1548, 7
          %s1552 = scalar_select %p1551, %s1548, 7
          %s1553 = smul.addr %s1550, 8
          %s1554 = sadd.s32 %s1552, %s1553
          %s1555 = smul.addr %s1554, 2
          %s1556 = scalar_lea.vmem %s3, %s1555
        $region60: #{ffn_forward.4} parent=55 // pred_fallthru
          _
      $region56: #{ffn_forward.4} parent=5 // pred_fallthru
        _
    $region6: #{ffn_forward.4} parent=1 // loop_footer
      %s14 = sadd.s32 1, %s10
    $region7: #{ffn_forward.4} parent=1 // loop_footer_branch
      %9 = sbr.rel target = $region3
    $region8: #{ffn_forward.4} parent=1 // loop_exit
      _
    %1557 = vsyncpa [#allocation4], 1
    %s1558 = scalar_lea.sflag [#allocation4], 1
    %1559 = vsyncpa %s1558, 1

</llo_original>
